<compile_context>
chip_gen: v5e
topology: v5e:2x2
jax: 0.10.0
libtpu: 0.0.40
codegen_flags: <defaults>
</compile_context>

<pallas_src>
import math

import numpy as np

import jax
import jax.numpy as jnp
from jax.experimental import pallas as pl
from jax.experimental.pallas import tpu as pltpu

# ----------------------------- small ViT config ------------------------------
# Scaled-down ViT(d_model=768, image_size=224, patch_size=16, nhead=12,
# hidden_dim=1024, classes=256).  Channel ladder keeps the 1:2:4:8:16 ratio.
IMAGE_SIZE = 32
PATCH_SIZE = 16
CONV_CH = (4, 8, 16, 32, 64)            # Conv1..Conv5 output channels
D_MODEL = CONV_CH[-1]                   # 64
NUM_HEADS = 4
HEAD_DIM = D_MODEL // NUM_HEADS         # 16
HIDDEN_DIM = 128                        # lane-exact MLP width
CLASSES = 16
NUM_LAYERS = 4
HW_TOKENS = (IMAGE_SIZE // PATCH_SIZE) ** 2       # 4 conv tokens
SEQ_LEN = HW_TOKENS + 1                           # 5 (+ class token)
SEQ_PAD = ((SEQ_LEN + 7) // 8) * 8                # 8: sublane-aligned sequence
BN_EPS = 1e-5
LN_EPS = 1e-5


# ------------------------- fused transformer kernel ---------------------------
def _vit_transformer_kernel(
    x_emb_ref, attn_bias_ref, pool_ref,
    ln_g_ref, ln_b_ref,
    wqv_ref, bqv_ref, w2_ref, b2_ref,
    m1w_ref, m1b_ref, m2w_ref, m2b_ref,
    hid_w_ref, hid_b_ref, out_w_ref, out_b_ref,
    out_ref,
):
    """One grid step == one image: 4 encoder layers (unrolled) + pooled head."""
    x = x_emb_ref[0]                         # (SEQ_PAD, D) f32, padded rows are 0
    bias = attn_bias_ref[...]                # (SEQ_PAD, SEQ_PAD): pad columns -> -1e30
    scale = 1.0 / math.sqrt(HEAD_DIM)
    hhd = NUM_HEADS * HEAD_DIM
    bf16 = jnp.bfloat16

    for l in range(NUM_LAYERS):              # static unroll, weights VMEM-resident
        g = ln_g_ref[l]                      # (1, D)
        b_ln = ln_b_ref[l]                   # (1, D)

        def layer_norm(t):                   # single shared LayerNorm instance
            mu = jnp.mean(t, axis=-1, keepdims=True)
            var = jnp.mean(jnp.square(t - mu), axis=-1, keepdims=True)
            return (t - mu) * jax.lax.rsqrt(var + LN_EPS) * g + b_ln

        # ---------- MSA: softmax(Q @ V^T / sqrt(hd)) @ V  (K unused) ----------
        xn = layer_norm(x)
        # Fused Q/V projection: one 128-lane-wide MXU dot instead of 8 tiny ones.
        qv = jnp.dot(xn.astype(bf16), wqv_ref[l],
                     preferred_element_type=jnp.float32) + bqv_ref[l]   # (S, 128)
        heads = []
        for h in range(NUM_HEADS):           # per-head score softmax (tiny 8x8)
            qh = qv[:, h * HEAD_DIM:(h + 1) * HEAD_DIM]
            vh_b = qv[:, hhd + h * HEAD_DIM: hhd + (h + 1) * HEAD_DIM].astype(bf16)
            s = jax.lax.dot_general(qh.astype(bf16), vh_b,
                                    (((1,), (1,)), ((), ())),
                                    preferred_element_type=jnp.float32)
            s = s * scale + bias
            m = jnp.max(s, axis=-1, keepdims=True)
            p = jnp.exp(s - m)
            p = p * pl.reciprocal(jnp.sum(p, axis=-1, keepdims=True), approx=True)
            heads.append(jnp.dot(p.astype(bf16), vh_b,
                                 preferred_element_type=jnp.float32))   # (S, hd)
        att = jnp.concatenate(heads, axis=-1)                           # (S, D)
        # Fused output projection: one (D, D) dot instead of 4 shallow dots.
        x = x + jnp.dot(att.astype(bf16), w2_ref[l],
                        preferred_element_type=jnp.float32) + b2_ref[l]

        # ---------------- MLP (same LayerNorm parameters) ----------------------
        xn2 = layer_norm(x)
        hmid = jnp.dot(xn2.astype(bf16), m1w_ref[l],
                       preferred_element_type=jnp.float32) + m1b_ref[l]
        hmid = jax.nn.gelu(hmid, approximate=True)
        x = x + jnp.dot(hmid.astype(bf16), m2w_ref[l],
                        preferred_element_type=jnp.float32) + m2b_ref[l]

    # -------- mean over the 5 real tokens + Hidden1 / GELU / Output head -------
    pooled = jnp.dot(pool_ref[...], x, preferred_element_type=jnp.float32)  # row 0 = mean
    hid = jnp.dot(pooled.astype(bf16), hid_w_ref[...],
                  preferred_element_type=jnp.float32) + hid_b_ref[...]
    hid = jax.nn.gelu(hid, approximate=True)
    logits = jnp.dot(hid.astype(bf16), out_w_ref[...],
                     preferred_element_type=jnp.float32) + out_b_ref[...]
    out_ref[0] = logits[0:1, :]


def transformer_forward(x_emb, batch, t):
    """x_emb: (B, SEQ_PAD, D) padded embedded tokens -> (B, CLASSES) logits."""
    Sp, D, HID = SEQ_PAD, D_MODEL, HIDDEN_DIM

    # Trace-time constants (per image, identical across grid steps):
    #  * attn_bias: mask pad columns with -1e30 (every row keeps its 5 real
    #    columns unmasked, so no softmax row can become 0/0).
    #  * pool: row 0 averages the 5 real tokens == torch.mean(x, dim=1).
    col_real = np.arange(Sp) < SEQ_LEN
    bias_row = np.where(col_real, 0.0, -1e30).astype(np.float32)
    attn_bias = jnp.asarray(np.broadcast_to(bias_row, (Sp, Sp)).copy())
    pool_np = np.zeros((Sp, Sp), np.float32)
    pool_np[0, :SEQ_LEN] = 1.0 / SEQ_LEN
    pool = jnp.asarray(pool_np)

    def const_spec(*shape):
        n = len(shape)
        return pl.BlockSpec(shape, lambda c, _n=n: (0,) * _n)

    out = pl.pallas_call(
        _vit_transformer_kernel,
        out_shape=jax.ShapeDtypeStruct((batch, 1, CLASSES), jnp.float32),
        grid=(batch,),                                   # one image per step
        in_specs=[
            pl.BlockSpec((1, Sp, D), lambda c: (c, 0, 0)),       # x_emb chunk
            const_spec(Sp, Sp),                                  # attn pad mask
            const_spec(Sp, Sp),                                  # pooling matrix
            const_spec(NUM_LAYERS, 1, D),                        # ln_g (shared LN)
            const_spec(NUM_LAYERS, 1, D),                        # ln_b
            const_spec(NUM_LAYERS, D, 2 * D),                    # wqv  (fused Q|V)
            const_spec(NUM_LAYERS, 1, 2 * D),                    # bqv
            const_spec(NUM_LAYERS, D, D),                        # w2   (out proj)
            const_spec(NUM_LAYERS, 1, D),                        # b2
            const_spec(NUM_LAYERS, D, HID),                      # mlp_w1
            const_spec(NUM_LAYERS, 1, HID),                      # mlp_b1
            const_spec(NUM_LAYERS, HID, D),                      # mlp_w2
            const_spec(NUM_LAYERS, 1, D),                        # mlp_b2
            const_spec(D, HID), const_spec(1, HID),              # hidden head
            const_spec(HID, CLASSES), const_spec(1, CLASSES),    # output head
        ],
        out_specs=pl.BlockSpec((1, 1, CLASSES), lambda c: (c, 0, 0)),
        compiler_params=pltpu.CompilerParams(
            dimension_semantics=("parallel",)),          # v7x: images split across TCs
    )(
        x_emb, attn_bias, pool,
        t["ln_g"], t["ln_b"],
        t["wqv"], t["bqv"], t["w2"], t["b2"],
        t["m1w"], t["m1b"], t["m2w"], t["m2b"],
        t["hid_w"], t["hid_b"], t["out_w"], t["out_b"],
    )
    return out.reshape(batch, CLASSES)


# ----------------------------------- forward ----------------------------------
def vit_forward(x_nchw, prep):
    x = jnp.transpose(x_nchw, (0, 2, 3, 1)).astype(jnp.float32)   # NCHW -> NHWC
    # Conv1..Conv4: 3x3 stride-2 pad-1 convs with pre-folded BatchNorm + ReLU.
    # TODO(synk): kept on XLA's conv per the perf review (MXU tile <3% utilized;
    #             a Pallas im2col path only adds launch/DMA overhead here).
    for w, b in zip(prep["conv_w"], prep["conv_b"]):
        x = jax.lax.conv_general_dilated(
            x, w, window_strides=(2, 2), padding=((1, 1), (1, 1)),
            dimension_numbers=("NHWC", "HWIO", "NHWC"))
        x = jnp.maximum(x + b, 0.0)

    batch = x.shape[0]
    t = prep["tr"]
    # Conv5 (1x1) patch projection, class token, position embeddings (tiny glue).
    tok = x.reshape(batch, HW_TOKENS, CONV_CH[3]) @ t["c5w"] + t["c5b"]     # (B, hw, D)
    cls = jnp.broadcast_to(t["cls"], (batch, 1, D_MODEL))
    x_emb = jnp.concatenate([cls, tok], axis=1) + t["pos"]                  # (B, S, D)
    x_emb = jnp.pad(x_emb, ((0, 0), (0, SEQ_PAD - SEQ_LEN), (0, 0)))        # (B, 8, D)

    return transformer_forward(x_emb, batch, t)


# ---------------------- one-time parameter preparation -------------------------
def prepare_params(p):
    """Hoisted out of the hot path: fold BatchNorm into conv weights (HWIO),
    extract the per-head-interleaved Q/V projections from proj1 (K is unused by
    the reference) and fuse them into one lane-dense (D, 2D) matrix, cast matmul
    weights to bf16, reshape biases to (1, N) rows, and stack the 4 encoder
    layers along a leading axis for the fused kernel."""
    emb = p["emb"]
    D, H, hd = D_MODEL, NUM_HEADS, HEAD_DIM

    conv_w, conv_b = [], []
    for i in (1, 2, 3, 4):
        w, b = emb[f"c{i}_w"], emb[f"c{i}_b"]
        gamma, beta, mean, var = emb[f"bn{i}"]
        s = gamma / jnp.sqrt(var + BN_EPS)
        conv_w.append(jnp.transpose(w * s[:, None, None, None], (2, 3, 1, 0)))  # OIHW->HWIO
        conv_b.append((b * s + (beta - mean * s)).reshape(1, 1, 1, -1))

    enc = p["enc"]

    def qv_fused(e):
        # proj1 output layout per token: (head, {K, Q, V}, hd) -- chunk order K, Q, V.
        w4 = e["msa"]["w1"].reshape(D, H, 3, hd)
        b3 = e["msa"]["b1"].reshape(H, 3, hd)
        wq = w4[:, :, 1, :].reshape(D, H * hd)
        wv = w4[:, :, 2, :].reshape(D, H * hd)
        bq = b3[:, 1, :].reshape(1, H * hd)
        bv = b3[:, 2, :].reshape(1, H * hd)
        return jnp.concatenate([wq, wv], axis=1), jnp.concatenate([bq, bv], axis=1)

    wqv_l, bqv_l = zip(*(qv_fused(e) for e in enc))
    bf = lambda a: a.astype(jnp.bfloat16)

    tr = dict(
        c5w=emb["c5_w"].reshape(D, CONV_CH[3]).T,              # 1x1 conv as (Cin, D) matmul
        c5b=emb["c5_b"],
        cls=emb["class_token"],                                # (1, 1, D)
        pos=emb["embeddings"],                                 # (S, D)
        ln_g=jnp.stack([e["ln_g"].reshape(1, D) for e in enc]),
        ln_b=jnp.stack([e["ln_b"].reshape(1, D) for e in enc]),
        wqv=bf(jnp.stack(wqv_l)),                              # (L, D, 2D) bf16
        bqv=jnp.stack(bqv_l),                                  # (L, 1, 2D) f32
        w2=bf(jnp.stack([e["msa"]["w2"] for e in enc])),       # (L, D, D) bf16
        b2=jnp.stack([e["msa"]["b2"].reshape(1, D) for e in enc]),
        m1w=bf(jnp.stack([e["mlp_w1"] for e in enc])),         # (L, D, HID) bf16
        m1b=jnp.stack([e["mlp_b1"].reshape(1, HIDDEN_DIM) for e in enc]),
        m2w=bf(jnp.stack([e["mlp_w2"] for e in enc])),         # (L, HID, D) bf16
        m2b=jnp.stack([e["mlp_b2"].reshape(1, D) for e in enc]),
        hid_w=bf(p["hid_w"]), hid_b=p["hid_b"].reshape(1, HIDDEN_DIM),
        out_w=bf(p["out_w"]), out_b=p["out_b"].reshape(1, CLASSES),
    )
    return dict(conv_w=conv_w, conv_b=conv_b, tr=tr)


# ------------------------------ parameter init ---------------------------------
class KeyGen:
    def __init__(self, seed):
        self._key = jax.random.PRNGKey(seed)

    def __call__(self):
        self._key, sub = jax.random.split(self._key)
        return sub


def init_params(seed=0):
    kg = KeyGen(seed)

    def nrm(shape, scale=0.05):
        return (scale * jax.random.normal(kg(), shape)).astype(jnp.float32)

    def bn(c):
        # inference-mode BatchNorm: (gamma, beta, running_mean, running_var)
        return (1.0 + nrm((c,), 0.05), nrm((c,), 0.05),
                jnp.zeros((c,), jnp.float32), jnp.ones((c,), jnp.float32))

    c1, c2, c3, c4, c5 = CONV_CH
    emb = dict(
        c1_w=nrm((c1, 3, 3, 3)), c1_b=nrm((c1,)), bn1=bn(c1),
        c2_w=nrm((c2, c1, 3, 3)), c2_b=nrm((c2,)), bn2=bn(c2),
        c3_w=nrm((c3, c2, 3, 3)), c3_b=nrm((c3,)), bn3=bn(c3),
        c4_w=nrm((c4, c3, 3, 3)), c4_b=nrm((c4,)), bn4=bn(c4),
        c5_w=nrm((c5, c4, 1, 1)), c5_b=nrm((c5,)),
        class_token=nrm((1, 1, D_MODEL), 1.0),
        embeddings=nrm((SEQ_LEN, D_MODEL), 1.0),
    )

    def encoder_params():
        return dict(
            ln_g=jnp.ones((D_MODEL,), jnp.float32),
            ln_b=jnp.zeros((D_MODEL,), jnp.float32),
            msa=dict(
                w1=nrm((D_MODEL, 3 * D_MODEL)), b1=nrm((3 * D_MODEL,)),
                w2=nrm((D_MODEL, D_MODEL)), b2=nrm((D_MODEL,)),
            ),
            mlp_w1=nrm((D_MODEL, HIDDEN_DIM)), mlp_b1=nrm((HIDDEN_DIM,)),
            mlp_w2=nrm((HIDDEN_DIM, D_MODEL)), mlp_b2=nrm((D_MODEL,)),
        )

    return dict(
        emb=emb,
        enc=[encoder_params() for _ in range(NUM_LAYERS)],
        hid_w=nrm((D_MODEL, HIDDEN_DIM)), hid_b=nrm((HIDDEN_DIM,)),
        out_w=nrm((HIDDEN_DIM, CLASSES)), out_b=nrm((CLASSES,)),
    )


# ----------------------------------- main ---------------------------------------
if __name__ == "__main__":
    params = init_params(seed=0)
    prep = prepare_params(params)     # one-time: BN fold, Q/V fusion, bf16, stacking
    x = jax.random.normal(jax.random.PRNGKey(0),
                          (2, 3, IMAGE_SIZE, IMAGE_SIZE), dtype=jnp.float32)  # NCHW
    fwd = jax.jit(vit_forward)
    out = jax.block_until_ready(fwd(x, prep))
    assert out.shape == (2, CLASSES), out.shape
    assert bool(jnp.all(jnp.isfinite(out)))
    print("KERNEL_OK")
</pallas_src>

<mosaic_0001>
module attributes {stable_mosaic.version = 11 : i64} {
  func.func @_vit_transformer_kernel(%arg0: i32, %arg1: memref<1x8x64xf32, #tpu.memory_space<vmem>>, %arg2: memref<8x8xf32, #tpu.memory_space<vmem>>, %arg3: memref<8x8xf32, #tpu.memory_space<vmem>>, %arg4: memref<4x1x64xf32, #tpu.memory_space<vmem>>, %arg5: memref<4x1x64xf32, #tpu.memory_space<vmem>>, %arg6: memref<4x64x128xbf16, #tpu.memory_space<vmem>>, %arg7: memref<4x1x128xf32, #tpu.memory_space<vmem>>, %arg8: memref<4x64x64xbf16, #tpu.memory_space<vmem>>, %arg9: memref<4x1x64xf32, #tpu.memory_space<vmem>>, %arg10: memref<4x64x128xbf16, #tpu.memory_space<vmem>>, %arg11: memref<4x1x128xf32, #tpu.memory_space<vmem>>, %arg12: memref<4x128x64xbf16, #tpu.memory_space<vmem>>, %arg13: memref<4x1x64xf32, #tpu.memory_space<vmem>>, %arg14: memref<64x128xbf16, #tpu.memory_space<vmem>>, %arg15: memref<1x128xf32, #tpu.memory_space<vmem>>, %arg16: memref<128x16xbf16, #tpu.memory_space<vmem>>, %arg17: memref<1x16xf32, #tpu.memory_space<vmem>>, %arg18: memref<1x1x16xf32, #tpu.memory_space<vmem>>) attributes {dimension_semantics = [#tpu.dimension_semantics<parallel>], iteration_bounds = array<i64: 2>, scalar_prefetch = 0 : i64, scratch_operands = 0 : i64, tpu.core_type = #tpu.core_type<tc>, window_params = [{transform_indices = @transform_0, window_bounds = array<i64: 1, 8, 64>}, {pipeline_mode = #tpu.pipeline_mode<synchronous>, transform_indices = @transform_1, window_bounds = array<i64: 8, 8>}, {pipeline_mode = #tpu.pipeline_mode<synchronous>, transform_indices = @transform_2, window_bounds = array<i64: 8, 8>}, {pipeline_mode = #tpu.pipeline_mode<synchronous>, transform_indices = @transform_3, window_bounds = array<i64: 4, 1, 64>}, {pipeline_mode = #tpu.pipeline_mode<synchronous>, transform_indices = @transform_4, window_bounds = array<i64: 4, 1, 64>}, {pipeline_mode = #tpu.pipeline_mode<synchronous>, transform_indices = @transform_5, window_bounds = array<i64: 4, 64, 128>}, {pipeline_mode = #tpu.pipeline_mode<synchronous>, transform_indices = @transform_6, window_bounds = array<i64: 4, 1, 128>}, {pipeline_mode = #tpu.pipeline_mode<synchronous>, transform_indices = @transform_7, window_bounds = array<i64: 4, 64, 64>}, {pipeline_mode = #tpu.pipeline_mode<synchronous>, transform_indices = @transform_8, window_bounds = array<i64: 4, 1, 64>}, {pipeline_mode = #tpu.pipeline_mode<synchronous>, transform_indices = @transform_9, window_bounds = array<i64: 4, 64, 128>}, {pipeline_mode = #tpu.pipeline_mode<synchronous>, transform_indices = @transform_10, window_bounds = array<i64: 4, 1, 128>}, {pipeline_mode = #tpu.pipeline_mode<synchronous>, transform_indices = @transform_11, window_bounds = array<i64: 4, 128, 64>}, {pipeline_mode = #tpu.pipeline_mode<synchronous>, transform_indices = @transform_12, window_bounds = array<i64: 4, 1, 64>}, {pipeline_mode = #tpu.pipeline_mode<synchronous>, transform_indices = @transform_13, window_bounds = array<i64: 64, 128>}, {pipeline_mode = #tpu.pipeline_mode<synchronous>, transform_indices = @transform_14, window_bounds = array<i64: 1, 128>}, {pipeline_mode = #tpu.pipeline_mode<synchronous>, transform_indices = @transform_15, window_bounds = array<i64: 128, 16>}, {pipeline_mode = #tpu.pipeline_mode<synchronous>, transform_indices = @transform_16, window_bounds = array<i64: 1, 16>}, {transform_indices = @transform_17, window_bounds = array<i64: 1, 1, 16>}]} {
    %c0 = arith.constant 0 : index
    %c0_0 = arith.constant 0 : index
    %c0_1 = arith.constant 0 : index
    %0 = vector.load %arg1[%c0, %c0_0, %c0_1] : memref<1x8x64xf32, #tpu.memory_space<vmem>>, vector<1x8x64xf32>
    %1 = vector.shape_cast %0 : vector<1x8x64xf32> to vector<8x64xf32>
    %c0_2 = arith.constant 0 : index
    %c0_3 = arith.constant 0 : index
    %2 = vector.load %arg2[%c0_2, %c0_3] : memref<8x8xf32, #tpu.memory_space<vmem>>, vector<8x8xf32>
    %c0_4 = arith.constant 0 : index
    %c0_5 = arith.constant 0 : index
    %c0_6 = arith.constant 0 : index
    %3 = vector.load %arg4[%c0_4, %c0_5, %c0_6] : memref<4x1x64xf32, #tpu.memory_space<vmem>>, vector<1x1x64xf32>
    %4 = vector.shape_cast %3 : vector<1x1x64xf32> to vector<1x64xf32>
    %c0_7 = arith.constant 0 : index
    %c0_8 = arith.constant 0 : index
    %c0_9 = arith.constant 0 : index
    %5 = vector.load %arg5[%c0_7, %c0_8, %c0_9] : memref<4x1x64xf32, #tpu.memory_space<vmem>>, vector<1x1x64xf32>
    %6 = vector.shape_cast %5 : vector<1x1x64xf32> to vector<1x64xf32>
    %cst = arith.constant dense<0.000000e+00> : vector<8xf32>
    %7 = vector.multi_reduction <add>, %1, %cst [1] : vector<8x64xf32> to vector<8xf32>
    %8 = vector.shape_cast %7 : vector<8xf32> to vector<8x1xf32>
    %cst_10 = arith.constant 6.400000e+01 : f32
    %9 = vector.broadcast %cst_10 : f32 to vector<8x1xf32>
    %10 = arith.divf %8, %9 : vector<8x1xf32>
    %11 = vector.broadcast %10 : vector<8x1xf32> to vector<8x64xf32>
    %12 = arith.subf %1, %11 : vector<8x64xf32>
    %13 = arith.mulf %12, %12 : vector<8x64xf32>
    %cst_11 = arith.constant dense<0.000000e+00> : vector<8xf32>
    %14 = vector.multi_reduction <add>, %13, %cst_11 [1] : vector<8x64xf32> to vector<8xf32>
    %15 = vector.shape_cast %14 : vector<8xf32> to vector<8x1xf32>
    %cst_12 = arith.constant 6.400000e+01 : f32
    %16 = vector.broadcast %cst_12 : f32 to vector<8x1xf32>
    %17 = arith.divf %15, %16 : vector<8x1xf32>
    %18 = vector.broadcast %10 : vector<8x1xf32> to vector<8x64xf32>
    %19 = arith.subf %1, %18 : vector<8x64xf32>
    %cst_13 = arith.constant 9.99999974E-6 : f32
    %20 = vector.broadcast %cst_13 : f32 to vector<8x1xf32>
    %21 = arith.addf %17, %20 : vector<8x1xf32>
    %22 = math.rsqrt %21 : vector<8x1xf32>
    %23 = vector.broadcast %22 : vector<8x1xf32> to vector<8x64xf32>
    %24 = arith.mulf %19, %23 : vector<8x64xf32>
    %25 = vector.broadcast %4 : vector<1x64xf32> to vector<8x64xf32>
    %26 = arith.mulf %24, %25 : vector<8x64xf32>
    %27 = vector.broadcast %6 : vector<1x64xf32> to vector<8x64xf32>
    %28 = arith.addf %26, %27 : vector<8x64xf32>
    %29 = arith.truncf %28 : vector<8x64xf32> to vector<8x64xbf16>
    %c0_14 = arith.constant 0 : index
    %c0_15 = arith.constant 0 : index
    %c0_16 = arith.constant 0 : index
    %30 = vector.load %arg6[%c0_14, %c0_15, %c0_16] : memref<4x64x128xbf16, #tpu.memory_space<vmem>>, vector<1x64x128xbf16>
    %31 = vector.shape_cast %30 : vector<1x64x128xbf16> to vector<64x128xbf16>
    %cst_17 = arith.constant dense<0.000000e+00> : vector<8x128xf32>
    %32 = tpu.matmul %29, %31, %cst_17 {dimension_numbers = #tpu.dot_dimension_numbers<[1], [0], [0], [1], [0, 0, 1, 1], [], []>} : vector<8x64xbf16>, vector<64x128xbf16>, vector<8x128xf32> -> vector<8x128xf32>
    %c0_18 = arith.constant 0 : index
    %c0_19 = arith.constant 0 : index
    %c0_20 = arith.constant 0 : index
    %33 = vector.load %arg7[%c0_18, %c0_19, %c0_20] : memref<4x1x128xf32, #tpu.memory_space<vmem>>, vector<1x1x128xf32>
    %34 = vector.shape_cast %33 : vector<1x1x128xf32> to vector<1x128xf32>
    %35 = vector.broadcast %34 : vector<1x128xf32> to vector<8x128xf32>
    %36 = arith.addf %32, %35 : vector<8x128xf32>
    %37 = vector.extract_strided_slice %36 {offsets = [0, 0], sizes = [8, 16], strides = [1, 1]} : vector<8x128xf32> to vector<8x16xf32>
    %38 = vector.extract_strided_slice %36 {offsets = [0, 64], sizes = [8, 16], strides = [1, 1]} : vector<8x128xf32> to vector<8x16xf32>
    %39 = arith.truncf %38 : vector<8x16xf32> to vector<8x16xbf16>
    %40 = arith.truncf %37 : vector<8x16xf32> to vector<8x16xbf16>
    %cst_21 = arith.constant dense<0.000000e+00> : vector<8x8xf32>
    %41 = tpu.matmul %40, %39, %cst_21 {dimension_numbers = #tpu.dot_dimension_numbers<[1], [1], [0], [0], [0, 0, 1, 0], [], []>} : vector<8x16xbf16>, vector<8x16xbf16>, vector<8x8xf32> -> vector<8x8xf32>
    %cst_22 = arith.constant 2.500000e-01 : f32
    %42 = vector.broadcast %cst_22 : f32 to vector<8x8xf32>
    %43 = arith.mulf %41, %42 : vector<8x8xf32>
    %44 = arith.addf %43, %2 : vector<8x8xf32>
    %cst_23 = arith.constant dense<0xFF800000> : vector<8xf32>
    %45 = vector.multi_reduction <maximumf>, %44, %cst_23 [1] : vector<8x8xf32> to vector<8xf32>
    %46 = vector.shape_cast %45 : vector<8xf32> to vector<8x1xf32>
    %47 = vector.broadcast %46 : vector<8x1xf32> to vector<8x8xf32>
    %48 = arith.subf %44, %47 : vector<8x8xf32>
    %49 = math.exp %48 : vector<8x8xf32>
    %cst_24 = arith.constant dense<0.000000e+00> : vector<8xf32>
    %50 = vector.multi_reduction <add>, %49, %cst_24 [1] : vector<8x8xf32> to vector<8xf32>
    %51 = vector.shape_cast %50 : vector<8xf32> to vector<8x1xf32>
    %52 = tpu.reciprocal %51 {approx = true} : vector<8x1xf32> -> vector<8x1xf32>
    %53 = vector.broadcast %52 : vector<8x1xf32> to vector<8x8xf32>
    %54 = arith.mulf %49, %53 : vector<8x8xf32>
    %55 = arith.truncf %54 : vector<8x8xf32> to vector<8x8xbf16>
    %cst_25 = arith.constant dense<0.000000e+00> : vector<8x16xf32>
    %56 = tpu.matmul %55, %39, %cst_25 {dimension_numbers = #tpu.dot_dimension_numbers<[1], [0], [0], [1], [0, 0, 1, 1], [], []>} : vector<8x8xbf16>, vector<8x16xbf16>, vector<8x16xf32> -> vector<8x16xf32>
    %57 = vector.extract_strided_slice %36 {offsets = [0, 16], sizes = [8, 16], strides = [1, 1]} : vector<8x128xf32> to vector<8x16xf32>
    %58 = vector.extract_strided_slice %36 {offsets = [0, 80], sizes = [8, 16], strides = [1, 1]} : vector<8x128xf32> to vector<8x16xf32>
    %59 = arith.truncf %58 : vector<8x16xf32> to vector<8x16xbf16>
    %60 = arith.truncf %57 : vector<8x16xf32> to vector<8x16xbf16>
    %cst_26 = arith.constant dense<0.000000e+00> : vector<8x8xf32>
    %61 = tpu.matmul %60, %59, %cst_26 {dimension_numbers = #tpu.dot_dimension_numbers<[1], [1], [0], [0], [0, 0, 1, 0], [], []>} : vector<8x16xbf16>, vector<8x16xbf16>, vector<8x8xf32> -> vector<8x8xf32>
    %cst_27 = arith.constant 2.500000e-01 : f32
    %62 = vector.broadcast %cst_27 : f32 to vector<8x8xf32>
    %63 = arith.mulf %61, %62 : vector<8x8xf32>
    %64 = arith.addf %63, %2 : vector<8x8xf32>
    %cst_28 = arith.constant dense<0xFF800000> : vector<8xf32>
    %65 = vector.multi_reduction <maximumf>, %64, %cst_28 [1] : vector<8x8xf32> to vector<8xf32>
    %66 = vector.shape_cast %65 : vector<8xf32> to vector<8x1xf32>
    %67 = vector.broadcast %66 : vector<8x1xf32> to vector<8x8xf32>
    %68 = arith.subf %64, %67 : vector<8x8xf32>
    %69 = math.exp %68 : vector<8x8xf32>
    %cst_29 = arith.constant dense<0.000000e+00> : vector<8xf32>
    %70 = vector.multi_reduction <add>, %69, %cst_29 [1] : vector<8x8xf32> to vector<8xf32>
    %71 = vector.shape_cast %70 : vector<8xf32> to vector<8x1xf32>
    %72 = tpu.reciprocal %71 {approx = true} : vector<8x1xf32> -> vector<8x1xf32>
    %73 = vector.broadcast %72 : vector<8x1xf32> to vector<8x8xf32>
    %74 = arith.mulf %69, %73 : vector<8x8xf32>
    %75 = arith.truncf %74 : vector<8x8xf32> to vector<8x8xbf16>
    %cst_30 = arith.constant dense<0.000000e+00> : vector<8x16xf32>
    %76 = tpu.matmul %75, %59, %cst_30 {dimension_numbers = #tpu.dot_dimension_numbers<[1], [0], [0], [1], [0, 0, 1, 1], [], []>} : vector<8x8xbf16>, vector<8x16xbf16>, vector<8x16xf32> -> vector<8x16xf32>
    %77 = vector.extract_strided_slice %36 {offsets = [0, 32], sizes = [8, 16], strides = [1, 1]} : vector<8x128xf32> to vector<8x16xf32>
    %78 = vector.extract_strided_slice %36 {offsets = [0, 96], sizes = [8, 16], strides = [1, 1]} : vector<8x128xf32> to vector<8x16xf32>
    %79 = arith.truncf %78 : vector<8x16xf32> to vector<8x16xbf16>
    %80 = arith.truncf %77 : vector<8x16xf32> to vector<8x16xbf16>
    %cst_31 = arith.constant dense<0.000000e+00> : vector<8x8xf32>
    %81 = tpu.matmul %80, %79, %cst_31 {dimension_numbers = #tpu.dot_dimension_numbers<[1], [1], [0], [0], [0, 0, 1, 0], [], []>} : vector<8x16xbf16>, vector<8x16xbf16>, vector<8x8xf32> -> vector<8x8xf32>
    %cst_32 = arith.constant 2.500000e-01 : f32
    %82 = vector.broadcast %cst_32 : f32 to vector<8x8xf32>
    %83 = arith.mulf %81, %82 : vector<8x8xf32>
    %84 = arith.addf %83, %2 : vector<8x8xf32>
    %cst_33 = arith.constant dense<0xFF800000> : vector<8xf32>
    %85 = vector.multi_reduction <maximumf>, %84, %cst_33 [1] : vector<8x8xf32> to vector<8xf32>
    %86 = vector.shape_cast %85 : vector<8xf32> to vector<8x1xf32>
    %87 = vector.broadcast %86 : vector<8x1xf32> to vector<8x8xf32>
    %88 = arith.subf %84, %87 : vector<8x8xf32>
    %89 = math.exp %88 : vector<8x8xf32>
    %cst_34 = arith.constant dense<0.000000e+00> : vector<8xf32>
    %90 = vector.multi_reduction <add>, %89, %cst_34 [1] : vector<8x8xf32> to vector<8xf32>
    %91 = vector.shape_cast %90 : vector<8xf32> to vector<8x1xf32>
    %92 = tpu.reciprocal %91 {approx = true} : vector<8x1xf32> -> vector<8x1xf32>
    %93 = vector.broadcast %92 : vector<8x1xf32> to vector<8x8xf32>
    %94 = arith.mulf %89, %93 : vector<8x8xf32>
    %95 = arith.truncf %94 : vector<8x8xf32> to vector<8x8xbf16>
    %cst_35 = arith.constant dense<0.000000e+00> : vector<8x16xf32>
    %96 = tpu.matmul %95, %79, %cst_35 {dimension_numbers = #tpu.dot_dimension_numbers<[1], [0], [0], [1], [0, 0, 1, 1], [], []>} : vector<8x8xbf16>, vector<8x16xbf16>, vector<8x16xf32> -> vector<8x16xf32>
    %97 = vector.extract_strided_slice %36 {offsets = [0, 48], sizes = [8, 16], strides = [1, 1]} : vector<8x128xf32> to vector<8x16xf32>
    %98 = vector.extract_strided_slice %36 {offsets = [0, 112], sizes = [8, 16], strides = [1, 1]} : vector<8x128xf32> to vector<8x16xf32>
    %99 = arith.truncf %98 : vector<8x16xf32> to vector<8x16xbf16>
    %100 = arith.truncf %97 : vector<8x16xf32> to vector<8x16xbf16>
    %cst_36 = arith.constant dense<0.000000e+00> : vector<8x8xf32>
    %101 = tpu.matmul %100, %99, %cst_36 {dimension_numbers = #tpu.dot_dimension_numbers<[1], [1], [0], [0], [0, 0, 1, 0], [], []>} : vector<8x16xbf16>, vector<8x16xbf16>, vector<8x8xf32> -> vector<8x8xf32>
    %cst_37 = arith.constant 2.500000e-01 : f32
    %102 = vector.broadcast %cst_37 : f32 to vector<8x8xf32>
    %103 = arith.mulf %101, %102 : vector<8x8xf32>
    %104 = arith.addf %103, %2 : vector<8x8xf32>
    %cst_38 = arith.constant dense<0xFF800000> : vector<8xf32>
    %105 = vector.multi_reduction <maximumf>, %104, %cst_38 [1] : vector<8x8xf32> to vector<8xf32>
    %106 = vector.shape_cast %105 : vector<8xf32> to vector<8x1xf32>
    %107 = vector.broadcast %106 : vector<8x1xf32> to vector<8x8xf32>
    %108 = arith.subf %104, %107 : vector<8x8xf32>
    %109 = math.exp %108 : vector<8x8xf32>
    %cst_39 = arith.constant dense<0.000000e+00> : vector<8xf32>
    %110 = vector.multi_reduction <add>, %109, %cst_39 [1] : vector<8x8xf32> to vector<8xf32>
    %111 = vector.shape_cast %110 : vector<8xf32> to vector<8x1xf32>
    %112 = tpu.reciprocal %111 {approx = true} : vector<8x1xf32> -> vector<8x1xf32>
    %113 = vector.broadcast %112 : vector<8x1xf32> to vector<8x8xf32>
    %114 = arith.mulf %109, %113 : vector<8x8xf32>
    %115 = arith.truncf %114 : vector<8x8xf32> to vector<8x8xbf16>
    %cst_40 = arith.constant dense<0.000000e+00> : vector<8x16xf32>
    %116 = tpu.matmul %115, %99, %cst_40 {dimension_numbers = #tpu.dot_dimension_numbers<[1], [0], [0], [1], [0, 0, 1, 1], [], []>} : vector<8x8xbf16>, vector<8x16xbf16>, vector<8x16xf32> -> vector<8x16xf32>
    %117 = tpu.concatenate %56, %76, %96, %116 in 1 : vector<8x16xf32>, vector<8x16xf32>, vector<8x16xf32>, vector<8x16xf32> -> vector<8x64xf32>
    %118 = arith.truncf %117 : vector<8x64xf32> to vector<8x64xbf16>
    %c0_41 = arith.constant 0 : index
    %c0_42 = arith.constant 0 : index
    %c0_43 = arith.constant 0 : index
    %119 = vector.load %arg8[%c0_41, %c0_42, %c0_43] : memref<4x64x64xbf16, #tpu.memory_space<vmem>>, vector<1x64x64xbf16>
    %120 = vector.shape_cast %119 : vector<1x64x64xbf16> to vector<64x64xbf16>
    %cst_44 = arith.constant dense<0.000000e+00> : vector<8x64xf32>
    %121 = tpu.matmul %118, %120, %cst_44 {dimension_numbers = #tpu.dot_dimension_numbers<[1], [0], [0], [1], [0, 0, 1, 1], [], []>} : vector<8x64xbf16>, vector<64x64xbf16>, vector<8x64xf32> -> vector<8x64xf32>
    %122 = arith.addf %1, %121 : vector<8x64xf32>
    %c0_45 = arith.constant 0 : index
    %c0_46 = arith.constant 0 : index
    %c0_47 = arith.constant 0 : index
    %123 = vector.load %arg9[%c0_45, %c0_46, %c0_47] : memref<4x1x64xf32, #tpu.memory_space<vmem>>, vector<1x1x64xf32>
    %124 = vector.shape_cast %123 : vector<1x1x64xf32> to vector<1x64xf32>
    %125 = vector.broadcast %124 : vector<1x64xf32> to vector<8x64xf32>
    %126 = arith.addf %122, %125 : vector<8x64xf32>
    %cst_48 = arith.constant dense<0.000000e+00> : vector<8xf32>
    %127 = vector.multi_reduction <add>, %126, %cst_48 [1] : vector<8x64xf32> to vector<8xf32>
    %128 = vector.shape_cast %127 : vector<8xf32> to vector<8x1xf32>
    %cst_49 = arith.constant 6.400000e+01 : f32
    %129 = vector.broadcast %cst_49 : f32 to vector<8x1xf32>
    %130 = arith.divf %128, %129 : vector<8x1xf32>
    %131 = vector.broadcast %130 : vector<8x1xf32> to vector<8x64xf32>
    %132 = arith.subf %126, %131 : vector<8x64xf32>
    %133 = arith.mulf %132, %132 : vector<8x64xf32>
    %cst_50 = arith.constant dense<0.000000e+00> : vector<8xf32>
    %134 = vector.multi_reduction <add>, %133, %cst_50 [1] : vector<8x64xf32> to vector<8xf32>
    %135 = vector.shape_cast %134 : vector<8xf32> to vector<8x1xf32>
    %cst_51 = arith.constant 6.400000e+01 : f32
    %136 = vector.broadcast %cst_51 : f32 to vector<8x1xf32>
    %137 = arith.divf %135, %136 : vector<8x1xf32>
    %138 = vector.broadcast %130 : vector<8x1xf32> to vector<8x64xf32>
    %139 = arith.subf %126, %138 : vector<8x64xf32>
    %cst_52 = arith.constant 9.99999974E-6 : f32
    %140 = vector.broadcast %cst_52 : f32 to vector<8x1xf32>
    %141 = arith.addf %137, %140 : vector<8x1xf32>
    %142 = math.rsqrt %141 : vector<8x1xf32>
    %143 = vector.broadcast %142 : vector<8x1xf32> to vector<8x64xf32>
    %144 = arith.mulf %139, %143 : vector<8x64xf32>
    %145 = vector.broadcast %4 : vector<1x64xf32> to vector<8x64xf32>
    %146 = arith.mulf %144, %145 : vector<8x64xf32>
    %147 = vector.broadcast %6 : vector<1x64xf32> to vector<8x64xf32>
    %148 = arith.addf %146, %147 : vector<8x64xf32>
    %149 = arith.truncf %148 : vector<8x64xf32> to vector<8x64xbf16>
    %c0_53 = arith.constant 0 : index
    %c0_54 = arith.constant 0 : index
    %c0_55 = arith.constant 0 : index
    %150 = vector.load %arg10[%c0_53, %c0_54, %c0_55] : memref<4x64x128xbf16, #tpu.memory_space<vmem>>, vector<1x64x128xbf16>
    %151 = vector.shape_cast %150 : vector<1x64x128xbf16> to vector<64x128xbf16>
    %cst_56 = arith.constant dense<0.000000e+00> : vector<8x128xf32>
    %152 = tpu.matmul %149, %151, %cst_56 {dimension_numbers = #tpu.dot_dimension_numbers<[1], [0], [0], [1], [0, 0, 1, 1], [], []>} : vector<8x64xbf16>, vector<64x128xbf16>, vector<8x128xf32> -> vector<8x128xf32>
    %c0_57 = arith.constant 0 : index
    %c0_58 = arith.constant 0 : index
    %c0_59 = arith.constant 0 : index
    %153 = vector.load %arg11[%c0_57, %c0_58, %c0_59] : memref<4x1x128xf32, #tpu.memory_space<vmem>>, vector<1x1x128xf32>
    %154 = vector.shape_cast %153 : vector<1x1x128xf32> to vector<1x128xf32>
    %155 = vector.broadcast %154 : vector<1x128xf32> to vector<8x128xf32>
    %156 = arith.addf %152, %155 : vector<8x128xf32>
    %157 = arith.mulf %156, %156 : vector<8x128xf32>
    %158 = arith.mulf %156, %157 : vector<8x128xf32>
    %cst_60 = arith.constant 4.471500e-02 : f32
    %159 = vector.broadcast %cst_60 : f32 to vector<8x128xf32>
    %160 = arith.mulf %159, %158 : vector<8x128xf32>
    %161 = arith.addf %156, %160 : vector<8x128xf32>
    %cst_61 = arith.constant 0.797884583 : f32
    %162 = vector.broadcast %cst_61 : f32 to vector<8x128xf32>
    %163 = arith.mulf %162, %161 : vector<8x128xf32>
    %164 = math.tanh %163 : vector<8x128xf32>
    %cst_62 = arith.constant 1.000000e+00 : f32
    %165 = vector.broadcast %cst_62 : f32 to vector<8x128xf32>
    %166 = arith.addf %165, %164 : vector<8x128xf32>
    %cst_63 = arith.constant 5.000000e-01 : f32
    %167 = vector.broadcast %cst_63 : f32 to vector<8x128xf32>
    %168 = arith.mulf %167, %166 : vector<8x128xf32>
    %169 = arith.mulf %156, %168 : vector<8x128xf32>
    %170 = arith.truncf %169 : vector<8x128xf32> to vector<8x128xbf16>
    %c0_64 = arith.constant 0 : index
    %c0_65 = arith.constant 0 : index
    %c0_66 = arith.constant 0 : index
    %171 = vector.load %arg12[%c0_64, %c0_65, %c0_66] : memref<4x128x64xbf16, #tpu.memory_space<vmem>>, vector<1x128x64xbf16>
    %172 = vector.shape_cast %171 : vector<1x128x64xbf16> to vector<128x64xbf16>
    %cst_67 = arith.constant dense<0.000000e+00> : vector<8x64xf32>
    %173 = tpu.matmul %170, %172, %cst_67 {dimension_numbers = #tpu.dot_dimension_numbers<[1], [0], [0], [1], [0, 0, 1, 1], [], []>} : vector<8x128xbf16>, vector<128x64xbf16>, vector<8x64xf32> -> vector<8x64xf32>
    %174 = arith.addf %126, %173 : vector<8x64xf32>
    %c0_68 = arith.constant 0 : index
    %c0_69 = arith.constant 0 : index
    %c0_70 = arith.constant 0 : index
    %175 = vector.load %arg13[%c0_68, %c0_69, %c0_70] : memref<4x1x64xf32, #tpu.memory_space<vmem>>, vector<1x1x64xf32>
    %176 = vector.shape_cast %175 : vector<1x1x64xf32> to vector<1x64xf32>
    %177 = vector.broadcast %176 : vector<1x64xf32> to vector<8x64xf32>
    %178 = arith.addf %174, %177 : vector<8x64xf32>
    %c1 = arith.constant 1 : index
    %c0_71 = arith.constant 0 : index
    %c0_72 = arith.constant 0 : index
    %179 = vector.load %arg4[%c1, %c0_71, %c0_72] : memref<4x1x64xf32, #tpu.memory_space<vmem>>, vector<1x1x64xf32>
    %180 = vector.shape_cast %179 : vector<1x1x64xf32> to vector<1x64xf32>
    %c1_73 = arith.constant 1 : index
    %c0_74 = arith.constant 0 : index
    %c0_75 = arith.constant 0 : index
    %181 = vector.load %arg5[%c1_73, %c0_74, %c0_75] : memref<4x1x64xf32, #tpu.memory_space<vmem>>, vector<1x1x64xf32>
    %182 = vector.shape_cast %181 : vector<1x1x64xf32> to vector<1x64xf32>
    %cst_76 = arith.constant dense<0.000000e+00> : vector<8xf32>
    %183 = vector.multi_reduction <add>, %178, %cst_76 [1] : vector<8x64xf32> to vector<8xf32>
    %184 = vector.shape_cast %183 : vector<8xf32> to vector<8x1xf32>
    %cst_77 = arith.constant 6.400000e+01 : f32
    %185 = vector.broadcast %cst_77 : f32 to vector<8x1xf32>
    %186 = arith.divf %184, %185 : vector<8x1xf32>
    %187 = vector.broadcast %186 : vector<8x1xf32> to vector<8x64xf32>
    %188 = arith.subf %178, %187 : vector<8x64xf32>
    %189 = arith.mulf %188, %188 : vector<8x64xf32>
    %cst_78 = arith.constant dense<0.000000e+00> : vector<8xf32>
    %190 = vector.multi_reduction <add>, %189, %cst_78 [1] : vector<8x64xf32> to vector<8xf32>
    %191 = vector.shape_cast %190 : vector<8xf32> to vector<8x1xf32>
    %cst_79 = arith.constant 6.400000e+01 : f32
    %192 = vector.broadcast %cst_79 : f32 to vector<8x1xf32>
    %193 = arith.divf %191, %192 : vector<8x1xf32>
    %194 = vector.broadcast %186 : vector<8x1xf32> to vector<8x64xf32>
    %195 = arith.subf %178, %194 : vector<8x64xf32>
    %cst_80 = arith.constant 9.99999974E-6 : f32
    %196 = vector.broadcast %cst_80 : f32 to vector<8x1xf32>
    %197 = arith.addf %193, %196 : vector<8x1xf32>
    %198 = math.rsqrt %197 : vector<8x1xf32>
    %199 = vector.broadcast %198 : vector<8x1xf32> to vector<8x64xf32>
    %200 = arith.mulf %195, %199 : vector<8x64xf32>
    %201 = vector.broadcast %180 : vector<1x64xf32> to vector<8x64xf32>
    %202 = arith.mulf %200, %201 : vector<8x64xf32>
    %203 = vector.broadcast %182 : vector<1x64xf32> to vector<8x64xf32>
    %204 = arith.addf %202, %203 : vector<8x64xf32>
    %205 = arith.truncf %204 : vector<8x64xf32> to vector<8x64xbf16>
    %c1_81 = arith.constant 1 : index
    %c0_82 = arith.constant 0 : index
    %c0_83 = arith.constant 0 : index
    %206 = vector.load %arg6[%c1_81, %c0_82, %c0_83] : memref<4x64x128xbf16, #tpu.memory_space<vmem>>, vector<1x64x128xbf16>
    %207 = vector.shape_cast %206 : vector<1x64x128xbf16> to vector<64x128xbf16>
    %cst_84 = arith.constant dense<0.000000e+00> : vector<8x128xf32>
    %208 = tpu.matmul %205, %207, %cst_84 {dimension_numbers = #tpu.dot_dimension_numbers<[1], [0], [0], [1], [0, 0, 1, 1], [], []>} : vector<8x64xbf16>, vector<64x128xbf16>, vector<8x128xf32> -> vector<8x128xf32>
    %c1_85 = arith.constant 1 : index
    %c0_86 = arith.constant 0 : index
    %c0_87 = arith.constant 0 : index
    %209 = vector.load %arg7[%c1_85, %c0_86, %c0_87] : memref<4x1x128xf32, #tpu.memory_space<vmem>>, vector<1x1x128xf32>
    %210 = vector.shape_cast %209 : vector<1x1x128xf32> to vector<1x128xf32>
    %211 = vector.broadcast %210 : vector<1x128xf32> to vector<8x128xf32>
    %212 = arith.addf %208, %211 : vector<8x128xf32>
    %213 = vector.extract_strided_slice %212 {offsets = [0, 0], sizes = [8, 16], strides = [1, 1]} : vector<8x128xf32> to vector<8x16xf32>
    %214 = vector.extract_strided_slice %212 {offsets = [0, 64], sizes = [8, 16], strides = [1, 1]} : vector<8x128xf32> to vector<8x16xf32>
    %215 = arith.truncf %214 : vector<8x16xf32> to vector<8x16xbf16>
    %216 = arith.truncf %213 : vector<8x16xf32> to vector<8x16xbf16>
    %cst_88 = arith.constant dense<0.000000e+00> : vector<8x8xf32>
    %217 = tpu.matmul %216, %215, %cst_88 {dimension_numbers = #tpu.dot_dimension_numbers<[1], [1], [0], [0], [0, 0, 1, 0], [], []>} : vector<8x16xbf16>, vector<8x16xbf16>, vector<8x8xf32> -> vector<8x8xf32>
    %cst_89 = arith.constant 2.500000e-01 : f32
    %218 = vector.broadcast %cst_89 : f32 to vector<8x8xf32>
    %219 = arith.mulf %217, %218 : vector<8x8xf32>
    %220 = arith.addf %219, %2 : vector<8x8xf32>
    %cst_90 = arith.constant dense<0xFF800000> : vector<8xf32>
    %221 = vector.multi_reduction <maximumf>, %220, %cst_90 [1] : vector<8x8xf32> to vector<8xf32>
    %222 = vector.shape_cast %221 : vector<8xf32> to vector<8x1xf32>
    %223 = vector.broadcast %222 : vector<8x1xf32> to vector<8x8xf32>
    %224 = arith.subf %220, %223 : vector<8x8xf32>
    %225 = math.exp %224 : vector<8x8xf32>
    %cst_91 = arith.constant dense<0.000000e+00> : vector<8xf32>
    %226 = vector.multi_reduction <add>, %225, %cst_91 [1] : vector<8x8xf32> to vector<8xf32>
    %227 = vector.shape_cast %226 : vector<8xf32> to vector<8x1xf32>
    %228 = tpu.reciprocal %227 {approx = true} : vector<8x1xf32> -> vector<8x1xf32>
    %229 = vector.broadcast %228 : vector<8x1xf32> to vector<8x8xf32>
    %230 = arith.mulf %225, %229 : vector<8x8xf32>
    %231 = arith.truncf %230 : vector<8x8xf32> to vector<8x8xbf16>
    %cst_92 = arith.constant dense<0.000000e+00> : vector<8x16xf32>
    %232 = tpu.matmul %231, %215, %cst_92 {dimension_numbers = #tpu.dot_dimension_numbers<[1], [0], [0], [1], [0, 0, 1, 1], [], []>} : vector<8x8xbf16>, vector<8x16xbf16>, vector<8x16xf32> -> vector<8x16xf32>
    %233 = vector.extract_strided_slice %212 {offsets = [0, 16], sizes = [8, 16], strides = [1, 1]} : vector<8x128xf32> to vector<8x16xf32>
    %234 = vector.extract_strided_slice %212 {offsets = [0, 80], sizes = [8, 16], strides = [1, 1]} : vector<8x128xf32> to vector<8x16xf32>
    %235 = arith.truncf %234 : vector<8x16xf32> to vector<8x16xbf16>
    %236 = arith.truncf %233 : vector<8x16xf32> to vector<8x16xbf16>
    %cst_93 = arith.constant dense<0.000000e+00> : vector<8x8xf32>
    %237 = tpu.matmul %236, %235, %cst_93 {dimension_numbers = #tpu.dot_dimension_numbers<[1], [1], [0], [0], [0, 0, 1, 0], [], []>} : vector<8x16xbf16>, vector<8x16xbf16>, vector<8x8xf32> -> vector<8x8xf32>
    %cst_94 = arith.constant 2.500000e-01 : f32
    %238 = vector.broadcast %cst_94 : f32 to vector<8x8xf32>
    %239 = arith.mulf %237, %238 : vector<8x8xf32>
    %240 = arith.addf %239, %2 : vector<8x8xf32>
    %cst_95 = arith.constant dense<0xFF800000> : vector<8xf32>
    %241 = vector.multi_reduction <maximumf>, %240, %cst_95 [1] : vector<8x8xf32> to vector<8xf32>
    %242 = vector.shape_cast %241 : vector<8xf32> to vector<8x1xf32>
    %243 = vector.broadcast %242 : vector<8x1xf32> to vector<8x8xf32>
    %244 = arith.subf %240, %243 : vector<8x8xf32>
    %245 = math.exp %244 : vector<8x8xf32>
    %cst_96 = arith.constant dense<0.000000e+00> : vector<8xf32>
    %246 = vector.multi_reduction <add>, %245, %cst_96 [1] : vector<8x8xf32> to vector<8xf32>
    %247 = vector.shape_cast %246 : vector<8xf32> to vector<8x1xf32>
    %248 = tpu.reciprocal %247 {approx = true} : vector<8x1xf32> -> vector<8x1xf32>
    %249 = vector.broadcast %248 : vector<8x1xf32> to vector<8x8xf32>
    %250 = arith.mulf %245, %249 : vector<8x8xf32>
    %251 = arith.truncf %250 : vector<8x8xf32> to vector<8x8xbf16>
    %cst_97 = arith.constant dense<0.000000e+00> : vector<8x16xf32>
    %252 = tpu.matmul %251, %235, %cst_97 {dimension_numbers = #tpu.dot_dimension_numbers<[1], [0], [0], [1], [0, 0, 1, 1], [], []>} : vector<8x8xbf16>, vector<8x16xbf16>, vector<8x16xf32> -> vector<8x16xf32>
    %253 = vector.extract_strided_slice %212 {offsets = [0, 32], sizes = [8, 16], strides = [1, 1]} : vector<8x128xf32> to vector<8x16xf32>
    %254 = vector.extract_strided_slice %212 {offsets = [0, 96], sizes = [8, 16], strides = [1, 1]} : vector<8x128xf32> to vector<8x16xf32>
    %255 = arith.truncf %254 : vector<8x16xf32> to vector<8x16xbf16>
    %256 = arith.truncf %253 : vector<8x16xf32> to vector<8x16xbf16>
    %cst_98 = arith.constant dense<0.000000e+00> : vector<8x8xf32>
    %257 = tpu.matmul %256, %255, %cst_98 {dimension_numbers = #tpu.dot_dimension_numbers<[1], [1], [0], [0], [0, 0, 1, 0], [], []>} : vector<8x16xbf16>, vector<8x16xbf16>, vector<8x8xf32> -> vector<8x8xf32>
    %cst_99 = arith.constant 2.500000e-01 : f32
    %258 = vector.broadcast %cst_99 : f32 to vector<8x8xf32>
    %259 = arith.mulf %257, %258 : vector<8x8xf32>
    %260 = arith.addf %259, %2 : vector<8x8xf32>
    %cst_100 = arith.constant dense<0xFF800000> : vector<8xf32>
    %261 = vector.multi_reduction <maximumf>, %260, %cst_100 [1] : vector<8x8xf32> to vector<8xf32>
    %262 = vector.shape_cast %261 : vector<8xf32> to vector<8x1xf32>
    %263 = vector.broadcast %262 : vector<8x1xf32> to vector<8x8xf32>
    %264 = arith.subf %260, %263 : vector<8x8xf32>
    %265 = math.exp %264 : vector<8x8xf32>
    %cst_101 = arith.constant dense<0.000000e+00> : vector<8xf32>
    %266 = vector.multi_reduction <add>, %265, %cst_101 [1] : vector<8x8xf32> to vector<8xf32>
    %267 = vector.shape_cast %266 : vector<8xf32> to vector<8x1xf32>
    %268 = tpu.reciprocal %267 {approx = true} : vector<8x1xf32> -> vector<8x1xf32>
    %269 = vector.broadcast %268 : vector<8x1xf32> to vector<8x8xf32>
    %270 = arith.mulf %265, %269 : vector<8x8xf32>
    %271 = arith.truncf %270 : vector<8x8xf32> to vector<8x8xbf16>
    %cst_102 = arith.constant dense<0.000000e+00> : vector<8x16xf32>
    %272 = tpu.matmul %271, %255, %cst_102 {dimension_numbers = #tpu.dot_dimension_numbers<[1], [0], [0], [1], [0, 0, 1, 1], [], []>} : vector<8x8xbf16>, vector<8x16xbf16>, vector<8x16xf32> -> vector<8x16xf32>
    %273 = vector.extract_strided_slice %212 {offsets = [0, 48], sizes = [8, 16], strides = [1, 1]} : vector<8x128xf32> to vector<8x16xf32>
    %274 = vector.extract_strided_slice %212 {offsets = [0, 112], sizes = [8, 16], strides = [1, 1]} : vector<8x128xf32> to vector<8x16xf32>
    %275 = arith.truncf %274 : vector<8x16xf32> to vector<8x16xbf16>
    %276 = arith.truncf %273 : vector<8x16xf32> to vector<8x16xbf16>
    %cst_103 = arith.constant dense<0.000000e+00> : vector<8x8xf32>
    %277 = tpu.matmul %276, %275, %cst_103 {dimension_numbers = #tpu.dot_dimension_numbers<[1], [1], [0], [0], [0, 0, 1, 0], [], []>} : vector<8x16xbf16>, vector<8x16xbf16>, vector<8x8xf32> -> vector<8x8xf32>
    %cst_104 = arith.constant 2.500000e-01 : f32
    %278 = vector.broadcast %cst_104 : f32 to vector<8x8xf32>
    %279 = arith.mulf %277, %278 : vector<8x8xf32>
    %280 = arith.addf %279, %2 : vector<8x8xf32>
    %cst_105 = arith.constant dense<0xFF800000> : vector<8xf32>
    %281 = vector.multi_reduction <maximumf>, %280, %cst_105 [1] : vector<8x8xf32> to vector<8xf32>
    %282 = vector.shape_cast %281 : vector<8xf32> to vector<8x1xf32>
    %283 = vector.broadcast %282 : vector<8x1xf32> to vector<8x8xf32>
    %284 = arith.subf %280, %283 : vector<8x8xf32>
    %285 = math.exp %284 : vector<8x8xf32>
    %cst_106 = arith.constant dense<0.000000e+00> : vector<8xf32>
    %286 = vector.multi_reduction <add>, %285, %cst_106 [1] : vector<8x8xf32> to vector<8xf32>
    %287 = vector.shape_cast %286 : vector<8xf32> to vector<8x1xf32>
    %288 = tpu.reciprocal %287 {approx = true} : vector<8x1xf32> -> vector<8x1xf32>
    %289 = vector.broadcast %288 : vector<8x1xf32> to vector<8x8xf32>
    %290 = arith.mulf %285, %289 : vector<8x8xf32>
    %291 = arith.truncf %290 : vector<8x8xf32> to vector<8x8xbf16>
    %cst_107 = arith.constant dense<0.000000e+00> : vector<8x16xf32>
    %292 = tpu.matmul %291, %275, %cst_107 {dimension_numbers = #tpu.dot_dimension_numbers<[1], [0], [0], [1], [0, 0, 1, 1], [], []>} : vector<8x8xbf16>, vector<8x16xbf16>, vector<8x16xf32> -> vector<8x16xf32>
    %293 = tpu.concatenate %232, %252, %272, %292 in 1 : vector<8x16xf32>, vector<8x16xf32>, vector<8x16xf32>, vector<8x16xf32> -> vector<8x64xf32>
    %294 = arith.truncf %293 : vector<8x64xf32> to vector<8x64xbf16>
    %c1_108 = arith.constant 1 : index
    %c0_109 = arith.constant 0 : index
    %c0_110 = arith.constant 0 : index
    %295 = vector.load %arg8[%c1_108, %c0_109, %c0_110] : memref<4x64x64xbf16, #tpu.memory_space<vmem>>, vector<1x64x64xbf16>
    %296 = vector.shape_cast %295 : vector<1x64x64xbf16> to vector<64x64xbf16>
    %cst_111 = arith.constant dense<0.000000e+00> : vector<8x64xf32>
    %297 = tpu.matmul %294, %296, %cst_111 {dimension_numbers = #tpu.dot_dimension_numbers<[1], [0], [0], [1], [0, 0, 1, 1], [], []>} : vector<8x64xbf16>, vector<64x64xbf16>, vector<8x64xf32> -> vector<8x64xf32>
    %298 = arith.addf %178, %297 : vector<8x64xf32>
    %c1_112 = arith.constant 1 : index
    %c0_113 = arith.constant 0 : index
    %c0_114 = arith.constant 0 : index
    %299 = vector.load %arg9[%c1_112, %c0_113, %c0_114] : memref<4x1x64xf32, #tpu.memory_space<vmem>>, vector<1x1x64xf32>
    %300 = vector.shape_cast %299 : vector<1x1x64xf32> to vector<1x64xf32>
    %301 = vector.broadcast %300 : vector<1x64xf32> to vector<8x64xf32>
    %302 = arith.addf %298, %301 : vector<8x64xf32>
    %cst_115 = arith.constant dense<0.000000e+00> : vector<8xf32>
    %303 = vector.multi_reduction <add>, %302, %cst_115 [1] : vector<8x64xf32> to vector<8xf32>
    %304 = vector.shape_cast %303 : vector<8xf32> to vector<8x1xf32>
    %cst_116 = arith.constant 6.400000e+01 : f32
    %305 = vector.broadcast %cst_116 : f32 to vector<8x1xf32>
    %306 = arith.divf %304, %305 : vector<8x1xf32>
    %307 = vector.broadcast %306 : vector<8x1xf32> to vector<8x64xf32>
    %308 = arith.subf %302, %307 : vector<8x64xf32>
    %309 = arith.mulf %308, %308 : vector<8x64xf32>
    %cst_117 = arith.constant dense<0.000000e+00> : vector<8xf32>
    %310 = vector.multi_reduction <add>, %309, %cst_117 [1] : vector<8x64xf32> to vector<8xf32>
    %311 = vector.shape_cast %310 : vector<8xf32> to vector<8x1xf32>
    %cst_118 = arith.constant 6.400000e+01 : f32
    %312 = vector.broadcast %cst_118 : f32 to vector<8x1xf32>
    %313 = arith.divf %311, %312 : vector<8x1xf32>
    %314 = vector.broadcast %306 : vector<8x1xf32> to vector<8x64xf32>
    %315 = arith.subf %302, %314 : vector<8x64xf32>
    %cst_119 = arith.constant 9.99999974E-6 : f32
    %316 = vector.broadcast %cst_119 : f32 to vector<8x1xf32>
    %317 = arith.addf %313, %316 : vector<8x1xf32>
    %318 = math.rsqrt %317 : vector<8x1xf32>
    %319 = vector.broadcast %318 : vector<8x1xf32> to vector<8x64xf32>
    %320 = arith.mulf %315, %319 : vector<8x64xf32>
    %321 = vector.broadcast %180 : vector<1x64xf32> to vector<8x64xf32>
    %322 = arith.mulf %320, %321 : vector<8x64xf32>
    %323 = vector.broadcast %182 : vector<1x64xf32> to vector<8x64xf32>
    %324 = arith.addf %322, %323 : vector<8x64xf32>
    %325 = arith.truncf %324 : vector<8x64xf32> to vector<8x64xbf16>
    %c1_120 = arith.constant 1 : index
    %c0_121 = arith.constant 0 : index
    %c0_122 = arith.constant 0 : index
    %326 = vector.load %arg10[%c1_120, %c0_121, %c0_122] : memref<4x64x128xbf16, #tpu.memory_space<vmem>>, vector<1x64x128xbf16>
    %327 = vector.shape_cast %326 : vector<1x64x128xbf16> to vector<64x128xbf16>
    %cst_123 = arith.constant dense<0.000000e+00> : vector<8x128xf32>
    %328 = tpu.matmul %325, %327, %cst_123 {dimension_numbers = #tpu.dot_dimension_numbers<[1], [0], [0], [1], [0, 0, 1, 1], [], []>} : vector<8x64xbf16>, vector<64x128xbf16>, vector<8x128xf32> -> vector<8x128xf32>
    %c1_124 = arith.constant 1 : index
    %c0_125 = arith.constant 0 : index
    %c0_126 = arith.constant 0 : index
    %329 = vector.load %arg11[%c1_124, %c0_125, %c0_126] : memref<4x1x128xf32, #tpu.memory_space<vmem>>, vector<1x1x128xf32>
    %330 = vector.shape_cast %329 : vector<1x1x128xf32> to vector<1x128xf32>
    %331 = vector.broadcast %330 : vector<1x128xf32> to vector<8x128xf32>
    %332 = arith.addf %328, %331 : vector<8x128xf32>
    %333 = arith.mulf %332, %332 : vector<8x128xf32>
    %334 = arith.mulf %332, %333 : vector<8x128xf32>
    %cst_127 = arith.constant 4.471500e-02 : f32
    %335 = vector.broadcast %cst_127 : f32 to vector<8x128xf32>
    %336 = arith.mulf %335, %334 : vector<8x128xf32>
    %337 = arith.addf %332, %336 : vector<8x128xf32>
    %cst_128 = arith.constant 0.797884583 : f32
    %338 = vector.broadcast %cst_128 : f32 to vector<8x128xf32>
    %339 = arith.mulf %338, %337 : vector<8x128xf32>
    %340 = math.tanh %339 : vector<8x128xf32>
    %cst_129 = arith.constant 1.000000e+00 : f32
    %341 = vector.broadcast %cst_129 : f32 to vector<8x128xf32>
    %342 = arith.addf %341, %340 : vector<8x128xf32>
    %cst_130 = arith.constant 5.000000e-01 : f32
    %343 = vector.broadcast %cst_130 : f32 to vector<8x128xf32>
    %344 = arith.mulf %343, %342 : vector<8x128xf32>
    %345 = arith.mulf %332, %344 : vector<8x128xf32>
    %346 = arith.truncf %345 : vector<8x128xf32> to vector<8x128xbf16>
    %c1_131 = arith.constant 1 : index
    %c0_132 = arith.constant 0 : index
    %c0_133 = arith.constant 0 : index
    %347 = vector.load %arg12[%c1_131, %c0_132, %c0_133] : memref<4x128x64xbf16, #tpu.memory_space<vmem>>, vector<1x128x64xbf16>
    %348 = vector.shape_cast %347 : vector<1x128x64xbf16> to vector<128x64xbf16>
    %cst_134 = arith.constant dense<0.000000e+00> : vector<8x64xf32>
    %349 = tpu.matmul %346, %348, %cst_134 {dimension_numbers = #tpu.dot_dimension_numbers<[1], [0], [0], [1], [0, 0, 1, 1], [], []>} : vector<8x128xbf16>, vector<128x64xbf16>, vector<8x64xf32> -> vector<8x64xf32>
    %350 = arith.addf %302, %349 : vector<8x64xf32>
    %c1_135 = arith.constant 1 : index
    %c0_136 = arith.constant 0 : index
    %c0_137 = arith.constant 0 : index
    %351 = vector.load %arg13[%c1_135, %c0_136, %c0_137] : memref<4x1x64xf32, #tpu.memory_space<vmem>>, vector<1x1x64xf32>
    %352 = vector.shape_cast %351 : vector<1x1x64xf32> to vector<1x64xf32>
    %353 = vector.broadcast %352 : vector<1x64xf32> to vector<8x64xf32>
    %354 = arith.addf %350, %353 : vector<8x64xf32>
    %c2 = arith.constant 2 : index
    %c0_138 = arith.constant 0 : index
    %c0_139 = arith.constant 0 : index
    %355 = vector.load %arg4[%c2, %c0_138, %c0_139] : memref<4x1x64xf32, #tpu.memory_space<vmem>>, vector<1x1x64xf32>
    %356 = vector.shape_cast %355 : vector<1x1x64xf32> to vector<1x64xf32>
    %c2_140 = arith.constant 2 : index
    %c0_141 = arith.constant 0 : index
    %c0_142 = arith.constant 0 : index
    %357 = vector.load %arg5[%c2_140, %c0_141, %c0_142] : memref<4x1x64xf32, #tpu.memory_space<vmem>>, vector<1x1x64xf32>
    %358 = vector.shape_cast %357 : vector<1x1x64xf32> to vector<1x64xf32>
    %cst_143 = arith.constant dense<0.000000e+00> : vector<8xf32>
    %359 = vector.multi_reduction <add>, %354, %cst_143 [1] : vector<8x64xf32> to vector<8xf32>
    %360 = vector.shape_cast %359 : vector<8xf32> to vector<8x1xf32>
    %cst_144 = arith.constant 6.400000e+01 : f32
    %361 = vector.broadcast %cst_144 : f32 to vector<8x1xf32>
    %362 = arith.divf %360, %361 : vector<8x1xf32>
    %363 = vector.broadcast %362 : vector<8x1xf32> to vector<8x64xf32>
    %364 = arith.subf %354, %363 : vector<8x64xf32>
    %365 = arith.mulf %364, %364 : vector<8x64xf32>
    %cst_145 = arith.constant dense<0.000000e+00> : vector<8xf32>
    %366 = vector.multi_reduction <add>, %365, %cst_145 [1] : vector<8x64xf32> to vector<8xf32>
    %367 = vector.shape_cast %366 : vector<8xf32> to vector<8x1xf32>
    %cst_146 = arith.constant 6.400000e+01 : f32
    %368 = vector.broadcast %cst_146 : f32 to vector<8x1xf32>
    %369 = arith.divf %367, %368 : vector<8x1xf32>
    %370 = vector.broadcast %362 : vector<8x1xf32> to vector<8x64xf32>
    %371 = arith.subf %354, %370 : vector<8x64xf32>
    %cst_147 = arith.constant 9.99999974E-6 : f32
    %372 = vector.broadcast %cst_147 : f32 to vector<8x1xf32>
    %373 = arith.addf %369, %372 : vector<8x1xf32>
    %374 = math.rsqrt %373 : vector<8x1xf32>
    %375 = vector.broadcast %374 : vector<8x1xf32> to vector<8x64xf32>
    %376 = arith.mulf %371, %375 : vector<8x64xf32>
    %377 = vector.broadcast %356 : vector<1x64xf32> to vector<8x64xf32>
    %378 = arith.mulf %376, %377 : vector<8x64xf32>
    %379 = vector.broadcast %358 : vector<1x64xf32> to vector<8x64xf32>
    %380 = arith.addf %378, %379 : vector<8x64xf32>
    %381 = arith.truncf %380 : vector<8x64xf32> to vector<8x64xbf16>
    %c2_148 = arith.constant 2 : index
    %c0_149 = arith.constant 0 : index
    %c0_150 = arith.constant 0 : index
    %382 = vector.load %arg6[%c2_148, %c0_149, %c0_150] : memref<4x64x128xbf16, #tpu.memory_space<vmem>>, vector<1x64x128xbf16>
    %383 = vector.shape_cast %382 : vector<1x64x128xbf16> to vector<64x128xbf16>
    %cst_151 = arith.constant dense<0.000000e+00> : vector<8x128xf32>
    %384 = tpu.matmul %381, %383, %cst_151 {dimension_numbers = #tpu.dot_dimension_numbers<[1], [0], [0], [1], [0, 0, 1, 1], [], []>} : vector<8x64xbf16>, vector<64x128xbf16>, vector<8x128xf32> -> vector<8x128xf32>
    %c2_152 = arith.constant 2 : index
    %c0_153 = arith.constant 0 : index
    %c0_154 = arith.constant 0 : index
    %385 = vector.load %arg7[%c2_152, %c0_153, %c0_154] : memref<4x1x128xf32, #tpu.memory_space<vmem>>, vector<1x1x128xf32>
    %386 = vector.shape_cast %385 : vector<1x1x128xf32> to vector<1x128xf32>
    %387 = vector.broadcast %386 : vector<1x128xf32> to vector<8x128xf32>
    %388 = arith.addf %384, %387 : vector<8x128xf32>
    %389 = vector.extract_strided_slice %388 {offsets = [0, 0], sizes = [8, 16], strides = [1, 1]} : vector<8x128xf32> to vector<8x16xf32>
    %390 = vector.extract_strided_slice %388 {offsets = [0, 64], sizes = [8, 16], strides = [1, 1]} : vector<8x128xf32> to vector<8x16xf32>
    %391 = arith.truncf %390 : vector<8x16xf32> to vector<8x16xbf16>
    %392 = arith.truncf %389 : vector<8x16xf32> to vector<8x16xbf16>
    %cst_155 = arith.constant dense<0.000000e+00> : vector<8x8xf32>
    %393 = tpu.matmul %392, %391, %cst_155 {dimension_numbers = #tpu.dot_dimension_numbers<[1], [1], [0], [0], [0, 0, 1, 0], [], []>} : vector<8x16xbf16>, vector<8x16xbf16>, vector<8x8xf32> -> vector<8x8xf32>
    %cst_156 = arith.constant 2.500000e-01 : f32
    %394 = vector.broadcast %cst_156 : f32 to vector<8x8xf32>
    %395 = arith.mulf %393, %394 : vector<8x8xf32>
    %396 = arith.addf %395, %2 : vector<8x8xf32>
    %cst_157 = arith.constant dense<0xFF800000> : vector<8xf32>
    %397 = vector.multi_reduction <maximumf>, %396, %cst_157 [1] : vector<8x8xf32> to vector<8xf32>
    %398 = vector.shape_cast %397 : vector<8xf32> to vector<8x1xf32>
    %399 = vector.broadcast %398 : vector<8x1xf32> to vector<8x8xf32>
    %400 = arith.subf %396, %399 : vector<8x8xf32>
    %401 = math.exp %400 : vector<8x8xf32>
    %cst_158 = arith.constant dense<0.000000e+00> : vector<8xf32>
    %402 = vector.multi_reduction <add>, %401, %cst_158 [1] : vector<8x8xf32> to vector<8xf32>
    %403 = vector.shape_cast %402 : vector<8xf32> to vector<8x1xf32>
    %404 = tpu.reciprocal %403 {approx = true} : vector<8x1xf32> -> vector<8x1xf32>
    %405 = vector.broadcast %404 : vector<8x1xf32> to vector<8x8xf32>
    %406 = arith.mulf %401, %405 : vector<8x8xf32>
    %407 = arith.truncf %406 : vector<8x8xf32> to vector<8x8xbf16>
    %cst_159 = arith.constant dense<0.000000e+00> : vector<8x16xf32>
    %408 = tpu.matmul %407, %391, %cst_159 {dimension_numbers = #tpu.dot_dimension_numbers<[1], [0], [0], [1], [0, 0, 1, 1], [], []>} : vector<8x8xbf16>, vector<8x16xbf16>, vector<8x16xf32> -> vector<8x16xf32>
    %409 = vector.extract_strided_slice %388 {offsets = [0, 16], sizes = [8, 16], strides = [1, 1]} : vector<8x128xf32> to vector<8x16xf32>
    %410 = vector.extract_strided_slice %388 {offsets = [0, 80], sizes = [8, 16], strides = [1, 1]} : vector<8x128xf32> to vector<8x16xf32>
    %411 = arith.truncf %410 : vector<8x16xf32> to vector<8x16xbf16>
    %412 = arith.truncf %409 : vector<8x16xf32> to vector<8x16xbf16>
    %cst_160 = arith.constant dense<0.000000e+00> : vector<8x8xf32>
    %413 = tpu.matmul %412, %411, %cst_160 {dimension_numbers = #tpu.dot_dimension_numbers<[1], [1], [0], [0], [0, 0, 1, 0], [], []>} : vector<8x16xbf16>, vector<8x16xbf16>, vector<8x8xf32> -> vector<8x8xf32>
    %cst_161 = arith.constant 2.500000e-01 : f32
    %414 = vector.broadcast %cst_161 : f32 to vector<8x8xf32>
    %415 = arith.mulf %413, %414 : vector<8x8xf32>
    %416 = arith.addf %415, %2 : vector<8x8xf32>
    %cst_162 = arith.constant dense<0xFF800000> : vector<8xf32>
    %417 = vector.multi_reduction <maximumf>, %416, %cst_162 [1] : vector<8x8xf32> to vector<8xf32>
    %418 = vector.shape_cast %417 : vector<8xf32> to vector<8x1xf32>
    %419 = vector.broadcast %418 : vector<8x1xf32> to vector<8x8xf32>
    %420 = arith.subf %416, %419 : vector<8x8xf32>
    %421 = math.exp %420 : vector<8x8xf32>
    %cst_163 = arith.constant dense<0.000000e+00> : vector<8xf32>
    %422 = vector.multi_reduction <add>, %421, %cst_163 [1] : vector<8x8xf32> to vector<8xf32>
    %423 = vector.shape_cast %422 : vector<8xf32> to vector<8x1xf32>
    %424 = tpu.reciprocal %423 {approx = true} : vector<8x1xf32> -> vector<8x1xf32>
    %425 = vector.broadcast %424 : vector<8x1xf32> to vector<8x8xf32>
    %426 = arith.mulf %421, %425 : vector<8x8xf32>
    %427 = arith.truncf %426 : vector<8x8xf32> to vector<8x8xbf16>
    %cst_164 = arith.constant dense<0.000000e+00> : vector<8x16xf32>
    %428 = tpu.matmul %427, %411, %cst_164 {dimension_numbers = #tpu.dot_dimension_numbers<[1], [0], [0], [1], [0, 0, 1, 1], [], []>} : vector<8x8xbf16>, vector<8x16xbf16>, vector<8x16xf32> -> vector<8x16xf32>
    %429 = vector.extract_strided_slice %388 {offsets = [0, 32], sizes = [8, 16], strides = [1, 1]} : vector<8x128xf32> to vector<8x16xf32>
    %430 = vector.extract_strided_slice %388 {offsets = [0, 96], sizes = [8, 16], strides = [1, 1]} : vector<8x128xf32> to vector<8x16xf32>
    %431 = arith.truncf %430 : vector<8x16xf32> to vector<8x16xbf16>
    %432 = arith.truncf %429 : vector<8x16xf32> to vector<8x16xbf16>
    %cst_165 = arith.constant dense<0.000000e+00> : vector<8x8xf32>
    %433 = tpu.matmul %432, %431, %cst_165 {dimension_numbers = #tpu.dot_dimension_numbers<[1], [1], [0], [0], [0, 0, 1, 0], [], []>} : vector<8x16xbf16>, vector<8x16xbf16>, vector<8x8xf32> -> vector<8x8xf32>
    %cst_166 = arith.constant 2.500000e-01 : f32
    %434 = vector.broadcast %cst_166 : f32 to vector<8x8xf32>
    %435 = arith.mulf %433, %434 : vector<8x8xf32>
    %436 = arith.addf %435, %2 : vector<8x8xf32>
    %cst_167 = arith.constant dense<0xFF800000> : vector<8xf32>
    %437 = vector.multi_reduction <maximumf>, %436, %cst_167 [1] : vector<8x8xf32> to vector<8xf32>
    %438 = vector.shape_cast %437 : vector<8xf32> to vector<8x1xf32>
    %439 = vector.broadcast %438 : vector<8x1xf32> to vector<8x8xf32>
    %440 = arith.subf %436, %439 : vector<8x8xf32>
    %441 = math.exp %440 : vector<8x8xf32>
    %cst_168 = arith.constant dense<0.000000e+00> : vector<8xf32>
    %442 = vector.multi_reduction <add>, %441, %cst_168 [1] : vector<8x8xf32> to vector<8xf32>
    %443 = vector.shape_cast %442 : vector<8xf32> to vector<8x1xf32>
    %444 = tpu.reciprocal %443 {approx = true} : vector<8x1xf32> -> vector<8x1xf32>
    %445 = vector.broadcast %444 : vector<8x1xf32> to vector<8x8xf32>
    %446 = arith.mulf %441, %445 : vector<8x8xf32>
    %447 = arith.truncf %446 : vector<8x8xf32> to vector<8x8xbf16>
    %cst_169 = arith.constant dense<0.000000e+00> : vector<8x16xf32>
    %448 = tpu.matmul %447, %431, %cst_169 {dimension_numbers = #tpu.dot_dimension_numbers<[1], [0], [0], [1], [0, 0, 1, 1], [], []>} : vector<8x8xbf16>, vector<8x16xbf16>, vector<8x16xf32> -> vector<8x16xf32>
    %449 = vector.extract_strided_slice %388 {offsets = [0, 48], sizes = [8, 16], strides = [1, 1]} : vector<8x128xf32> to vector<8x16xf32>
    %450 = vector.extract_strided_slice %388 {offsets = [0, 112], sizes = [8, 16], strides = [1, 1]} : vector<8x128xf32> to vector<8x16xf32>
    %451 = arith.truncf %450 : vector<8x16xf32> to vector<8x16xbf16>
    %452 = arith.truncf %449 : vector<8x16xf32> to vector<8x16xbf16>
    %cst_170 = arith.constant dense<0.000000e+00> : vector<8x8xf32>
    %453 = tpu.matmul %452, %451, %cst_170 {dimension_numbers = #tpu.dot_dimension_numbers<[1], [1], [0], [0], [0, 0, 1, 0], [], []>} : vector<8x16xbf16>, vector<8x16xbf16>, vector<8x8xf32> -> vector<8x8xf32>
    %cst_171 = arith.constant 2.500000e-01 : f32
    %454 = vector.broadcast %cst_171 : f32 to vector<8x8xf32>
    %455 = arith.mulf %453, %454 : vector<8x8xf32>
    %456 = arith.addf %455, %2 : vector<8x8xf32>
    %cst_172 = arith.constant dense<0xFF800000> : vector<8xf32>
    %457 = vector.multi_reduction <maximumf>, %456, %cst_172 [1] : vector<8x8xf32> to vector<8xf32>
    %458 = vector.shape_cast %457 : vector<8xf32> to vector<8x1xf32>
    %459 = vector.broadcast %458 : vector<8x1xf32> to vector<8x8xf32>
    %460 = arith.subf %456, %459 : vector<8x8xf32>
    %461 = math.exp %460 : vector<8x8xf32>
    %cst_173 = arith.constant dense<0.000000e+00> : vector<8xf32>
    %462 = vector.multi_reduction <add>, %461, %cst_173 [1] : vector<8x8xf32> to vector<8xf32>
    %463 = vector.shape_cast %462 : vector<8xf32> to vector<8x1xf32>
    %464 = tpu.reciprocal %463 {approx = true} : vector<8x1xf32> -> vector<8x1xf32>
    %465 = vector.broadcast %464 : vector<8x1xf32> to vector<8x8xf32>
    %466 = arith.mulf %461, %465 : vector<8x8xf32>
    %467 = arith.truncf %466 : vector<8x8xf32> to vector<8x8xbf16>
    %cst_174 = arith.constant dense<0.000000e+00> : vector<8x16xf32>
    %468 = tpu.matmul %467, %451, %cst_174 {dimension_numbers = #tpu.dot_dimension_numbers<[1], [0], [0], [1], [0, 0, 1, 1], [], []>} : vector<8x8xbf16>, vector<8x16xbf16>, vector<8x16xf32> -> vector<8x16xf32>
    %469 = tpu.concatenate %408, %428, %448, %468 in 1 : vector<8x16xf32>, vector<8x16xf32>, vector<8x16xf32>, vector<8x16xf32> -> vector<8x64xf32>
    %470 = arith.truncf %469 : vector<8x64xf32> to vector<8x64xbf16>
    %c2_175 = arith.constant 2 : index
    %c0_176 = arith.constant 0 : index
    %c0_177 = arith.constant 0 : index
    %471 = vector.load %arg8[%c2_175, %c0_176, %c0_177] : memref<4x64x64xbf16, #tpu.memory_space<vmem>>, vector<1x64x64xbf16>
    %472 = vector.shape_cast %471 : vector<1x64x64xbf16> to vector<64x64xbf16>
    %cst_178 = arith.constant dense<0.000000e+00> : vector<8x64xf32>
    %473 = tpu.matmul %470, %472, %cst_178 {dimension_numbers = #tpu.dot_dimension_numbers<[1], [0], [0], [1], [0, 0, 1, 1], [], []>} : vector<8x64xbf16>, vector<64x64xbf16>, vector<8x64xf32> -> vector<8x64xf32>
    %474 = arith.addf %354, %473 : vector<8x64xf32>
    %c2_179 = arith.constant 2 : index
    %c0_180 = arith.constant 0 : index
    %c0_181 = arith.constant 0 : index
    %475 = vector.load %arg9[%c2_179, %c0_180, %c0_181] : memref<4x1x64xf32, #tpu.memory_space<vmem>>, vector<1x1x64xf32>
    %476 = vector.shape_cast %475 : vector<1x1x64xf32> to vector<1x64xf32>
    %477 = vector.broadcast %476 : vector<1x64xf32> to vector<8x64xf32>
    %478 = arith.addf %474, %477 : vector<8x64xf32>
    %cst_182 = arith.constant dense<0.000000e+00> : vector<8xf32>
    %479 = vector.multi_reduction <add>, %478, %cst_182 [1] : vector<8x64xf32> to vector<8xf32>
    %480 = vector.shape_cast %479 : vector<8xf32> to vector<8x1xf32>
    %cst_183 = arith.constant 6.400000e+01 : f32
    %481 = vector.broadcast %cst_183 : f32 to vector<8x1xf32>
    %482 = arith.divf %480, %481 : vector<8x1xf32>
    %483 = vector.broadcast %482 : vector<8x1xf32> to vector<8x64xf32>
    %484 = arith.subf %478, %483 : vector<8x64xf32>
    %485 = arith.mulf %484, %484 : vector<8x64xf32>
    %cst_184 = arith.constant dense<0.000000e+00> : vector<8xf32>
    %486 = vector.multi_reduction <add>, %485, %cst_184 [1] : vector<8x64xf32> to vector<8xf32>
    %487 = vector.shape_cast %486 : vector<8xf32> to vector<8x1xf32>
    %cst_185 = arith.constant 6.400000e+01 : f32
    %488 = vector.broadcast %cst_185 : f32 to vector<8x1xf32>
    %489 = arith.divf %487, %488 : vector<8x1xf32>
    %490 = vector.broadcast %482 : vector<8x1xf32> to vector<8x64xf32>
    %491 = arith.subf %478, %490 : vector<8x64xf32>
    %cst_186 = arith.constant 9.99999974E-6 : f32
    %492 = vector.broadcast %cst_186 : f32 to vector<8x1xf32>
    %493 = arith.addf %489, %492 : vector<8x1xf32>
    %494 = math.rsqrt %493 : vector<8x1xf32>
    %495 = vector.broadcast %494 : vector<8x1xf32> to vector<8x64xf32>
    %496 = arith.mulf %491, %495 : vector<8x64xf32>
    %497 = vector.broadcast %356 : vector<1x64xf32> to vector<8x64xf32>
    %498 = arith.mulf %496, %497 : vector<8x64xf32>
    %499 = vector.broadcast %358 : vector<1x64xf32> to vector<8x64xf32>
    %500 = arith.addf %498, %499 : vector<8x64xf32>
    %501 = arith.truncf %500 : vector<8x64xf32> to vector<8x64xbf16>
    %c2_187 = arith.constant 2 : index
    %c0_188 = arith.constant 0 : index
    %c0_189 = arith.constant 0 : index
    %502 = vector.load %arg10[%c2_187, %c0_188, %c0_189] : memref<4x64x128xbf16, #tpu.memory_space<vmem>>, vector<1x64x128xbf16>
    %503 = vector.shape_cast %502 : vector<1x64x128xbf16> to vector<64x128xbf16>
    %cst_190 = arith.constant dense<0.000000e+00> : vector<8x128xf32>
    %504 = tpu.matmul %501, %503, %cst_190 {dimension_numbers = #tpu.dot_dimension_numbers<[1], [0], [0], [1], [0, 0, 1, 1], [], []>} : vector<8x64xbf16>, vector<64x128xbf16>, vector<8x128xf32> -> vector<8x128xf32>
    %c2_191 = arith.constant 2 : index
    %c0_192 = arith.constant 0 : index
    %c0_193 = arith.constant 0 : index
    %505 = vector.load %arg11[%c2_191, %c0_192, %c0_193] : memref<4x1x128xf32, #tpu.memory_space<vmem>>, vector<1x1x128xf32>
    %506 = vector.shape_cast %505 : vector<1x1x128xf32> to vector<1x128xf32>
    %507 = vector.broadcast %506 : vector<1x128xf32> to vector<8x128xf32>
    %508 = arith.addf %504, %507 : vector<8x128xf32>
    %509 = arith.mulf %508, %508 : vector<8x128xf32>
    %510 = arith.mulf %508, %509 : vector<8x128xf32>
    %cst_194 = arith.constant 4.471500e-02 : f32
    %511 = vector.broadcast %cst_194 : f32 to vector<8x128xf32>
    %512 = arith.mulf %511, %510 : vector<8x128xf32>
    %513 = arith.addf %508, %512 : vector<8x128xf32>
    %cst_195 = arith.constant 0.797884583 : f32
    %514 = vector.broadcast %cst_195 : f32 to vector<8x128xf32>
    %515 = arith.mulf %514, %513 : vector<8x128xf32>
    %516 = math.tanh %515 : vector<8x128xf32>
    %cst_196 = arith.constant 1.000000e+00 : f32
    %517 = vector.broadcast %cst_196 : f32 to vector<8x128xf32>
    %518 = arith.addf %517, %516 : vector<8x128xf32>
    %cst_197 = arith.constant 5.000000e-01 : f32
    %519 = vector.broadcast %cst_197 : f32 to vector<8x128xf32>
    %520 = arith.mulf %519, %518 : vector<8x128xf32>
    %521 = arith.mulf %508, %520 : vector<8x128xf32>
    %522 = arith.truncf %521 : vector<8x128xf32> to vector<8x128xbf16>
    %c2_198 = arith.constant 2 : index
    %c0_199 = arith.constant 0 : index
    %c0_200 = arith.constant 0 : index
    %523 = vector.load %arg12[%c2_198, %c0_199, %c0_200] : memref<4x128x64xbf16, #tpu.memory_space<vmem>>, vector<1x128x64xbf16>
    %524 = vector.shape_cast %523 : vector<1x128x64xbf16> to vector<128x64xbf16>
    %cst_201 = arith.constant dense<0.000000e+00> : vector<8x64xf32>
    %525 = tpu.matmul %522, %524, %cst_201 {dimension_numbers = #tpu.dot_dimension_numbers<[1], [0], [0], [1], [0, 0, 1, 1], [], []>} : vector<8x128xbf16>, vector<128x64xbf16>, vector<8x64xf32> -> vector<8x64xf32>
    %526 = arith.addf %478, %525 : vector<8x64xf32>
    %c2_202 = arith.constant 2 : index
    %c0_203 = arith.constant 0 : index
    %c0_204 = arith.constant 0 : index
    %527 = vector.load %arg13[%c2_202, %c0_203, %c0_204] : memref<4x1x64xf32, #tpu.memory_space<vmem>>, vector<1x1x64xf32>
    %528 = vector.shape_cast %527 : vector<1x1x64xf32> to vector<1x64xf32>
    %529 = vector.broadcast %528 : vector<1x64xf32> to vector<8x64xf32>
    %530 = arith.addf %526, %529 : vector<8x64xf32>
    %c3 = arith.constant 3 : index
    %c0_205 = arith.constant 0 : index
    %c0_206 = arith.constant 0 : index
    %531 = vector.load %arg4[%c3, %c0_205, %c0_206] : memref<4x1x64xf32, #tpu.memory_space<vmem>>, vector<1x1x64xf32>
    %532 = vector.shape_cast %531 : vector<1x1x64xf32> to vector<1x64xf32>
    %c3_207 = arith.constant 3 : index
    %c0_208 = arith.constant 0 : index
    %c0_209 = arith.constant 0 : index
    %533 = vector.load %arg5[%c3_207, %c0_208, %c0_209] : memref<4x1x64xf32, #tpu.memory_space<vmem>>, vector<1x1x64xf32>
    %534 = vector.shape_cast %533 : vector<1x1x64xf32> to vector<1x64xf32>
    %cst_210 = arith.constant dense<0.000000e+00> : vector<8xf32>
    %535 = vector.multi_reduction <add>, %530, %cst_210 [1] : vector<8x64xf32> to vector<8xf32>
    %536 = vector.shape_cast %535 : vector<8xf32> to vector<8x1xf32>
    %cst_211 = arith.constant 6.400000e+01 : f32
    %537 = vector.broadcast %cst_211 : f32 to vector<8x1xf32>
    %538 = arith.divf %536, %537 : vector<8x1xf32>
    %539 = vector.broadcast %538 : vector<8x1xf32> to vector<8x64xf32>
    %540 = arith.subf %530, %539 : vector<8x64xf32>
    %541 = arith.mulf %540, %540 : vector<8x64xf32>
    %cst_212 = arith.constant dense<0.000000e+00> : vector<8xf32>
    %542 = vector.multi_reduction <add>, %541, %cst_212 [1] : vector<8x64xf32> to vector<8xf32>
    %543 = vector.shape_cast %542 : vector<8xf32> to vector<8x1xf32>
    %cst_213 = arith.constant 6.400000e+01 : f32
    %544 = vector.broadcast %cst_213 : f32 to vector<8x1xf32>
    %545 = arith.divf %543, %544 : vector<8x1xf32>
    %546 = vector.broadcast %538 : vector<8x1xf32> to vector<8x64xf32>
    %547 = arith.subf %530, %546 : vector<8x64xf32>
    %cst_214 = arith.constant 9.99999974E-6 : f32
    %548 = vector.broadcast %cst_214 : f32 to vector<8x1xf32>
    %549 = arith.addf %545, %548 : vector<8x1xf32>
    %550 = math.rsqrt %549 : vector<8x1xf32>
    %551 = vector.broadcast %550 : vector<8x1xf32> to vector<8x64xf32>
    %552 = arith.mulf %547, %551 : vector<8x64xf32>
    %553 = vector.broadcast %532 : vector<1x64xf32> to vector<8x64xf32>
    %554 = arith.mulf %552, %553 : vector<8x64xf32>
    %555 = vector.broadcast %534 : vector<1x64xf32> to vector<8x64xf32>
    %556 = arith.addf %554, %555 : vector<8x64xf32>
    %557 = arith.truncf %556 : vector<8x64xf32> to vector<8x64xbf16>
    %c3_215 = arith.constant 3 : index
    %c0_216 = arith.constant 0 : index
    %c0_217 = arith.constant 0 : index
    %558 = vector.load %arg6[%c3_215, %c0_216, %c0_217] : memref<4x64x128xbf16, #tpu.memory_space<vmem>>, vector<1x64x128xbf16>
    %559 = vector.shape_cast %558 : vector<1x64x128xbf16> to vector<64x128xbf16>
    %cst_218 = arith.constant dense<0.000000e+00> : vector<8x128xf32>
    %560 = tpu.matmul %557, %559, %cst_218 {dimension_numbers = #tpu.dot_dimension_numbers<[1], [0], [0], [1], [0, 0, 1, 1], [], []>} : vector<8x64xbf16>, vector<64x128xbf16>, vector<8x128xf32> -> vector<8x128xf32>
    %c3_219 = arith.constant 3 : index
    %c0_220 = arith.constant 0 : index
    %c0_221 = arith.constant 0 : index
    %561 = vector.load %arg7[%c3_219, %c0_220, %c0_221] : memref<4x1x128xf32, #tpu.memory_space<vmem>>, vector<1x1x128xf32>
    %562 = vector.shape_cast %561 : vector<1x1x128xf32> to vector<1x128xf32>
    %563 = vector.broadcast %562 : vector<1x128xf32> to vector<8x128xf32>
    %564 = arith.addf %560, %563 : vector<8x128xf32>
    %565 = vector.extract_strided_slice %564 {offsets = [0, 0], sizes = [8, 16], strides = [1, 1]} : vector<8x128xf32> to vector<8x16xf32>
    %566 = vector.extract_strided_slice %564 {offsets = [0, 64], sizes = [8, 16], strides = [1, 1]} : vector<8x128xf32> to vector<8x16xf32>
    %567 = arith.truncf %566 : vector<8x16xf32> to vector<8x16xbf16>
    %568 = arith.truncf %565 : vector<8x16xf32> to vector<8x16xbf16>
    %cst_222 = arith.constant dense<0.000000e+00> : vector<8x8xf32>
    %569 = tpu.matmul %568, %567, %cst_222 {dimension_numbers = #tpu.dot_dimension_numbers<[1], [1], [0], [0], [0, 0, 1, 0], [], []>} : vector<8x16xbf16>, vector<8x16xbf16>, vector<8x8xf32> -> vector<8x8xf32>
    %cst_223 = arith.constant 2.500000e-01 : f32
    %570 = vector.broadcast %cst_223 : f32 to vector<8x8xf32>
    %571 = arith.mulf %569, %570 : vector<8x8xf32>
    %572 = arith.addf %571, %2 : vector<8x8xf32>
    %cst_224 = arith.constant dense<0xFF800000> : vector<8xf32>
    %573 = vector.multi_reduction <maximumf>, %572, %cst_224 [1] : vector<8x8xf32> to vector<8xf32>
    %574 = vector.shape_cast %573 : vector<8xf32> to vector<8x1xf32>
    %575 = vector.broadcast %574 : vector<8x1xf32> to vector<8x8xf32>
    %576 = arith.subf %572, %575 : vector<8x8xf32>
    %577 = math.exp %576 : vector<8x8xf32>
    %cst_225 = arith.constant dense<0.000000e+00> : vector<8xf32>
    %578 = vector.multi_reduction <add>, %577, %cst_225 [1] : vector<8x8xf32> to vector<8xf32>
    %579 = vector.shape_cast %578 : vector<8xf32> to vector<8x1xf32>
    %580 = tpu.reciprocal %579 {approx = true} : vector<8x1xf32> -> vector<8x1xf32>
    %581 = vector.broadcast %580 : vector<8x1xf32> to vector<8x8xf32>
    %582 = arith.mulf %577, %581 : vector<8x8xf32>
    %583 = arith.truncf %582 : vector<8x8xf32> to vector<8x8xbf16>
    %cst_226 = arith.constant dense<0.000000e+00> : vector<8x16xf32>
    %584 = tpu.matmul %583, %567, %cst_226 {dimension_numbers = #tpu.dot_dimension_numbers<[1], [0], [0], [1], [0, 0, 1, 1], [], []>} : vector<8x8xbf16>, vector<8x16xbf16>, vector<8x16xf32> -> vector<8x16xf32>
    %585 = vector.extract_strided_slice %564 {offsets = [0, 16], sizes = [8, 16], strides = [1, 1]} : vector<8x128xf32> to vector<8x16xf32>
    %586 = vector.extract_strided_slice %564 {offsets = [0, 80], sizes = [8, 16], strides = [1, 1]} : vector<8x128xf32> to vector<8x16xf32>
    %587 = arith.truncf %586 : vector<8x16xf32> to vector<8x16xbf16>
    %588 = arith.truncf %585 : vector<8x16xf32> to vector<8x16xbf16>
    %cst_227 = arith.constant dense<0.000000e+00> : vector<8x8xf32>
    %589 = tpu.matmul %588, %587, %cst_227 {dimension_numbers = #tpu.dot_dimension_numbers<[1], [1], [0], [0], [0, 0, 1, 0], [], []>} : vector<8x16xbf16>, vector<8x16xbf16>, vector<8x8xf32> -> vector<8x8xf32>
    %cst_228 = arith.constant 2.500000e-01 : f32
    %590 = vector.broadcast %cst_228 : f32 to vector<8x8xf32>
    %591 = arith.mulf %589, %590 : vector<8x8xf32>
    %592 = arith.addf %591, %2 : vector<8x8xf32>
    %cst_229 = arith.constant dense<0xFF800000> : vector<8xf32>
    %593 = vector.multi_reduction <maximumf>, %592, %cst_229 [1] : vector<8x8xf32> to vector<8xf32>
    %594 = vector.shape_cast %593 : vector<8xf32> to vector<8x1xf32>
    %595 = vector.broadcast %594 : vector<8x1xf32> to vector<8x8xf32>
    %596 = arith.subf %592, %595 : vector<8x8xf32>
    %597 = math.exp %596 : vector<8x8xf32>
    %cst_230 = arith.constant dense<0.000000e+00> : vector<8xf32>
    %598 = vector.multi_reduction <add>, %597, %cst_230 [1] : vector<8x8xf32> to vector<8xf32>
    %599 = vector.shape_cast %598 : vector<8xf32> to vector<8x1xf32>
    %600 = tpu.reciprocal %599 {approx = true} : vector<8x1xf32> -> vector<8x1xf32>
    %601 = vector.broadcast %600 : vector<8x1xf32> to vector<8x8xf32>
    %602 = arith.mulf %597, %601 : vector<8x8xf32>
    %603 = arith.truncf %602 : vector<8x8xf32> to vector<8x8xbf16>
    %cst_231 = arith.constant dense<0.000000e+00> : vector<8x16xf32>
    %604 = tpu.matmul %603, %587, %cst_231 {dimension_numbers = #tpu.dot_dimension_numbers<[1], [0], [0], [1], [0, 0, 1, 1], [], []>} : vector<8x8xbf16>, vector<8x16xbf16>, vector<8x16xf32> -> vector<8x16xf32>
    %605 = vector.extract_strided_slice %564 {offsets = [0, 32], sizes = [8, 16], strides = [1, 1]} : vector<8x128xf32> to vector<8x16xf32>
    %606 = vector.extract_strided_slice %564 {offsets = [0, 96], sizes = [8, 16], strides = [1, 1]} : vector<8x128xf32> to vector<8x16xf32>
    %607 = arith.truncf %606 : vector<8x16xf32> to vector<8x16xbf16>
    %608 = arith.truncf %605 : vector<8x16xf32> to vector<8x16xbf16>
    %cst_232 = arith.constant dense<0.000000e+00> : vector<8x8xf32>
    %609 = tpu.matmul %608, %607, %cst_232 {dimension_numbers = #tpu.dot_dimension_numbers<[1], [1], [0], [0], [0, 0, 1, 0], [], []>} : vector<8x16xbf16>, vector<8x16xbf16>, vector<8x8xf32> -> vector<8x8xf32>
    %cst_233 = arith.constant 2.500000e-01 : f32
    %610 = vector.broadcast %cst_233 : f32 to vector<8x8xf32>
    %611 = arith.mulf %609, %610 : vector<8x8xf32>
    %612 = arith.addf %611, %2 : vector<8x8xf32>
    %cst_234 = arith.constant dense<0xFF800000> : vector<8xf32>
    %613 = vector.multi_reduction <maximumf>, %612, %cst_234 [1] : vector<8x8xf32> to vector<8xf32>
    %614 = vector.shape_cast %613 : vector<8xf32> to vector<8x1xf32>
    %615 = vector.broadcast %614 : vector<8x1xf32> to vector<8x8xf32>
    %616 = arith.subf %612, %615 : vector<8x8xf32>
    %617 = math.exp %616 : vector<8x8xf32>
    %cst_235 = arith.constant dense<0.000000e+00> : vector<8xf32>
    %618 = vector.multi_reduction <add>, %617, %cst_235 [1] : vector<8x8xf32> to vector<8xf32>
    %619 = vector.shape_cast %618 : vector<8xf32> to vector<8x1xf32>
    %620 = tpu.reciprocal %619 {approx = true} : vector<8x1xf32> -> vector<8x1xf32>
    %621 = vector.broadcast %620 : vector<8x1xf32> to vector<8x8xf32>
    %622 = arith.mulf %617, %621 : vector<8x8xf32>
    %623 = arith.truncf %622 : vector<8x8xf32> to vector<8x8xbf16>
    %cst_236 = arith.constant dense<0.000000e+00> : vector<8x16xf32>
    %624 = tpu.matmul %623, %607, %cst_236 {dimension_numbers = #tpu.dot_dimension_numbers<[1], [0], [0], [1], [0, 0, 1, 1], [], []>} : vector<8x8xbf16>, vector<8x16xbf16>, vector<8x16xf32> -> vector<8x16xf32>
    %625 = vector.extract_strided_slice %564 {offsets = [0, 48], sizes = [8, 16], strides = [1, 1]} : vector<8x128xf32> to vector<8x16xf32>
    %626 = vector.extract_strided_slice %564 {offsets = [0, 112], sizes = [8, 16], strides = [1, 1]} : vector<8x128xf32> to vector<8x16xf32>
    %627 = arith.truncf %626 : vector<8x16xf32> to vector<8x16xbf16>
    %628 = arith.truncf %625 : vector<8x16xf32> to vector<8x16xbf16>
    %cst_237 = arith.constant dense<0.000000e+00> : vector<8x8xf32>
    %629 = tpu.matmul %628, %627, %cst_237 {dimension_numbers = #tpu.dot_dimension_numbers<[1], [1], [0], [0], [0, 0, 1, 0], [], []>} : vector<8x16xbf16>, vector<8x16xbf16>, vector<8x8xf32> -> vector<8x8xf32>
    %cst_238 = arith.constant 2.500000e-01 : f32
    %630 = vector.broadcast %cst_238 : f32 to vector<8x8xf32>
    %631 = arith.mulf %629, %630 : vector<8x8xf32>
    %632 = arith.addf %631, %2 : vector<8x8xf32>
    %cst_239 = arith.constant dense<0xFF800000> : vector<8xf32>
    %633 = vector.multi_reduction <maximumf>, %632, %cst_239 [1] : vector<8x8xf32> to vector<8xf32>
    %634 = vector.shape_cast %633 : vector<8xf32> to vector<8x1xf32>
    %635 = vector.broadcast %634 : vector<8x1xf32> to vector<8x8xf32>
    %636 = arith.subf %632, %635 : vector<8x8xf32>
    %637 = math.exp %636 : vector<8x8xf32>
    %cst_240 = arith.constant dense<0.000000e+00> : vector<8xf32>
    %638 = vector.multi_reduction <add>, %637, %cst_240 [1] : vector<8x8xf32> to vector<8xf32>
    %639 = vector.shape_cast %638 : vector<8xf32> to vector<8x1xf32>
    %640 = tpu.reciprocal %639 {approx = true} : vector<8x1xf32> -> vector<8x1xf32>
    %641 = vector.broadcast %640 : vector<8x1xf32> to vector<8x8xf32>
    %642 = arith.mulf %637, %641 : vector<8x8xf32>
    %643 = arith.truncf %642 : vector<8x8xf32> to vector<8x8xbf16>
    %cst_241 = arith.constant dense<0.000000e+00> : vector<8x16xf32>
    %644 = tpu.matmul %643, %627, %cst_241 {dimension_numbers = #tpu.dot_dimension_numbers<[1], [0], [0], [1], [0, 0, 1, 1], [], []>} : vector<8x8xbf16>, vector<8x16xbf16>, vector<8x16xf32> -> vector<8x16xf32>
    %645 = tpu.concatenate %584, %604, %624, %644 in 1 : vector<8x16xf32>, vector<8x16xf32>, vector<8x16xf32>, vector<8x16xf32> -> vector<8x64xf32>
    %646 = arith.truncf %645 : vector<8x64xf32> to vector<8x64xbf16>
    %c3_242 = arith.constant 3 : index
    %c0_243 = arith.constant 0 : index
    %c0_244 = arith.constant 0 : index
    %647 = vector.load %arg8[%c3_242, %c0_243, %c0_244] : memref<4x64x64xbf16, #tpu.memory_space<vmem>>, vector<1x64x64xbf16>
    %648 = vector.shape_cast %647 : vector<1x64x64xbf16> to vector<64x64xbf16>
    %cst_245 = arith.constant dense<0.000000e+00> : vector<8x64xf32>
    %649 = tpu.matmul %646, %648, %cst_245 {dimension_numbers = #tpu.dot_dimension_numbers<[1], [0], [0], [1], [0, 0, 1, 1], [], []>} : vector<8x64xbf16>, vector<64x64xbf16>, vector<8x64xf32> -> vector<8x64xf32>
    %650 = arith.addf %530, %649 : vector<8x64xf32>
    %c3_246 = arith.constant 3 : index
    %c0_247 = arith.constant 0 : index
    %c0_248 = arith.constant 0 : index
    %651 = vector.load %arg9[%c3_246, %c0_247, %c0_248] : memref<4x1x64xf32, #tpu.memory_space<vmem>>, vector<1x1x64xf32>
    %652 = vector.shape_cast %651 : vector<1x1x64xf32> to vector<1x64xf32>
    %653 = vector.broadcast %652 : vector<1x64xf32> to vector<8x64xf32>
    %654 = arith.addf %650, %653 : vector<8x64xf32>
    %cst_249 = arith.constant dense<0.000000e+00> : vector<8xf32>
    %655 = vector.multi_reduction <add>, %654, %cst_249 [1] : vector<8x64xf32> to vector<8xf32>
    %656 = vector.shape_cast %655 : vector<8xf32> to vector<8x1xf32>
    %cst_250 = arith.constant 6.400000e+01 : f32
    %657 = vector.broadcast %cst_250 : f32 to vector<8x1xf32>
    %658 = arith.divf %656, %657 : vector<8x1xf32>
    %659 = vector.broadcast %658 : vector<8x1xf32> to vector<8x64xf32>
    %660 = arith.subf %654, %659 : vector<8x64xf32>
    %661 = arith.mulf %660, %660 : vector<8x64xf32>
    %cst_251 = arith.constant dense<0.000000e+00> : vector<8xf32>
    %662 = vector.multi_reduction <add>, %661, %cst_251 [1] : vector<8x64xf32> to vector<8xf32>
    %663 = vector.shape_cast %662 : vector<8xf32> to vector<8x1xf32>
    %cst_252 = arith.constant 6.400000e+01 : f32
    %664 = vector.broadcast %cst_252 : f32 to vector<8x1xf32>
    %665 = arith.divf %663, %664 : vector<8x1xf32>
    %666 = vector.broadcast %658 : vector<8x1xf32> to vector<8x64xf32>
    %667 = arith.subf %654, %666 : vector<8x64xf32>
    %cst_253 = arith.constant 9.99999974E-6 : f32
    %668 = vector.broadcast %cst_253 : f32 to vector<8x1xf32>
    %669 = arith.addf %665, %668 : vector<8x1xf32>
    %670 = math.rsqrt %669 : vector<8x1xf32>
    %671 = vector.broadcast %670 : vector<8x1xf32> to vector<8x64xf32>
    %672 = arith.mulf %667, %671 : vector<8x64xf32>
    %673 = vector.broadcast %532 : vector<1x64xf32> to vector<8x64xf32>
    %674 = arith.mulf %672, %673 : vector<8x64xf32>
    %675 = vector.broadcast %534 : vector<1x64xf32> to vector<8x64xf32>
    %676 = arith.addf %674, %675 : vector<8x64xf32>
    %677 = arith.truncf %676 : vector<8x64xf32> to vector<8x64xbf16>
    %c3_254 = arith.constant 3 : index
    %c0_255 = arith.constant 0 : index
    %c0_256 = arith.constant 0 : index
    %678 = vector.load %arg10[%c3_254, %c0_255, %c0_256] : memref<4x64x128xbf16, #tpu.memory_space<vmem>>, vector<1x64x128xbf16>
    %679 = vector.shape_cast %678 : vector<1x64x128xbf16> to vector<64x128xbf16>
    %cst_257 = arith.constant dense<0.000000e+00> : vector<8x128xf32>
    %680 = tpu.matmul %677, %679, %cst_257 {dimension_numbers = #tpu.dot_dimension_numbers<[1], [0], [0], [1], [0, 0, 1, 1], [], []>} : vector<8x64xbf16>, vector<64x128xbf16>, vector<8x128xf32> -> vector<8x128xf32>
    %c3_258 = arith.constant 3 : index
    %c0_259 = arith.constant 0 : index
    %c0_260 = arith.constant 0 : index
    %681 = vector.load %arg11[%c3_258, %c0_259, %c0_260] : memref<4x1x128xf32, #tpu.memory_space<vmem>>, vector<1x1x128xf32>
    %682 = vector.shape_cast %681 : vector<1x1x128xf32> to vector<1x128xf32>
    %683 = vector.broadcast %682 : vector<1x128xf32> to vector<8x128xf32>
    %684 = arith.addf %680, %683 : vector<8x128xf32>
    %685 = arith.mulf %684, %684 : vector<8x128xf32>
    %686 = arith.mulf %684, %685 : vector<8x128xf32>
    %cst_261 = arith.constant 4.471500e-02 : f32
    %687 = vector.broadcast %cst_261 : f32 to vector<8x128xf32>
    %688 = arith.mulf %687, %686 : vector<8x128xf32>
    %689 = arith.addf %684, %688 : vector<8x128xf32>
    %cst_262 = arith.constant 0.797884583 : f32
    %690 = vector.broadcast %cst_262 : f32 to vector<8x128xf32>
    %691 = arith.mulf %690, %689 : vector<8x128xf32>
    %692 = math.tanh %691 : vector<8x128xf32>
    %cst_263 = arith.constant 1.000000e+00 : f32
    %693 = vector.broadcast %cst_263 : f32 to vector<8x128xf32>
    %694 = arith.addf %693, %692 : vector<8x128xf32>
    %cst_264 = arith.constant 5.000000e-01 : f32
    %695 = vector.broadcast %cst_264 : f32 to vector<8x128xf32>
    %696 = arith.mulf %695, %694 : vector<8x128xf32>
    %697 = arith.mulf %684, %696 : vector<8x128xf32>
    %698 = arith.truncf %697 : vector<8x128xf32> to vector<8x128xbf16>
    %c3_265 = arith.constant 3 : index
    %c0_266 = arith.constant 0 : index
    %c0_267 = arith.constant 0 : index
    %699 = vector.load %arg12[%c3_265, %c0_266, %c0_267] : memref<4x128x64xbf16, #tpu.memory_space<vmem>>, vector<1x128x64xbf16>
    %700 = vector.shape_cast %699 : vector<1x128x64xbf16> to vector<128x64xbf16>
    %cst_268 = arith.constant dense<0.000000e+00> : vector<8x64xf32>
    %701 = tpu.matmul %698, %700, %cst_268 {dimension_numbers = #tpu.dot_dimension_numbers<[1], [0], [0], [1], [0, 0, 1, 1], [], []>} : vector<8x128xbf16>, vector<128x64xbf16>, vector<8x64xf32> -> vector<8x64xf32>
    %702 = arith.addf %654, %701 : vector<8x64xf32>
    %c3_269 = arith.constant 3 : index
    %c0_270 = arith.constant 0 : index
    %c0_271 = arith.constant 0 : index
    %703 = vector.load %arg13[%c3_269, %c0_270, %c0_271] : memref<4x1x64xf32, #tpu.memory_space<vmem>>, vector<1x1x64xf32>
    %704 = vector.shape_cast %703 : vector<1x1x64xf32> to vector<1x64xf32>
    %705 = vector.broadcast %704 : vector<1x64xf32> to vector<8x64xf32>
    %706 = arith.addf %702, %705 : vector<8x64xf32>
    %c0_272 = arith.constant 0 : index
    %c0_273 = arith.constant 0 : index
    %707 = vector.load %arg3[%c0_272, %c0_273] : memref<8x8xf32, #tpu.memory_space<vmem>>, vector<8x8xf32>
    %cst_274 = arith.constant dense<0.000000e+00> : vector<8x64xf32>
    %708 = tpu.matmul %707, %706, %cst_274 {dimension_numbers = #tpu.dot_dimension_numbers<[1], [0], [0], [1], [0, 0, 1, 1], [], []>} : vector<8x8xf32>, vector<8x64xf32>, vector<8x64xf32> -> vector<8x64xf32>
    %709 = arith.truncf %708 : vector<8x64xf32> to vector<8x64xbf16>
    %c0_275 = arith.constant 0 : index
    %c0_276 = arith.constant 0 : index
    %710 = vector.load %arg14[%c0_275, %c0_276] : memref<64x128xbf16, #tpu.memory_space<vmem>>, vector<64x128xbf16>
    %cst_277 = arith.constant dense<0.000000e+00> : vector<8x128xf32>
    %711 = tpu.matmul %709, %710, %cst_277 {dimension_numbers = #tpu.dot_dimension_numbers<[1], [0], [0], [1], [0, 0, 1, 1], [], []>} : vector<8x64xbf16>, vector<64x128xbf16>, vector<8x128xf32> -> vector<8x128xf32>
    %c0_278 = arith.constant 0 : index
    %c0_279 = arith.constant 0 : index
    %712 = vector.load %arg15[%c0_278, %c0_279] : memref<1x128xf32, #tpu.memory_space<vmem>>, vector<1x128xf32>
    %713 = vector.broadcast %712 : vector<1x128xf32> to vector<8x128xf32>
    %714 = arith.addf %711, %713 : vector<8x128xf32>
    %715 = arith.mulf %714, %714 : vector<8x128xf32>
    %716 = arith.mulf %714, %715 : vector<8x128xf32>
    %cst_280 = arith.constant 4.471500e-02 : f32
    %717 = vector.broadcast %cst_280 : f32 to vector<8x128xf32>
    %718 = arith.mulf %717, %716 : vector<8x128xf32>
    %719 = arith.addf %714, %718 : vector<8x128xf32>
    %cst_281 = arith.constant 0.797884583 : f32
    %720 = vector.broadcast %cst_281 : f32 to vector<8x128xf32>
    %721 = arith.mulf %720, %719 : vector<8x128xf32>
    %722 = math.tanh %721 : vector<8x128xf32>
    %cst_282 = arith.constant 1.000000e+00 : f32
    %723 = vector.broadcast %cst_282 : f32 to vector<8x128xf32>
    %724 = arith.addf %723, %722 : vector<8x128xf32>
    %cst_283 = arith.constant 5.000000e-01 : f32
    %725 = vector.broadcast %cst_283 : f32 to vector<8x128xf32>
    %726 = arith.mulf %725, %724 : vector<8x128xf32>
    %727 = arith.mulf %714, %726 : vector<8x128xf32>
    %728 = arith.truncf %727 : vector<8x128xf32> to vector<8x128xbf16>
    %c0_284 = arith.constant 0 : index
    %c0_285 = arith.constant 0 : index
    %729 = vector.load %arg16[%c0_284, %c0_285] : memref<128x16xbf16, #tpu.memory_space<vmem>>, vector<128x16xbf16>
    %cst_286 = arith.constant dense<0.000000e+00> : vector<8x16xf32>
    %730 = tpu.matmul %728, %729, %cst_286 {dimension_numbers = #tpu.dot_dimension_numbers<[1], [0], [0], [1], [0, 0, 1, 1], [], []>} : vector<8x128xbf16>, vector<128x16xbf16>, vector<8x16xf32> -> vector<8x16xf32>
    %c0_287 = arith.constant 0 : index
    %c0_288 = arith.constant 0 : index
    %731 = vector.load %arg17[%c0_287, %c0_288] : memref<1x16xf32, #tpu.memory_space<vmem>>, vector<1x16xf32>
    %732 = vector.broadcast %731 : vector<1x16xf32> to vector<8x16xf32>
    %733 = arith.addf %730, %732 : vector<8x16xf32>
    %734 = vector.extract_strided_slice %733 {offsets = [0, 0], sizes = [1, 16], strides = [1, 1]} : vector<8x16xf32> to vector<1x16xf32>
    %c0_289 = arith.constant 0 : index
    %c0_290 = arith.constant 0 : index
    %c0_291 = arith.constant 0 : index
    %735 = vector.load %arg18[%c0_289, %c0_290, %c0_291] : memref<1x1x16xf32, #tpu.memory_space<vmem>>, vector<1x1x16xf32>
    %736 = vector.shape_cast %735 : vector<1x1x16xf32> to vector<1x16xf32>
    %737 = vector.shape_cast %734 : vector<1x16xf32> to vector<1x1x16xf32>
    tpu.vector_store %arg18[%c0_289, %c0_290, %c0_291], %737 {strides = array<i32>} : memref<1x1x16xf32, #tpu.memory_space<vmem>>, vector<1x1x16xf32>,
    return
  }
  func.func @transform_0(%arg0: i32) -> (i32, i32, i32) {
    %c0_i32 = arith.constant 0 : i32
    %c0_i32_0 = arith.constant 0 : i32
    %c0_i32_1 = arith.constant 0 : i32
    return %arg0, %c0_i32, %c0_i32_0 : i32, i32, i32
  }
  func.func @transform_1(%arg0: i32) -> (i32, i32) {
    %c0_i32 = arith.constant 0 : i32
    %c0_i32_0 = arith.constant 0 : i32
    %c0_i32_1 = arith.constant 0 : i32
    return %c0_i32, %c0_i32_0 : i32, i32
  }
  func.func @transform_2(%arg0: i32) -> (i32, i32) {
    %c0_i32 = arith.constant 0 : i32
    %c0_i32_0 = arith.constant 0 : i32
    %c0_i32_1 = arith.constant 0 : i32
    return %c0_i32, %c0_i32_0 : i32, i32
  }
  func.func @transform_3(%arg0: i32) -> (i32, i32, i32) {
    %c0_i32 = arith.constant 0 : i32
    %c0_i32_0 = arith.constant 0 : i32
    %c0_i32_1 = arith.constant 0 : i32
    %c0_i32_2 = arith.constant 0 : i32
    return %c0_i32, %c0_i32_0, %c0_i32_1 : i32, i32, i32
  }
  func.func @transform_4(%arg0: i32) -> (i32, i32, i32) {
    %c0_i32 = arith.constant 0 : i32
    %c0_i32_0 = arith.constant 0 : i32
    %c0_i32_1 = arith.constant 0 : i32
    %c0_i32_2 = arith.constant 0 : i32
    return %c0_i32, %c0_i32_0, %c0_i32_1 : i32, i32, i32
  }
  func.func @transform_5(%arg0: i32) -> (i32, i32, i32) {
    %c0_i32 = arith.constant 0 : i32
    %c0_i32_0 = arith.constant 0 : i32
    %c0_i32_1 = arith.constant 0 : i32
    %c0_i32_2 = arith.constant 0 : i32
    return %c0_i32, %c0_i32_0, %c0_i32_1 : i32, i32, i32
  }
  func.func @transform_6(%arg0: i32) -> (i32, i32, i32) {
    %c0_i32 = arith.constant 0 : i32
    %c0_i32_0 = arith.constant 0 : i32
    %c0_i32_1 = arith.constant 0 : i32
    %c0_i32_2 = arith.constant 0 : i32
    return %c0_i32, %c0_i32_0, %c0_i32_1 : i32, i32, i32
  }
  func.func @transform_7(%arg0: i32) -> (i32, i32, i32) {
    %c0_i32 = arith.constant 0 : i32
    %c0_i32_0 = arith.constant 0 : i32
    %c0_i32_1 = arith.constant 0 : i32
    %c0_i32_2 = arith.constant 0 : i32
    return %c0_i32, %c0_i32_0, %c0_i32_1 : i32, i32, i32
  }
  func.func @transform_8(%arg0: i32) -> (i32, i32, i32) {
    %c0_i32 = arith.constant 0 : i32
    %c0_i32_0 = arith.constant 0 : i32
    %c0_i32_1 = arith.constant 0 : i32
    %c0_i32_2 = arith.constant 0 : i32
    return %c0_i32, %c0_i32_0, %c0_i32_1 : i32, i32, i32
  }
  func.func @transform_9(%arg0: i32) -> (i32, i32, i32) {
    %c0_i32 = arith.constant 0 : i32
    %c0_i32_0 = arith.constant 0 : i32
    %c0_i32_1 = arith.constant 0 : i32
    %c0_i32_2 = arith.constant 0 : i32
    return %c0_i32, %c0_i32_0, %c0_i32_1 : i32, i32, i32
  }
  func.func @transform_10(%arg0: i32) -> (i32, i32, i32) {
    %c0_i32 = arith.constant 0 : i32
    %c0_i32_0 = arith.constant 0 : i32
    %c0_i32_1 = arith.constant 0 : i32
    %c0_i32_2 = arith.constant 0 : i32
    return %c0_i32, %c0_i32_0, %c0_i32_1 : i32, i32, i32
  }
  func.func @transform_11(%arg0: i32) -> (i32, i32, i32) {
    %c0_i32 = arith.constant 0 : i32
    %c0_i32_0 = arith.constant 0 : i32
    %c0_i32_1 = arith.constant 0 : i32
    %c0_i32_2 = arith.constant 0 : i32
    return %c0_i32, %c0_i32_0, %c0_i32_1 : i32, i32, i32
  }
  func.func @transform_12(%arg0: i32) -> (i32, i32, i32) {
    %c0_i32 = arith.constant 0 : i32
    %c0_i32_0 = arith.constant 0 : i32
    %c0_i32_1 = arith.constant 0 : i32
    %c0_i32_2 = arith.constant 0 : i32
    return %c0_i32, %c0_i32_0, %c0_i32_1 : i32, i32, i32
  }
  func.func @transform_13(%arg0: i32) -> (i32, i32) {
    %c0_i32 = arith.constant 0 : i32
    %c0_i32_0 = arith.constant 0 : i32
    %c0_i32_1 = arith.constant 0 : i32
    return %c0_i32, %c0_i32_0 : i32, i32
  }
  func.func @transform_14(%arg0: i32) -> (i32, i32) {
    %c0_i32 = arith.constant 0 : i32
    %c0_i32_0 = arith.constant 0 : i32
    %c0_i32_1 = arith.constant 0 : i32
    return %c0_i32, %c0_i32_0 : i32, i32
  }
  func.func @transform_15(%arg0: i32) -> (i32, i32) {
    %c0_i32 = arith.constant 0 : i32
    %c0_i32_0 = arith.constant 0 : i32
    %c0_i32_1 = arith.constant 0 : i32
    return %c0_i32, %c0_i32_0 : i32, i32
  }
  func.func @transform_16(%arg0: i32) -> (i32, i32) {
    %c0_i32 = arith.constant 0 : i32
    %c0_i32_0 = arith.constant 0 : i32
    %c0_i32_1 = arith.constant 0 : i32
    return %c0_i32, %c0_i32_0 : i32, i32
  }
  func.func @transform_17(%arg0: i32) -> (i32, i32, i32) {
    %c0_i32 = arith.constant 0 : i32
    %c0_i32_0 = arith.constant 0 : i32
    %c0_i32_1 = arith.constant 0 : i32
    return %arg0, %c0_i32, %c0_i32_0 : i32, i32, i32
  }
}

</mosaic_0001>

<llo_original>
// kernel: vit_forward.1
$region0: #{vit_forward.1}
  #allocation0 [shape = 'u32[]', space=smem, size = 0x4, offset = 0x4, fixed_abs, tag = 'smem constant byte address 0x4 - core index']
  #allocation1 [shape = 'u32[72,128]{1,0:T(1,128)}', space=vmem, size = 0x9000, scoped, tag = 'internal scratch']
  %s0 = inlined_call_operand.vmem [shape: f32[2,8,64], index: 0, kind: input, shape index: {}]
  %s1 = inlined_call_operand.vmem [shape: f32[8,8], index: 1, kind: input, shape index: {}]
  %s2 = inlined_call_operand.vmem [shape: f32[8,8], index: 2, kind: input, shape index: {}]
  %s3 = inlined_call_operand.vmem [shape: f32[4,1,64], index: 3, kind: input, shape index: {}]
  %s4 = inlined_call_operand.vmem [shape: f32[4,1,64], index: 4, kind: input, shape index: {}]
  %s5 = inlined_call_operand.vmem [shape: bf16[4,64,128], index: 5, kind: input, shape index: {}]
  %s6 = inlined_call_operand.vmem [shape: f32[4,1,128], index: 6, kind: input, shape index: {}]
  %s7 = inlined_call_operand.vmem [shape: bf16[4,64,64], index: 7, kind: input, shape index: {}]
  %s8 = inlined_call_operand.vmem [shape: f32[4,1,64], index: 8, kind: input, shape index: {}]
  %s9 = inlined_call_operand.vmem [shape: bf16[4,64,128], index: 9, kind: input, shape index: {}]
  %s10 = inlined_call_operand.vmem [shape: f32[4,1,128], index: 10, kind: input, shape index: {}]
  %s11 = inlined_call_operand.vmem [shape: bf16[4,128,64], index: 11, kind: input, shape index: {}]
  %s12 = inlined_call_operand.vmem [shape: f32[4,1,64], index: 12, kind: input, shape index: {}]
  %s13 = inlined_call_operand.vmem [shape: bf16[64,128], index: 13, kind: input, shape index: {}]
  %s14 = inlined_call_operand.vmem [shape: f32[1,128], index: 14, kind: input, shape index: {}]
  %s15 = inlined_call_operand.vmem [shape: bf16[128,16], index: 15, kind: input, shape index: {}]
  %s16 = inlined_call_operand.vmem [shape: f32[1,16], index: 16, kind: input, shape index: {}]
  %s17 = inlined_call_operand.hbm [shape: f32[2,1,16], index: 17, kind: output, shape index: {}]
  %s18 = sld [smem:[#allocation0]]
  $region101: #{vit_forward.1} parent=0
    _
  %s20 = ssub.s32 1, %s18
  %s21 = scalar_select 0, %s20, %s18
  $region1: #{vit_forward.1} parent=0
    #allocation2 [shape = 'u8[1024]{0}', space=vmem, size = 0x400, scoped, tag = 'output window, operand 0']
    #allocation3 [shape = 's32[2]{0}', space=sflag, size = 0x8, scoped, tag = 'scoped memory for vit_forward.1']
    %22 = vsyncpa [#allocation3], 0
    %s23 = scalar_lea.sflag [#allocation3], 1
    %24 = vsyncpa %s23, 0
    loop: start=0, step=1, limit=4
    $region2: #{vit_forward.1} parent=1 // loop_pre_header
      _
    $region3: #{vit_forward.1} parent=1 // loop_header
      %s26 = sphi 0, %s30
      %p27 = scmp.ge.s32.totalorder %s26, 4
      %s36 = sphi 0, %s38
      %s39 = sphi 0, %s36
      %s40 = sphi 0, %s39
      %s56 = sphi 0, %s40
      %s60 = sphi 0, %s60
      %s62 = sphi 0, %s60
      %s63 = sphi 0, %s62
      %s77 = sphi 0, %s63
      %s81 = sphi 0, %s81
      %s83 = sphi 0, %s81
      %s84 = sphi 0, %s83
      %s98 = sphi 0, %s84
      %s102 = sphi 0, %s102
      %s104 = sphi 0, %s102
      %s105 = sphi 0, %s104
      %s119 = sphi 0, %s105
      %s123 = sphi 0, %s123
      %s125 = sphi 0, %s123
      %s126 = sphi 0, %s125
      %s140 = sphi 0, %s126
      %s144 = sphi 0, %s144
      %s146 = sphi 0, %s144
      %s147 = sphi 0, %s146
      %s161 = sphi 0, %s147
      %s165 = sphi 0, %s165
      %s167 = sphi 0, %s165
      %s168 = sphi 0, %s167
      %s182 = sphi 0, %s168
      %s186 = sphi 0, %s186
      %s188 = sphi 0, %s186
      %s189 = sphi 0, %s188
      %s203 = sphi 0, %s189
      %s207 = sphi 0, %s207
      %s209 = sphi 0, %s207
      %s210 = sphi 0, %s209
      %s224 = sphi 0, %s210
      %s228 = sphi 0, %s228
      %s230 = sphi 0, %s228
      %s231 = sphi 0, %s230
      %s245 = sphi 0, %s231
      %s249 = sphi 0, %s249
      %s251 = sphi 0, %s249
      %s252 = sphi 0, %s251
      %s266 = sphi 0, %s252
      %s270 = sphi 0, %s270
      %s272 = sphi 0, %s270
      %s273 = sphi 0, %s272
      %s287 = sphi 0, %s273
      %s291 = sphi 0, %s291
      %s293 = sphi 0, %s291
      %s294 = sphi 0, %s293
      %s308 = sphi 0, %s294
      %s312 = sphi 0, %s312
      %s314 = sphi 0, %s312
      %s315 = sphi 0, %s314
      %s329 = sphi 0, %s315
      %s333 = sphi 0, %s333
      %s335 = sphi 0, %s333
      %s336 = sphi 0, %s335
      %s350 = sphi 0, %s336
      %s354 = sphi 0, %s354
      %s356 = sphi 0, %s354
      %s357 = sphi 0, %s356
      %s371 = sphi 0, %s357
      %s375 = sphi 0, %s375
      %s377 = sphi 0, %s375
      %s378 = sphi 0, %s377
      %s392 = sphi 0, %s378
      %s398 = sphi 0, %s400
      %s401 = sphi 0, %s398
      %s402 = sphi 0, %s401
      %s418 = sphi 0, %s402
    $region4: #{vit_forward.1} parent=1 // loop_header_branch
      %29 = sbr.rel (%p27) target = $region8
    $region5: #{vit_forward.1} parent=1 // loop_body
      %s31 = ssub.s32 %s26, 1
      %s32 = ssub.s32 %s26, 2
      %s33 = sadd.s32 %s26, 1
      %s34 = ssub.s32 %s26, %s33
      %p35 = scmp.eq.s32.totalorder %s34, 0
      %s37 = sadd.s32 %s36, 1
      %s38 = scalar_select %p35, %s36, %s37
      %p41 = pneg %p35
      %p42 = scmp.eq.s32.totalorder %s26, 1
      %p43 = por %p41, %p42
      %p44 = scmp.ne.s32.totalorder %s36, %s39
      %p45 = scmp.eq.s32.totalorder %s26, 0
      %p46 = por %p44, %p45
      %p47 = scmp.ne.s32.totalorder %s36, %s39
      %p48 = scmp.eq.s32.totalorder %s31, 1
      %p49 = por %p47, %p48
      %p50 = scmp.ne.s32.totalorder %s39, %s40
      %p51 = scmp.eq.s32.totalorder %s31, 0
      %p52 = por %p50, %p51
      %p53 = scmp.ne.s32.totalorder %s39, %s40
      %p54 = scmp.eq.s32.totalorder %s32, 1
      %p55 = por %p53, %p54
      %p57 = scmp.ne.s32.totalorder %s40, %s56
      %p58 = scmp.eq.s32.totalorder %s32, 0
      %p59 = por %p57, %p58
      %s61 = sadd.s32 %s60, 1
      %p64 = scmp.eq.s32.totalorder %s26, 1
      %p65 = scmp.ne.s32.totalorder %s60, %s62
      %p66 = scmp.eq.s32.totalorder %s26, 0
      %p67 = por %p65, %p66
      %p68 = scmp.ne.s32.totalorder %s60, %s62
      %p69 = scmp.eq.s32.totalorder %s31, 1
      %p70 = por %p68, %p69
      %p71 = scmp.ne.s32.totalorder %s62, %s63
      %p72 = scmp.eq.s32.totalorder %s31, 0
      %p73 = por %p71, %p72
      %p74 = scmp.ne.s32.totalorder %s62, %s63
      %p75 = scmp.eq.s32.totalorder %s32, 1
      %p76 = por %p74, %p75
      %p78 = scmp.ne.s32.totalorder %s63, %s77
      %p79 = scmp.eq.s32.totalorder %s32, 0
      %p80 = por %p78, %p79
      %s82 = sadd.s32 %s81, 1
      %p85 = scmp.eq.s32.totalorder %s26, 1
      %p86 = scmp.ne.s32.totalorder %s81, %s83
      %p87 = scmp.eq.s32.totalorder %s26, 0
      %p88 = por %p86, %p87
      %p89 = scmp.ne.s32.totalorder %s81, %s83
      %p90 = scmp.eq.s32.totalorder %s31, 1
      %p91 = por %p89, %p90
      %p92 = scmp.ne.s32.totalorder %s83, %s84
      %p93 = scmp.eq.s32.totalorder %s31, 0
      %p94 = por %p92, %p93
      %p95 = scmp.ne.s32.totalorder %s83, %s84
      %p96 = scmp.eq.s32.totalorder %s32, 1
      %p97 = por %p95, %p96
      %p99 = scmp.ne.s32.totalorder %s84, %s98
      %p100 = scmp.eq.s32.totalorder %s32, 0
      %p101 = por %p99, %p100
      %s103 = sadd.s32 %s102, 1
      %p106 = scmp.eq.s32.totalorder %s26, 1
      %p107 = scmp.ne.s32.totalorder %s102, %s104
      %p108 = scmp.eq.s32.totalorder %s26, 0
      %p109 = por %p107, %p108
      %p110 = scmp.ne.s32.totalorder %s102, %s104
      %p111 = scmp.eq.s32.totalorder %s31, 1
      %p112 = por %p110, %p111
      %p113 = scmp.ne.s32.totalorder %s104, %s105
      %p114 = scmp.eq.s32.totalorder %s31, 0
      %p115 = por %p113, %p114
      %p116 = scmp.ne.s32.totalorder %s104, %s105
      %p117 = scmp.eq.s32.totalorder %s32, 1
      %p118 = por %p116, %p117
      %p120 = scmp.ne.s32.totalorder %s105, %s119
      %p121 = scmp.eq.s32.totalorder %s32, 0
      %p122 = por %p120, %p121
      %s124 = sadd.s32 %s123, 1
      %p127 = scmp.eq.s32.totalorder %s26, 1
      %p128 = scmp.ne.s32.totalorder %s123, %s125
      %p129 = scmp.eq.s32.totalorder %s26, 0
      %p130 = por %p128, %p129
      %p131 = scmp.ne.s32.totalorder %s123, %s125
      %p132 = scmp.eq.s32.totalorder %s31, 1
      %p133 = por %p131, %p132
      %p134 = scmp.ne.s32.totalorder %s125, %s126
      %p135 = scmp.eq.s32.totalorder %s31, 0
      %p136 = por %p134, %p135
      %p137 = scmp.ne.s32.totalorder %s125, %s126
      %p138 = scmp.eq.s32.totalorder %s32, 1
      %p139 = por %p137, %p138
      %p141 = scmp.ne.s32.totalorder %s126, %s140
      %p142 = scmp.eq.s32.totalorder %s32, 0
      %p143 = por %p141, %p142
      %s145 = sadd.s32 %s144, 1
      %p148 = scmp.eq.s32.totalorder %s26, 1
      %p149 = scmp.ne.s32.totalorder %s144, %s146
      %p150 = scmp.eq.s32.totalorder %s26, 0
      %p151 = por %p149, %p150
      %p152 = scmp.ne.s32.totalorder %s144, %s146
      %p153 = scmp.eq.s32.totalorder %s31, 1
      %p154 = por %p152, %p153
      %p155 = scmp.ne.s32.totalorder %s146, %s147
      %p156 = scmp.eq.s32.totalorder %s31, 0
      %p157 = por %p155, %p156
      %p158 = scmp.ne.s32.totalorder %s146, %s147
      %p159 = scmp.eq.s32.totalorder %s32, 1
      %p160 = por %p158, %p159
      %p162 = scmp.ne.s32.totalorder %s147, %s161
      %p163 = scmp.eq.s32.totalorder %s32, 0
      %p164 = por %p162, %p163
      %s166 = sadd.s32 %s165, 1
      %p169 = scmp.eq.s32.totalorder %s26, 1
      %p170 = scmp.ne.s32.totalorder %s165, %s167
      %p171 = scmp.eq.s32.totalorder %s26, 0
      %p172 = por %p170, %p171
      %p173 = scmp.ne.s32.totalorder %s165, %s167
      %p174 = scmp.eq.s32.totalorder %s31, 1
      %p175 = por %p173, %p174
      %p176 = scmp.ne.s32.totalorder %s167, %s168
      %p177 = scmp.eq.s32.totalorder %s31, 0
      %p178 = por %p176, %p177
      %p179 = scmp.ne.s32.totalorder %s167, %s168
      %p180 = scmp.eq.s32.totalorder %s32, 1
      %p181 = por %p179, %p180
      %p183 = scmp.ne.s32.totalorder %s168, %s182
      %p184 = scmp.eq.s32.totalorder %s32, 0
      %p185 = por %p183, %p184
      %s187 = sadd.s32 %s186, 1
      %p190 = scmp.eq.s32.totalorder %s26, 1
      %p191 = scmp.ne.s32.totalorder %s186, %s188
      %p192 = scmp.eq.s32.totalorder %s26, 0
      %p193 = por %p191, %p192
      %p194 = scmp.ne.s32.totalorder %s186, %s188
      %p195 = scmp.eq.s32.totalorder %s31, 1
      %p196 = por %p194, %p195
      %p197 = scmp.ne.s32.totalorder %s188, %s189
      %p198 = scmp.eq.s32.totalorder %s31, 0
      %p199 = por %p197, %p198
      %p200 = scmp.ne.s32.totalorder %s188, %s189
      %p201 = scmp.eq.s32.totalorder %s32, 1
      %p202 = por %p200, %p201
      %p204 = scmp.ne.s32.totalorder %s189, %s203
      %p205 = scmp.eq.s32.totalorder %s32, 0
      %p206 = por %p204, %p205
      %s208 = sadd.s32 %s207, 1
      %p211 = scmp.eq.s32.totalorder %s26, 1
      %p212 = scmp.ne.s32.totalorder %s207, %s209
      %p213 = scmp.eq.s32.totalorder %s26, 0
      %p214 = por %p212, %p213
      %p215 = scmp.ne.s32.totalorder %s207, %s209
      %p216 = scmp.eq.s32.totalorder %s31, 1
      %p217 = por %p215, %p216
      %p218 = scmp.ne.s32.totalorder %s209, %s210
      %p219 = scmp.eq.s32.totalorder %s31, 0
      %p220 = por %p218, %p219
      %p221 = scmp.ne.s32.totalorder %s209, %s210
      %p222 = scmp.eq.s32.totalorder %s32, 1
      %p223 = por %p221, %p222
      %p225 = scmp.ne.s32.totalorder %s210, %s224
      %p226 = scmp.eq.s32.totalorder %s32, 0
      %p227 = por %p225, %p226
      %s229 = sadd.s32 %s228, 1
      %p232 = scmp.eq.s32.totalorder %s26, 1
      %p233 = scmp.ne.s32.totalorder %s228, %s230
      %p234 = scmp.eq.s32.totalorder %s26, 0
      %p235 = por %p233, %p234
      %p236 = scmp.ne.s32.totalorder %s228, %s230
      %p237 = scmp.eq.s32.totalorder %s31, 1
      %p238 = por %p236, %p237
      %p239 = scmp.ne.s32.totalorder %s230, %s231
      %p240 = scmp.eq.s32.totalorder %s31, 0
      %p241 = por %p239, %p240
      %p242 = scmp.ne.s32.totalorder %s230, %s231
      %p243 = scmp.eq.s32.totalorder %s32, 1
      %p244 = por %p242, %p243
      %p246 = scmp.ne.s32.totalorder %s231, %s245
      %p247 = scmp.eq.s32.totalorder %s32, 0
      %p248 = por %p246, %p247
      %s250 = sadd.s32 %s249, 1
      %p253 = scmp.eq.s32.totalorder %s26, 1
      %p254 = scmp.ne.s32.totalorder %s249, %s251
      %p255 = scmp.eq.s32.totalorder %s26, 0
      %p256 = por %p254, %p255
      %p257 = scmp.ne.s32.totalorder %s249, %s251
      %p258 = scmp.eq.s32.totalorder %s31, 1
      %p259 = por %p257, %p258
      %p260 = scmp.ne.s32.totalorder %s251, %s252
      %p261 = scmp.eq.s32.totalorder %s31, 0
      %p262 = por %p260, %p261
      %p263 = scmp.ne.s32.totalorder %s251, %s252
      %p264 = scmp.eq.s32.totalorder %s32, 1
      %p265 = por %p263, %p264
      %p267 = scmp.ne.s32.totalorder %s252, %s266
      %p268 = scmp.eq.s32.totalorder %s32, 0
      %p269 = por %p267, %p268
      %s271 = sadd.s32 %s270, 1
      %p274 = scmp.eq.s32.totalorder %s26, 1
      %p275 = scmp.ne.s32.totalorder %s270, %s272
      %p276 = scmp.eq.s32.totalorder %s26, 0
      %p277 = por %p275, %p276
      %p278 = scmp.ne.s32.totalorder %s270, %s272
      %p279 = scmp.eq.s32.totalorder %s31, 1
      %p280 = por %p278, %p279
      %p281 = scmp.ne.s32.totalorder %s272, %s273
      %p282 = scmp.eq.s32.totalorder %s31, 0
      %p283 = por %p281, %p282
      %p284 = scmp.ne.s32.totalorder %s272, %s273
      %p285 = scmp.eq.s32.totalorder %s32, 1
      %p286 = por %p284, %p285
      %p288 = scmp.ne.s32.totalorder %s273, %s287
      %p289 = scmp.eq.s32.totalorder %s32, 0
      %p290 = por %p288, %p289
      %s292 = sadd.s32 %s291, 1
      %p295 = scmp.eq.s32.totalorder %s26, 1
      %p296 = scmp.ne.s32.totalorder %s291, %s293
      %p297 = scmp.eq.s32.totalorder %s26, 0
      %p298 = por %p296, %p297
      %p299 = scmp.ne.s32.totalorder %s291, %s293
      %p300 = scmp.eq.s32.totalorder %s31, 1
      %p301 = por %p299, %p300
      %p302 = scmp.ne.s32.totalorder %s293, %s294
      %p303 = scmp.eq.s32.totalorder %s31, 0
      %p304 = por %p302, %p303
      %p305 = scmp.ne.s32.totalorder %s293, %s294
      %p306 = scmp.eq.s32.totalorder %s32, 1
      %p307 = por %p305, %p306
      %p309 = scmp.ne.s32.totalorder %s294, %s308
      %p310 = scmp.eq.s32.totalorder %s32, 0
      %p311 = por %p309, %p310
      %s313 = sadd.s32 %s312, 1
      %p316 = scmp.eq.s32.totalorder %s26, 1
      %p317 = scmp.ne.s32.totalorder %s312, %s314
      %p318 = scmp.eq.s32.totalorder %s26, 0
      %p319 = por %p317, %p318
      %p320 = scmp.ne.s32.totalorder %s312, %s314
      %p321 = scmp.eq.s32.totalorder %s31, 1
      %p322 = por %p320, %p321
      %p323 = scmp.ne.s32.totalorder %s314, %s315
      %p324 = scmp.eq.s32.totalorder %s31, 0
      %p325 = por %p323, %p324
      %p326 = scmp.ne.s32.totalorder %s314, %s315
      %p327 = scmp.eq.s32.totalorder %s32, 1
      %p328 = por %p326, %p327
      %p330 = scmp.ne.s32.totalorder %s315, %s329
      %p331 = scmp.eq.s32.totalorder %s32, 0
      %p332 = por %p330, %p331
      %s334 = sadd.s32 %s333, 1
      %p337 = scmp.eq.s32.totalorder %s26, 1
      %p338 = scmp.ne.s32.totalorder %s333, %s335
      %p339 = scmp.eq.s32.totalorder %s26, 0
      %p340 = por %p338, %p339
      %p341 = scmp.ne.s32.totalorder %s333, %s335
      %p342 = scmp.eq.s32.totalorder %s31, 1
      %p343 = por %p341, %p342
      %p344 = scmp.ne.s32.totalorder %s335, %s336
      %p345 = scmp.eq.s32.totalorder %s31, 0
      %p346 = por %p344, %p345
      %p347 = scmp.ne.s32.totalorder %s335, %s336
      %p348 = scmp.eq.s32.totalorder %s32, 1
      %p349 = por %p347, %p348
      %p351 = scmp.ne.s32.totalorder %s336, %s350
      %p352 = scmp.eq.s32.totalorder %s32, 0
      %p353 = por %p351, %p352
      %s355 = sadd.s32 %s354, 1
      %p358 = scmp.eq.s32.totalorder %s26, 1
      %p359 = scmp.ne.s32.totalorder %s354, %s356
      %p360 = scmp.eq.s32.totalorder %s26, 0
      %p361 = por %p359, %p360
      %p362 = scmp.ne.s32.totalorder %s354, %s356
      %p363 = scmp.eq.s32.totalorder %s31, 1
      %p364 = por %p362, %p363
      %p365 = scmp.ne.s32.totalorder %s356, %s357
      %p366 = scmp.eq.s32.totalorder %s31, 0
      %p367 = por %p365, %p366
      %p368 = scmp.ne.s32.totalorder %s356, %s357
      %p369 = scmp.eq.s32.totalorder %s32, 1
      %p370 = por %p368, %p369
      %p372 = scmp.ne.s32.totalorder %s357, %s371
      %p373 = scmp.eq.s32.totalorder %s32, 0
      %p374 = por %p372, %p373
      %s376 = sadd.s32 %s375, 1
      %p379 = scmp.eq.s32.totalorder %s26, 1
      %p380 = scmp.ne.s32.totalorder %s375, %s377
      %p381 = scmp.eq.s32.totalorder %s26, 0
      %p382 = por %p380, %p381
      %p383 = scmp.ne.s32.totalorder %s375, %s377
      %p384 = scmp.eq.s32.totalorder %s31, 1
      %p385 = por %p383, %p384
      %p386 = scmp.ne.s32.totalorder %s377, %s378
      %p387 = scmp.eq.s32.totalorder %s31, 0
      %p388 = por %p386, %p387
      %p389 = scmp.ne.s32.totalorder %s377, %s378
      %p390 = scmp.eq.s32.totalorder %s32, 1
      %p391 = por %p389, %p390
      %p393 = scmp.ne.s32.totalorder %s378, %s392
      %p394 = scmp.eq.s32.totalorder %s32, 0
      %p395 = por %p393, %p394
      %s396 = ssub.s32 %s26, %s33
      %p397 = scmp.eq.s32.totalorder %s396, 0
      %s399 = sadd.s32 %s398, 1
      %s400 = scalar_select %p397, %s398, %s399
      %p403 = pneg %p397
      %p404 = scmp.eq.s32.totalorder %s26, 1
      %p405 = por %p403, %p404
      %p406 = scmp.ne.s32.totalorder %s398, %s401
      %p407 = scmp.eq.s32.totalorder %s26, 0
      %p408 = por %p406, %p407
      %p409 = scmp.ne.s32.totalorder %s398, %s401
      %p410 = scmp.eq.s32.totalorder %s31, 1
      %p411 = por %p409, %p410
      %p412 = scmp.ne.s32.totalorder %s401, %s402
      %p413 = scmp.eq.s32.totalorder %s31, 0
      %p414 = por %p412, %p413
      %p415 = scmp.ne.s32.totalorder %s401, %s402
      %p416 = scmp.eq.s32.totalorder %s32, 1
      %p417 = por %p415, %p416
      %p419 = scmp.ne.s32.totalorder %s402, %s418
      %p420 = scmp.eq.s32.totalorder %s32, 0
      %p421 = por %p419, %p420
      %p422 = scmp.le.s32.totalorder 1, %s26
      %p423 = scmp.lt.s32.totalorder %s26, 3
      %p424 = pnand %p422, %p423
      %p425 = pneg %p424
      // Predicated region
      $region9: #{vit_forward.1} parent=5 // pred_check
        _
      $region10: #{vit_forward.1} parent=5 // pred_check_branch
        %427 = sbr.rel (%p424) target = $region12
      $region11: #{vit_forward.1} parent=5 // pred_region
        %s428 = ssub.s32 %s26, 1
        // Predicated region
        $region13: #{vit_forward.1} parent=11 // pred_check
          %p429 = pneg %p73
        $region14: #{vit_forward.1} parent=11 // pred_check_branch
          %431 = sbr.rel (%p429) target = $region16
        $region15: #{vit_forward.1} parent=11 // pred_region
          _
        $region16: #{vit_forward.1} parent=11 // pred_fallthru
          _
        // Predicated region
        $region17: #{vit_forward.1} parent=11 // pred_check
          %p432 = pneg %p94
        $region18: #{vit_forward.1} parent=11 // pred_check_branch
          %434 = sbr.rel (%p432) target = $region20
        $region19: #{vit_forward.1} parent=11 // pred_region
          _
        $region20: #{vit_forward.1} parent=11 // pred_fallthru
          _
        // Predicated region
        $region21: #{vit_forward.1} parent=11 // pred_check
          %p435 = pneg %p115
        $region22: #{vit_forward.1} parent=11 // pred_check_branch
          %437 = sbr.rel (%p435) target = $region24
        $region23: #{vit_forward.1} parent=11 // pred_region
          _
        $region24: #{vit_forward.1} parent=11 // pred_fallthru
          _
        // Predicated region
        $region25: #{vit_forward.1} parent=11 // pred_check
          %p438 = pneg %p136
        $region26: #{vit_forward.1} parent=11 // pred_check_branch
          %440 = sbr.rel (%p438) target = $region28
        $region27: #{vit_forward.1} parent=11 // pred_region
          _
        $region28: #{vit_forward.1} parent=11 // pred_fallthru
          _
        // Predicated region
        $region29: #{vit_forward.1} parent=11 // pred_check
          %p441 = pneg %p157
        $region30: #{vit_forward.1} parent=11 // pred_check_branch
          %443 = sbr.rel (%p441) target = $region32
        $region31: #{vit_forward.1} parent=11 // pred_region
          _
        $region32: #{vit_forward.1} parent=11 // pred_fallthru
          _
        // Predicated region
        $region33: #{vit_forward.1} parent=11 // pred_check
          %p444 = pneg %p178
        $region34: #{vit_forward.1} parent=11 // pred_check_branch
          %446 = sbr.rel (%p444) target = $region36
        $region35: #{vit_forward.1} parent=11 // pred_region
          _
        $region36: #{vit_forward.1} parent=11 // pred_fallthru
          _
        // Predicated region
        $region37: #{vit_forward.1} parent=11 // pred_check
          %p447 = pneg %p199
        $region38: #{vit_forward.1} parent=11 // pred_check_branch
          %449 = sbr.rel (%p447) target = $region40
        $region39: #{vit_forward.1} parent=11 // pred_region
          _
        $region40: #{vit_forward.1} parent=11 // pred_fallthru
          _
        // Predicated region
        $region41: #{vit_forward.1} parent=11 // pred_check
          %p450 = pneg %p220
        $region42: #{vit_forward.1} parent=11 // pred_check_branch
          %452 = sbr.rel (%p450) target = $region44
        $region43: #{vit_forward.1} parent=11 // pred_region
          _
        $region44: #{vit_forward.1} parent=11 // pred_fallthru
          _
        // Predicated region
        $region45: #{vit_forward.1} parent=11 // pred_check
          %p453 = pneg %p241
        $region46: #{vit_forward.1} parent=11 // pred_check_branch
          %455 = sbr.rel (%p453) target = $region48
        $region47: #{vit_forward.1} parent=11 // pred_region
          _
        $region48: #{vit_forward.1} parent=11 // pred_fallthru
          _
        // Predicated region
        $region49: #{vit_forward.1} parent=11 // pred_check
          %p456 = pneg %p262
        $region50: #{vit_forward.1} parent=11 // pred_check_branch
          %458 = sbr.rel (%p456) target = $region52
        $region51: #{vit_forward.1} parent=11 // pred_region
          _
        $region52: #{vit_forward.1} parent=11 // pred_fallthru
          _
        // Predicated region
        $region53: #{vit_forward.1} parent=11 // pred_check
          %p459 = pneg %p283
        $region54: #{vit_forward.1} parent=11 // pred_check_branch
          %461 = sbr.rel (%p459) target = $region56
        $region55: #{vit_forward.1} parent=11 // pred_region
          _
        $region56: #{vit_forward.1} parent=11 // pred_fallthru
          _
        // Predicated region
        $region57: #{vit_forward.1} parent=11 // pred_check
          %p462 = pneg %p304
        $region58: #{vit_forward.1} parent=11 // pred_check_branch
          %464 = sbr.rel (%p462) target = $region60
        $region59: #{vit_forward.1} parent=11 // pred_region
          _
        $region60: #{vit_forward.1} parent=11 // pred_fallthru
          _
        // Predicated region
        $region61: #{vit_forward.1} parent=11 // pred_check
          %p465 = pneg %p325
        $region62: #{vit_forward.1} parent=11 // pred_check_branch
          %467 = sbr.rel (%p465) target = $region64
        $region63: #{vit_forward.1} parent=11 // pred_region
          _
        $region64: #{vit_forward.1} parent=11 // pred_fallthru
          _
        // Predicated region
        $region65: #{vit_forward.1} parent=11 // pred_check
          %p468 = pneg %p346
        $region66: #{vit_forward.1} parent=11 // pred_check_branch
          %470 = sbr.rel (%p468) target = $region68
        $region67: #{vit_forward.1} parent=11 // pred_region
          _
        $region68: #{vit_forward.1} parent=11 // pred_fallthru
          _
        // Predicated region
        $region69: #{vit_forward.1} parent=11 // pred_check
          %p471 = pneg %p367
        $region70: #{vit_forward.1} parent=11 // pred_check_branch
          %473 = sbr.rel (%p471) target = $region72
        $region71: #{vit_forward.1} parent=11 // pred_region
          _
        $region72: #{vit_forward.1} parent=11 // pred_fallthru
          _
        // Predicated region
        $region73: #{vit_forward.1} parent=11 // pred_check
          %p474 = pneg %p388
        $region74: #{vit_forward.1} parent=11 // pred_check_branch
          %476 = sbr.rel (%p474) target = $region76
        $region75: #{vit_forward.1} parent=11 // pred_region
          _
        $region76: #{vit_forward.1} parent=11 // pred_fallthru
          _
      $region12: #{vit_forward.1} parent=5 // pred_fallthru
        _
      %p477 = scmp.lt.s32.totalorder %s26, 2
      // Predicated region
      $region77: #{vit_forward.1} parent=5 // pred_check
        %p478 = pneg %p477
      $region78: #{vit_forward.1} parent=5 // pred_check_branch
        %480 = sbr.rel (%p478) target = $region80
      $region79: #{vit_forward.1} parent=5 // pred_region
        // Predicated region
        $region81: #{vit_forward.1} parent=79 // pred_check
          %p481 = pneg %p46
        $region82: #{vit_forward.1} parent=79 // pred_check_branch
          %483 = sbr.rel (%p481) target = $region84
        $region83: #{vit_forward.1} parent=79 // pred_region
          %p484 = scmp.lt.s32.totalorder %s26, 1
          %s485 = scalar_select %p484, %s26, 1
          %s486 = smul.addr %s485, 8
          %s487 = scalar_lea.vmem %s0, %s486
        $region84: #{vit_forward.1} parent=79 // pred_fallthru
          _
      $region80: #{vit_forward.1} parent=5 // pred_fallthru
        _
      %p488 = scmp.le.s32.totalorder 1, %s26
      %p489 = scmp.lt.s32.totalorder %s26, 3
      %p490 = pnand %p488, %p489
      %p491 = pneg %p490
      // Predicated region
      $region85: #{vit_forward.1} parent=5 // pred_check
        _
      $region86: #{vit_forward.1} parent=5 // pred_check_branch
        %493 = sbr.rel (%p490) target = $region88
      $region87: #{vit_forward.1} parent=5 // pred_region
        %s494 = ssub.s32 %s26, 1
        %p495 = scmp.lt.s32.totalorder %s31, 1
        %s496 = scalar_select %p495, %s31, 1
        %s497 = smul.addr %s496, 8
        %s498 = scalar_lea.vmem %s0, %s497
        %p499 = pneg %p52
        %p500 = pneg %p49
        %p501 = pneg %p73
        %p502 = pneg %p70
        %p503 = pneg %p94
        %p504 = pneg %p91
        %p505 = pneg %p115
        %p506 = pneg %p112
        %p507 = pneg %p136
        %p508 = pneg %p133
        %p509 = pneg %p157
        %p510 = pneg %p154
        %p511 = pneg %p178
        %p512 = pneg %p175
        %p513 = pneg %p199
        %p514 = pneg %p196
        %p515 = pneg %p220
        %p516 = pneg %p217
        %p517 = pneg %p241
        %p518 = pneg %p238
        %p519 = pneg %p262
        %p520 = pneg %p259
        %p521 = pneg %p283
        %p522 = pneg %p280
        %p523 = pneg %p304
        %p524 = pneg %p301
        %p525 = pneg %p325
        %p526 = pneg %p322
        %p527 = pneg %p346
        %p528 = pneg %p343
        %p529 = pneg %p367
        %p530 = pneg %p364
        %p531 = pneg %p388
        %p532 = pneg %p385
        %p533 = pneg %p414
        %p534 = pneg %p411
        %s535 = sand.u32 %s401, 1
        %s536 = scalar_lea.sflag [#allocation3], %s535
        %s537 = sand.u32 %s401, 1
        %s538 = scalar_lea.vmem [#allocation2], %s537
        %p539 = scmp.lt.s32.totalorder %s31, 1
        %s540 = scalar_select %p539, %s31, 1
        %s541 = smul.addr %s540, 8
        %s542 = scalar_lea.vmem %s0, %s541
        %v544 = vld [vmem:[%s542] sm:$0xff]
        %v545 = vld [vmem:[%s1] sm:$0xff]
        %v546 = vld [vmem:[%s3] sm:$0x1]
        %v547 = vld [vmem:[%s4] sm:$0x1]
        %vm548 = vcmask 523264
        %v549 = vsel %vm548, %v544, 0.0
        %550 = vadd.xlane.f32.xlu0 %v549
        %v551 = vpop.xlane.xlu0 %550
        %v552 = vrcp.pop 64.0
        %v553 = vmul.f32 64.0, %v552
        %v554 = vsub.f32 1.0, %v553
        %v555 = vmul.f32 %v552, %v554
        %v556 = vadd.f32 %v552, %v555
        %vm557 = vweird.f32 %v552
        %v558 = vsel %vm557, %v552, %v556
        %v559 = vmul.f32 %v551, %v558
        %v560 = vsub.f32 %v544, %v559
        %v561 = vmul.f32 %v560, %v560
        %v562 = vsel %vm548, %v561, 0.0
        %563 = vadd.xlane.f32.xlu0 %v562
        %v564 = vpop.xlane.xlu0 %563
        %v565 = vmul.f32 %v564, %v558
        %v566 = vadd.f32 %v565, 1e-05
        %v567 = vrsqrt.pop %v566
        %v568 = vmul.f32 %v567, %v566
        %v569 = vmul.f32 %v568, %v567
        %v570 = vmul.f32 0.5, %v569
        %v571 = vsub.f32 1.5, %v570
        %v572 = vmul.f32 %v567, %v571
        %vm573 = vweird.f32 %v566
        %vm574 = vweird.f32 %v567
        %vm575 = vmor %vm573, %vm574
        %v576 = vsel %vm575, %v567, %v572
        %v577 = vmul.f32 %v560, %v576
        %v579 = vperm.slane %v546, 0
        %v581 = vmul.f32 %v577, %v579
        %v583 = vperm.slane %v547, 0
        %v585 = vadd.f32 %v581, %v583
        %v586 = vpack.c.bf16 %v585, %v585
        %v587 = vld [vmem:[%s5] sm:$0xf]
        %v588 = vld [vmem:[%s5 + $0x4] sm:$0xf]
        %v589 = vld [vmem:[%s5 + $0x8] sm:$0xf]
        %v590 = vld [vmem:[%s5 + $0xc] sm:$0xf]
        %v591 = vld [vmem:[%s5 + $0x10] sm:$0xf]
        %v592 = vld [vmem:[%s5 + $0x14] sm:$0xf]
        %v593 = vld [vmem:[%s5 + $0x18] sm:$0xf]
        %v594 = vld [vmem:[%s5 + $0x1c] sm:$0xf]
        %v595 = vld [vmem:[%s6] sm:$0x1]
        %v597 = vperm.slane %v595, 0
        %v607 = vunpack.c.l.b16 %v587
        %v608 = vunpack.c.l.b16 %v588
        %v609 = vunpack.c.l.b16 %v589
        %v610 = vunpack.c.l.b16 %v590
        %v611 = vunpack.c.l.b16 %v591
        %v612 = vunpack.c.l.b16 %v592
        %v613 = vunpack.c.l.b16 %v593
        %v614 = vunpack.c.l.b16 %v594
        %v615 = vpack.c.b16 %v608, %v607
        %v616 = vpack.c.b16 %v610, %v609
        %v617 = vpack.c.b16 %v612, %v611
        %v618 = vpack.c.b16 %v614, %v613
        %v624 = vsel %vm548, %v586, 0
        %626 = vmatpush.bf16.msra.mxu0 0
        %627 = vmatpush.bf16.msra.mxu0 0
        %628 = vmatpush.bf16.msra.mxu0 0
        %629 = vmatpush.bf16.msra.mxu0 0
        %630 = vmatpush.bf16.msra.mxu0 %v618
        %631 = vmatpush.bf16.msra.mxu0 %v617
        %632 = vmatpush.bf16.msra.mxu0 %v616
        %633 = vmatpush.bf16.msra.mxu0 %v615
        %634 = vmatmul.bf16.gmra.mxu0 %v624
        %v635 = vpop.f32.mrf.mxu0
        %v636 = vadd.f32 %v597, %v635
        %v637 = vpop.f32.mrf.mxu0
        %638 = vdwg.mxu0
        %v639 = vpack.c.bf16 %v636, %v636
        %641 = vrot.lane.b32.xlu0 %v639, 64
        %v642 = vpop.permute.xlu0 %641
        %vm643 = vcmask 130048
        %v645 = vsel %vm643, %v639, 0
        %v648 = vsel %vm643, %v642, 0
        %650 = vmatpush.bf16.xpose.msra.mxu0 0
        %651 = vmatpush.bf16.xpose.msra.mxu0 0
        %652 = vmatpush.bf16.xpose.msra.mxu0 0
        %653 = vmatpush.bf16.xpose.msra.mxu0 0
        %654 = vmatpush.bf16.xpose.msra.mxu0 0
        %655 = vmatpush.bf16.xpose.msra.mxu0 0
        %656 = vmatpush.bf16.xpose.msra.mxu0 0
        %657 = vmatpush.bf16.xpose.msra.mxu0 %v648
        %658 = vmatmul.bf16.gmra.mxu0 %v645
        %v659 = vpop.f32.mrf.mxu0
        %v660 = vadd.f32 0.0, %v659
        %v661 = vpop.f32.mrf.mxu0
        %662 = vdwg.mxu0
        %v663 = vmul.f32 %v660, 0.25
        %v664 = vadd.f32 %v663, %v545
        %vm665 = vcmask 64512
        %v666 = vsel %vm665, %v664, -inf
        %667 = vmax.xlane.f32.xlu0 %v666
        %v668 = vpop.xlane.xlu0 %667
        %v669 = vsub.f32 %v664, %v668
        %v670 = vmul.f32 %v669, 1.442695
        %v671 = vpow.pop %v670
        %v672 = vsel %vm665, %v671, 0.0
        %673 = vadd.xlane.f32.xlu0 %v672
        %v674 = vpop.xlane.xlu0 %673
        %v675 = vrcp.pop %v674
        %v676 = vmul.f32 %v671, %v675
        %v677 = vpack.c.bf16 %v676, %v676
        %v679 = vsel %vm665, %v677, 0
        %vm681 = vcmask 1043456
        %v682 = vsel %vm681, %v642, 0
        %684 = vmatpush.bf16.msra.mxu0 0
        %685 = vmatpush.bf16.msra.mxu0 0
        %686 = vmatpush.bf16.msra.mxu0 0
        %687 = vmatpush.bf16.msra.mxu0 0
        %688 = vmatpush.bf16.msra.mxu0 0
        %689 = vmatpush.bf16.msra.mxu0 0
        %690 = vmatpush.bf16.msra.mxu0 0
        %691 = vmatpush.bf16.msra.mxu0 %v682
        %692 = vmatmul.bf16.gmra.mxu0 %v679
        %v693 = vpop.f32.mrf.mxu0
        %v694 = vadd.f32 0.0, %v693
        %v695 = vpop.f32.mrf.mxu0
        %696 = vdwg.mxu0
        %697 = vrot.lane.b32.xlu0 %v639, 112
        %v698 = vpop.permute.xlu0 %697
        %699 = vrot.lane.b32.xlu0 %v639, 48
        %v700 = vpop.permute.xlu0 %699
        %v702 = vsel %vm643, %v698, 0
        %v705 = vsel %vm643, %v700, 0
        %707 = vmatpush.bf16.xpose.msra.mxu0 0
        %708 = vmatpush.bf16.xpose.msra.mxu0 0
        %709 = vmatpush.bf16.xpose.msra.mxu0 0
        %710 = vmatpush.bf16.xpose.msra.mxu0 0
        %711 = vmatpush.bf16.xpose.msra.mxu0 0
        %712 = vmatpush.bf16.xpose.msra.mxu0 0
        %713 = vmatpush.bf16.xpose.msra.mxu0 0
        %714 = vmatpush.bf16.xpose.msra.mxu0 %v705
        %715 = vmatmul.bf16.gmra.mxu0 %v702
        %v716 = vpop.f32.mrf.mxu0
        %v717 = vadd.f32 0.0, %v716
        %v718 = vpop.f32.mrf.mxu0
        %719 = vdwg.mxu0
        %v720 = vmul.f32 %v717, 0.25
        %v721 = vadd.f32 %v720, %v545
        %v722 = vsel %vm665, %v721, -inf
        %723 = vmax.xlane.f32.xlu0 %v722
        %v724 = vpop.xlane.xlu0 %723
        %v725 = vsub.f32 %v721, %v724
        %v726 = vmul.f32 %v725, 1.442695
        %v727 = vpow.pop %v726
        %v728 = vsel %vm665, %v727, 0.0
        %729 = vadd.xlane.f32.xlu0 %v728
        %v730 = vpop.xlane.xlu0 %729
        %v731 = vrcp.pop %v730
        %v732 = vmul.f32 %v727, %v731
        %v733 = vpack.c.bf16 %v732, %v732
        %v735 = vsel %vm665, %v733, 0
        %v737 = vsel %vm681, %v700, 0
        %739 = vmatpush.bf16.msra.mxu0 0
        %740 = vmatpush.bf16.msra.mxu0 0
        %741 = vmatpush.bf16.msra.mxu0 0
        %742 = vmatpush.bf16.msra.mxu0 0
        %743 = vmatpush.bf16.msra.mxu0 0
        %744 = vmatpush.bf16.msra.mxu0 0
        %745 = vmatpush.bf16.msra.mxu0 0
        %746 = vmatpush.bf16.msra.mxu0 %v737
        %747 = vmatmul.bf16.gmra.mxu0 %v735
        %v748 = vpop.f32.mrf.mxu0
        %v749 = vadd.f32 0.0, %v748
        %v750 = vpop.f32.mrf.mxu0
        %751 = vdwg.mxu0
        %752 = vrot.lane.b32.xlu0 %v639, 96
        %v753 = vpop.permute.xlu0 %752
        %754 = vrot.lane.b32.xlu0 %v639, 32
        %v755 = vpop.permute.xlu0 %754
        %v757 = vsel %vm643, %v753, 0
        %v760 = vsel %vm643, %v755, 0
        %762 = vmatpush.bf16.xpose.msra.mxu0 0
        %763 = vmatpush.bf16.xpose.msra.mxu0 0
        %764 = vmatpush.bf16.xpose.msra.mxu0 0
        %765 = vmatpush.bf16.xpose.msra.mxu0 0
        %766 = vmatpush.bf16.xpose.msra.mxu0 0
        %767 = vmatpush.bf16.xpose.msra.mxu0 0
        %768 = vmatpush.bf16.xpose.msra.mxu0 0
        %769 = vmatpush.bf16.xpose.msra.mxu0 %v760
        %770 = vmatmul.bf16.gmra.mxu0 %v757
        %v771 = vpop.f32.mrf.mxu0
        %v772 = vadd.f32 0.0, %v771
        %v773 = vpop.f32.mrf.mxu0
        %774 = vdwg.mxu0
        %v775 = vmul.f32 %v772, 0.25
        %v776 = vadd.f32 %v775, %v545
        %v777 = vsel %vm665, %v776, -inf
        %778 = vmax.xlane.f32.xlu0 %v777
        %v779 = vpop.xlane.xlu0 %778
        %v780 = vsub.f32 %v776, %v779
        %v781 = vmul.f32 %v780, 1.442695
        %v782 = vpow.pop %v781
        %v783 = vsel %vm665, %v782, 0.0
        %784 = vadd.xlane.f32.xlu0 %v783
        %v785 = vpop.xlane.xlu0 %784
        %v786 = vrcp.pop %v785
        %v787 = vmul.f32 %v782, %v786
        %v788 = vpack.c.bf16 %v787, %v787
        %v790 = vsel %vm665, %v788, 0
        %v792 = vsel %vm681, %v755, 0
        %794 = vmatpush.bf16.msra.mxu0 0
        %795 = vmatpush.bf16.msra.mxu0 0
        %796 = vmatpush.bf16.msra.mxu0 0
        %797 = vmatpush.bf16.msra.mxu0 0
        %798 = vmatpush.bf16.msra.mxu0 0
        %799 = vmatpush.bf16.msra.mxu0 0
        %800 = vmatpush.bf16.msra.mxu0 0
        %801 = vmatpush.bf16.msra.mxu0 %v792
        %802 = vmatmul.bf16.gmra.mxu0 %v790
        %v803 = vpop.f32.mrf.mxu0
        %v804 = vadd.f32 0.0, %v803
        %v805 = vpop.f32.mrf.mxu0
        %806 = vdwg.mxu0
        %807 = vrot.lane.b32.xlu0 %v639, 80
        %v808 = vpop.permute.xlu0 %807
        %809 = vrot.lane.b32.xlu0 %v639, 16
        %v810 = vpop.permute.xlu0 %809
        %v812 = vsel %vm643, %v808, 0
        %v815 = vsel %vm643, %v810, 0
        %817 = vmatpush.bf16.xpose.msra.mxu0 0
        %818 = vmatpush.bf16.xpose.msra.mxu0 0
        %819 = vmatpush.bf16.xpose.msra.mxu0 0
        %820 = vmatpush.bf16.xpose.msra.mxu0 0
        %821 = vmatpush.bf16.xpose.msra.mxu0 0
        %822 = vmatpush.bf16.xpose.msra.mxu0 0
        %823 = vmatpush.bf16.xpose.msra.mxu0 0
        %824 = vmatpush.bf16.xpose.msra.mxu0 %v815
        %825 = vmatmul.bf16.gmra.mxu0 %v812
        %v826 = vpop.f32.mrf.mxu0
        %v827 = vadd.f32 0.0, %v826
        %v828 = vpop.f32.mrf.mxu0
        %829 = vdwg.mxu0
        %v830 = vmul.f32 %v827, 0.25
        %v831 = vadd.f32 %v830, %v545
        %v832 = vsel %vm665, %v831, -inf
        %833 = vmax.xlane.f32.xlu0 %v832
        %v834 = vpop.xlane.xlu0 %833
        %v835 = vsub.f32 %v831, %v834
        %v836 = vmul.f32 %v835, 1.442695
        %v837 = vpow.pop %v836
        %v838 = vsel %vm665, %v837, 0.0
        %839 = vadd.xlane.f32.xlu0 %v838
        %v840 = vpop.xlane.xlu0 %839
        %v841 = vrcp.pop %v840
        %v842 = vmul.f32 %v837, %v841
        %v843 = vpack.c.bf16 %v842, %v842
        %v845 = vsel %vm665, %v843, 0
        %v847 = vsel %vm681, %v810, 0
        %849 = vmatpush.bf16.msra.mxu0 0
        %850 = vmatpush.bf16.msra.mxu0 0
        %851 = vmatpush.bf16.msra.mxu0 0
        %852 = vmatpush.bf16.msra.mxu0 0
        %853 = vmatpush.bf16.msra.mxu0 0
        %854 = vmatpush.bf16.msra.mxu0 0
        %855 = vmatpush.bf16.msra.mxu0 0
        %856 = vmatpush.bf16.msra.mxu0 %v847
        %857 = vmatmul.bf16.gmra.mxu0 %v845
        %v858 = vpop.f32.mrf.mxu0
        %v859 = vadd.f32 0.0, %v858
        %v860 = vpop.f32.mrf.mxu0
        %861 = vdwg.mxu0
        %863 = vrot.lane.b32.xlu0 %v749, 16
        %v864 = vpop.permute.xlu0 %863
        %867 = vrot.lane.b32.xlu0 %v804, 32
        %v868 = vpop.permute.xlu0 %867
        %871 = vrot.lane.b32.xlu0 %v859, 48
        %v872 = vpop.permute.xlu0 %871
        %v874 = vsel %vm643, %v694, %v864
        %vm875 = vcmask 261120
        %v876 = vsel %vm875, %v874, %v868
        %vm877 = vcmask 392192
        %v878 = vsel %vm877, %v876, %v872
        %v879 = vpack.c.bf16 %v878, %v878
        %v880 = vld [vmem:[%s7] sm:$0xf]
        %v881 = vld [vmem:[%s7 + $0x4] sm:$0xf]
        %v882 = vld [vmem:[%s7 + $0x8] sm:$0xf]
        %v883 = vld [vmem:[%s7 + $0xc] sm:$0xf]
        %v884 = vld [vmem:[%s7 + $0x10] sm:$0xf]
        %v885 = vld [vmem:[%s7 + $0x14] sm:$0xf]
        %v886 = vld [vmem:[%s7 + $0x18] sm:$0xf]
        %v887 = vld [vmem:[%s7 + $0x1c] sm:$0xf]
        %v896 = vunpack.c.l.b16 %v880
        %v897 = vunpack.c.l.b16 %v881
        %v898 = vunpack.c.l.b16 %v882
        %v899 = vunpack.c.l.b16 %v883
        %v900 = vunpack.c.l.b16 %v884
        %v901 = vunpack.c.l.b16 %v885
        %v902 = vunpack.c.l.b16 %v886
        %v903 = vunpack.c.l.b16 %v887
        %v904 = vpack.c.b16 %v897, %v896
        %v905 = vpack.c.b16 %v899, %v898
        %v906 = vpack.c.b16 %v901, %v900
        %v907 = vpack.c.b16 %v903, %v902
        %v913 = vsel %vm548, %v879, 0
        %915 = vmatpush.bf16.msra.mxu0 0
        %916 = vmatpush.bf16.msra.mxu0 0
        %917 = vmatpush.bf16.msra.mxu0 0
        %918 = vmatpush.bf16.msra.mxu0 0
        %919 = vmatpush.bf16.msra.mxu0 %v907
        %920 = vmatpush.bf16.msra.mxu0 %v906
        %921 = vmatpush.bf16.msra.mxu0 %v905
        %922 = vmatpush.bf16.msra.mxu0 %v904
        %923 = vmatmul.bf16.gmra.mxu0 %v913
        %v924 = vpop.f32.mrf.mxu0
        %v925 = vadd.f32 0.0, %v924
        %v926 = vpop.f32.mrf.mxu0
        %927 = vdwg.mxu0
        %v928 = vadd.f32 %v544, %v925
        %v929 = vld [vmem:[%s8] sm:$0x1]
        %v931 = vperm.slane %v929, 0
        %v933 = vadd.f32 %v928, %v931
        %v934 = vsel %vm548, %v933, 0.0
        %935 = vadd.xlane.f32.xlu0 %v934
        %v936 = vpop.xlane.xlu0 %935
        %v937 = vmul.f32 %v936, %v558
        %v938 = vsub.f32 %v933, %v937
        %v939 = vmul.f32 %v938, %v938
        %v940 = vsel %vm548, %v939, 0.0
        %941 = vadd.xlane.f32.xlu0 %v940
        %v942 = vpop.xlane.xlu0 %941
        %v943 = vmul.f32 %v942, %v558
        %v944 = vadd.f32 %v943, 1e-05
        %v945 = vrsqrt.pop %v944
        %v946 = vmul.f32 %v945, %v944
        %v947 = vmul.f32 %v946, %v945
        %v948 = vmul.f32 0.5, %v947
        %v949 = vsub.f32 1.5, %v948
        %v950 = vmul.f32 %v945, %v949
        %vm951 = vweird.f32 %v944
        %vm952 = vweird.f32 %v945
        %vm953 = vmor %vm951, %vm952
        %v954 = vsel %vm953, %v945, %v950
        %v955 = vmul.f32 %v938, %v954
        %v956 = vmul.f32 %v955, %v579
        %v957 = vadd.f32 %v956, %v583
        %v958 = vpack.c.bf16 %v957, %v957
        %v959 = vld [vmem:[%s9] sm:$0xf]
        %v960 = vld [vmem:[%s9 + $0x4] sm:$0xf]
        %v961 = vld [vmem:[%s9 + $0x8] sm:$0xf]
        %v962 = vld [vmem:[%s9 + $0xc] sm:$0xf]
        %v963 = vld [vmem:[%s9 + $0x10] sm:$0xf]
        %v964 = vld [vmem:[%s9 + $0x14] sm:$0xf]
        %v965 = vld [vmem:[%s9 + $0x18] sm:$0xf]
        %v966 = vld [vmem:[%s9 + $0x1c] sm:$0xf]
        %v967 = vld [vmem:[%s10] sm:$0x1]
        %v969 = vperm.slane %v967, 0
        %v979 = vunpack.c.l.b16 %v959
        %v980 = vunpack.c.l.b16 %v960
        %v981 = vunpack.c.l.b16 %v961
        %v982 = vunpack.c.l.b16 %v962
        %v983 = vunpack.c.l.b16 %v963
        %v984 = vunpack.c.l.b16 %v964
        %v985 = vunpack.c.l.b16 %v965
        %v986 = vunpack.c.l.b16 %v966
        %v987 = vpack.c.b16 %v980, %v979
        %v988 = vpack.c.b16 %v982, %v981
        %v989 = vpack.c.b16 %v984, %v983
        %v990 = vpack.c.b16 %v986, %v985
        %v996 = vsel %vm548, %v958, 0
        %998 = vmatpush.bf16.msra.mxu0 0
        %999 = vmatpush.bf16.msra.mxu0 0
        %1000 = vmatpush.bf16.msra.mxu0 0
        %1001 = vmatpush.bf16.msra.mxu0 0
        %1002 = vmatpush.bf16.msra.mxu0 %v990
        %1003 = vmatpush.bf16.msra.mxu0 %v989
        %1004 = vmatpush.bf16.msra.mxu0 %v988
        %1005 = vmatpush.bf16.msra.mxu0 %v987
        %1006 = vmatmul.bf16.gmra.mxu0 %v996
        %v1007 = vpop.f32.mrf.mxu0
        %v1008 = vadd.f32 %v969, %v1007
        %v1009 = vpop.f32.mrf.mxu0
        %1010 = vdwg.mxu0
        %v1011 = vmul.f32 %v1008, %v1008
        %v1012 = vmul.f32 %v1008, %v1011
        %v1013 = vmul.f32 %v1012, 0.044715
        %v1014 = vadd.f32 %v1008, %v1013
        %v1015 = vmul.f32 %v1014, 0.7978846
        %v1016 = vtanh.pop %v1015
        %v1017 = vadd.f32 %v1016, 1.0
        %v1018 = vmul.f32 %v1017, 0.5
        %v1019 = vmul.f32 %v1008, %v1018
        %v1020 = vpack.c.bf16 %v1019, %v1019
        %v1021 = vld [vmem:[%s11] sm:$0xf]
        %v1022 = vld [vmem:[%s11 + $0x4] sm:$0xf]
        %v1023 = vld [vmem:[%s11 + $0x8] sm:$0xf]
        %v1024 = vld [vmem:[%s11 + $0xc] sm:$0xf]
        %v1025 = vld [vmem:[%s11 + $0x10] sm:$0xf]
        %v1026 = vld [vmem:[%s11 + $0x14] sm:$0xf]
        %v1027 = vld [vmem:[%s11 + $0x18] sm:$0xf]
        %v1028 = vld [vmem:[%s11 + $0x1c] sm:$0xf]
        %v1029 = vld [vmem:[%s11 + $0x20] sm:$0xf]
        %v1030 = vld [vmem:[%s11 + $0x24] sm:$0xf]
        %v1031 = vld [vmem:[%s11 + $0x28] sm:$0xf]
        %v1032 = vld [vmem:[%s11 + $0x2c] sm:$0xf]
        %v1033 = vld [vmem:[%s11 + $0x30] sm:$0xf]
        %v1034 = vld [vmem:[%s11 + $0x34] sm:$0xf]
        %v1035 = vld [vmem:[%s11 + $0x38] sm:$0xf]
        %v1036 = vld [vmem:[%s11 + $0x3c] sm:$0xf]
        %v1053 = vunpack.c.l.b16 %v1021
        %v1054 = vunpack.c.l.b16 %v1022
        %v1055 = vunpack.c.l.b16 %v1023
        %v1056 = vunpack.c.l.b16 %v1024
        %v1057 = vunpack.c.l.b16 %v1025
        %v1058 = vunpack.c.l.b16 %v1026
        %v1059 = vunpack.c.l.b16 %v1027
        %v1060 = vunpack.c.l.b16 %v1028
        %v1061 = vunpack.c.l.b16 %v1029
        %v1062 = vunpack.c.l.b16 %v1030
        %v1063 = vunpack.c.l.b16 %v1031
        %v1064 = vunpack.c.l.b16 %v1032
        %v1065 = vunpack.c.l.b16 %v1033
        %v1066 = vunpack.c.l.b16 %v1034
        %v1067 = vunpack.c.l.b16 %v1035
        %v1068 = vunpack.c.l.b16 %v1036
        %v1069 = vpack.c.b16 %v1054, %v1053
        %v1070 = vpack.c.b16 %v1056, %v1055
        %v1071 = vpack.c.b16 %v1058, %v1057
        %v1072 = vpack.c.b16 %v1060, %v1059
        %v1073 = vpack.c.b16 %v1062, %v1061
        %v1074 = vpack.c.b16 %v1064, %v1063
        %v1075 = vpack.c.b16 %v1066, %v1065
        %v1076 = vpack.c.b16 %v1068, %v1067
        %1085 = vmatpush.bf16.msra.mxu0 %v1076
        %1086 = vmatpush.bf16.msra.mxu0 %v1075
        %1087 = vmatpush.bf16.msra.mxu0 %v1074
        %1088 = vmatpush.bf16.msra.mxu0 %v1073
        %1089 = vmatpush.bf16.msra.mxu0 %v1072
        %1090 = vmatpush.bf16.msra.mxu0 %v1071
        %1091 = vmatpush.bf16.msra.mxu0 %v1070
        %1092 = vmatpush.bf16.msra.mxu0 %v1069
        %1093 = vmatmul.bf16.gmra.mxu0 %v1020
        %v1094 = vpop.f32.mrf.mxu0
        %v1095 = vadd.f32 0.0, %v1094
        %v1096 = vpop.f32.mrf.mxu0
        %1097 = vdwg.mxu0
        %v1098 = vadd.f32 %v933, %v1095
        %v1099 = vld [vmem:[%s12] sm:$0x1]
        %v1101 = vperm.slane %v1099, 0
        %v1103 = vadd.f32 %v1098, %v1101
        %s1104 = scalar_lea.vmem %s3, 1
        %v1105 = vld [vmem:[%s1104] sm:$0x1]
        %s1106 = scalar_lea.vmem %s4, 1
        %v1107 = vld [vmem:[%s1106] sm:$0x1]
        %v1108 = vsel %vm548, %v1103, 0.0
        %1109 = vadd.xlane.f32.xlu0 %v1108
        %v1110 = vpop.xlane.xlu0 %1109
        %v1111 = vmul.f32 %v1110, %v558
        %v1112 = vsub.f32 %v1103, %v1111
        %v1113 = vmul.f32 %v1112, %v1112
        %v1114 = vsel %vm548, %v1113, 0.0
        %1115 = vadd.xlane.f32.xlu0 %v1114
        %v1116 = vpop.xlane.xlu0 %1115
        %v1117 = vmul.f32 %v1116, %v558
        %v1118 = vadd.f32 %v1117, 1e-05
        %v1119 = vrsqrt.pop %v1118
        %v1120 = vmul.f32 %v1119, %v1118
        %v1121 = vmul.f32 %v1120, %v1119
        %v1122 = vmul.f32 0.5, %v1121
        %v1123 = vsub.f32 1.5, %v1122
        %v1124 = vmul.f32 %v1119, %v1123
        %vm1125 = vweird.f32 %v1118
        %vm1126 = vweird.f32 %v1119
        %vm1127 = vmor %vm1125, %vm1126
        %v1128 = vsel %vm1127, %v1119, %v1124
        %v1129 = vmul.f32 %v1112, %v1128
        %v1131 = vperm.slane %v1105, 0
        %v1133 = vmul.f32 %v1129, %v1131
        %v1135 = vperm.slane %v1107, 0
        %v1137 = vadd.f32 %v1133, %v1135
        %v1138 = vpack.c.bf16 %v1137, %v1137
        %s1139 = scalar_lea.vmem %s5, 32
        %v1140 = vld [vmem:[%s1139] sm:$0xf]
        %v1141 = vld [vmem:[%s1139 + $0x4] sm:$0xf]
        %v1142 = vld [vmem:[%s1139 + $0x8] sm:$0xf]
        %v1143 = vld [vmem:[%s1139 + $0xc] sm:$0xf]
        %v1144 = vld [vmem:[%s1139 + $0x10] sm:$0xf]
        %v1145 = vld [vmem:[%s1139 + $0x14] sm:$0xf]
        %v1146 = vld [vmem:[%s1139 + $0x18] sm:$0xf]
        %v1147 = vld [vmem:[%s1139 + $0x1c] sm:$0xf]
        %s1148 = scalar_lea.vmem %s6, 1
        %v1149 = vld [vmem:[%s1148] sm:$0x1]
        %v1151 = vperm.slane %v1149, 0
        %v1161 = vunpack.c.l.b16 %v1140
        %v1162 = vunpack.c.l.b16 %v1141
        %v1163 = vunpack.c.l.b16 %v1142
        %v1164 = vunpack.c.l.b16 %v1143
        %v1165 = vunpack.c.l.b16 %v1144
        %v1166 = vunpack.c.l.b16 %v1145
        %v1167 = vunpack.c.l.b16 %v1146
        %v1168 = vunpack.c.l.b16 %v1147
        %v1169 = vpack.c.b16 %v1162, %v1161
        %v1170 = vpack.c.b16 %v1164, %v1163
        %v1171 = vpack.c.b16 %v1166, %v1165
        %v1172 = vpack.c.b16 %v1168, %v1167
        %v1178 = vsel %vm548, %v1138, 0
        %1180 = vmatpush.bf16.msra.mxu0 0
        %1181 = vmatpush.bf16.msra.mxu0 0
        %1182 = vmatpush.bf16.msra.mxu0 0
        %1183 = vmatpush.bf16.msra.mxu0 0
        %1184 = vmatpush.bf16.msra.mxu0 %v1172
        %1185 = vmatpush.bf16.msra.mxu0 %v1171
        %1186 = vmatpush.bf16.msra.mxu0 %v1170
        %1187 = vmatpush.bf16.msra.mxu0 %v1169
        %1188 = vmatmul.bf16.gmra.mxu0 %v1178
        %v1189 = vpop.f32.mrf.mxu0
        %v1190 = vadd.f32 %v1151, %v1189
        %v1191 = vpop.f32.mrf.mxu0
        %1192 = vdwg.mxu0
        %v1193 = vpack.c.bf16 %v1190, %v1190
        %1195 = vrot.lane.b32.xlu0 %v1193, 64
        %v1196 = vpop.permute.xlu0 %1195
        %v1198 = vsel %vm643, %v1193, 0
        %v1201 = vsel %vm643, %v1196, 0
        %1203 = vmatpush.bf16.xpose.msra.mxu0 0
        %1204 = vmatpush.bf16.xpose.msra.mxu0 0
        %1205 = vmatpush.bf16.xpose.msra.mxu0 0
        %1206 = vmatpush.bf16.xpose.msra.mxu0 0
        %1207 = vmatpush.bf16.xpose.msra.mxu0 0
        %1208 = vmatpush.bf16.xpose.msra.mxu0 0
        %1209 = vmatpush.bf16.xpose.msra.mxu0 0
        %1210 = vmatpush.bf16.xpose.msra.mxu0 %v1201
        %1211 = vmatmul.bf16.gmra.mxu0 %v1198
        %v1212 = vpop.f32.mrf.mxu0
        %v1213 = vadd.f32 0.0, %v1212
        %v1214 = vpop.f32.mrf.mxu0
        %1215 = vdwg.mxu0
        %v1216 = vmul.f32 %v1213, 0.25
        %v1217 = vadd.f32 %v1216, %v545
        %v1218 = vsel %vm665, %v1217, -inf
        %1219 = vmax.xlane.f32.xlu0 %v1218
        %v1220 = vpop.xlane.xlu0 %1219
        %v1221 = vsub.f32 %v1217, %v1220
        %v1222 = vmul.f32 %v1221, 1.442695
        %v1223 = vpow.pop %v1222
        %v1224 = vsel %vm665, %v1223, 0.0
        %1225 = vadd.xlane.f32.xlu0 %v1224
        %v1226 = vpop.xlane.xlu0 %1225
        %v1227 = vrcp.pop %v1226
        %v1228 = vmul.f32 %v1223, %v1227
        %v1229 = vpack.c.bf16 %v1228, %v1228
        %v1231 = vsel %vm665, %v1229, 0
        %v1233 = vsel %vm681, %v1196, 0
        %1235 = vmatpush.bf16.msra.mxu0 0
        %1236 = vmatpush.bf16.msra.mxu0 0
        %1237 = vmatpush.bf16.msra.mxu0 0
        %1238 = vmatpush.bf16.msra.mxu0 0
        %1239 = vmatpush.bf16.msra.mxu0 0
        %1240 = vmatpush.bf16.msra.mxu0 0
        %1241 = vmatpush.bf16.msra.mxu0 0
        %1242 = vmatpush.bf16.msra.mxu0 %v1233
        %1243 = vmatmul.bf16.gmra.mxu0 %v1231
        %v1244 = vpop.f32.mrf.mxu0
        %v1245 = vadd.f32 0.0, %v1244
        %v1246 = vpop.f32.mrf.mxu0
        %1247 = vdwg.mxu0
        %1248 = vrot.lane.b32.xlu0 %v1193, 112
        %v1249 = vpop.permute.xlu0 %1248
        %1250 = vrot.lane.b32.xlu0 %v1193, 48
        %v1251 = vpop.permute.xlu0 %1250
        %v1253 = vsel %vm643, %v1249, 0
        %v1256 = vsel %vm643, %v1251, 0
        %1258 = vmatpush.bf16.xpose.msra.mxu0 0
        %1259 = vmatpush.bf16.xpose.msra.mxu0 0
        %1260 = vmatpush.bf16.xpose.msra.mxu0 0
        %1261 = vmatpush.bf16.xpose.msra.mxu0 0
        %1262 = vmatpush.bf16.xpose.msra.mxu0 0
        %1263 = vmatpush.bf16.xpose.msra.mxu0 0
        %1264 = vmatpush.bf16.xpose.msra.mxu0 0
        %1265 = vmatpush.bf16.xpose.msra.mxu0 %v1256
        %1266 = vmatmul.bf16.gmra.mxu0 %v1253
        %v1267 = vpop.f32.mrf.mxu0
        %v1268 = vadd.f32 0.0, %v1267
        %v1269 = vpop.f32.mrf.mxu0
        %1270 = vdwg.mxu0
        %v1271 = vmul.f32 %v1268, 0.25
        %v1272 = vadd.f32 %v1271, %v545
        %v1273 = vsel %vm665, %v1272, -inf
        %1274 = vmax.xlane.f32.xlu0 %v1273
        %v1275 = vpop.xlane.xlu0 %1274
        %v1276 = vsub.f32 %v1272, %v1275
        %v1277 = vmul.f32 %v1276, 1.442695
        %v1278 = vpow.pop %v1277
        %v1279 = vsel %vm665, %v1278, 0.0
        %1280 = vadd.xlane.f32.xlu0 %v1279
        %v1281 = vpop.xlane.xlu0 %1280
        %v1282 = vrcp.pop %v1281
        %v1283 = vmul.f32 %v1278, %v1282
        %v1284 = vpack.c.bf16 %v1283, %v1283
        %v1286 = vsel %vm665, %v1284, 0
        %v1288 = vsel %vm681, %v1251, 0
        %1290 = vmatpush.bf16.msra.mxu0 0
        %1291 = vmatpush.bf16.msra.mxu0 0
        %1292 = vmatpush.bf16.msra.mxu0 0
        %1293 = vmatpush.bf16.msra.mxu0 0
        %1294 = vmatpush.bf16.msra.mxu0 0
        %1295 = vmatpush.bf16.msra.mxu0 0
        %1296 = vmatpush.bf16.msra.mxu0 0
        %1297 = vmatpush.bf16.msra.mxu0 %v1288
        %1298 = vmatmul.bf16.gmra.mxu0 %v1286
        %v1299 = vpop.f32.mrf.mxu0
        %v1300 = vadd.f32 0.0, %v1299
        %v1301 = vpop.f32.mrf.mxu0
        %1302 = vdwg.mxu0
        %1303 = vrot.lane.b32.xlu0 %v1193, 96
        %v1304 = vpop.permute.xlu0 %1303
        %1305 = vrot.lane.b32.xlu0 %v1193, 32
        %v1306 = vpop.permute.xlu0 %1305
        %v1308 = vsel %vm643, %v1304, 0
        %v1311 = vsel %vm643, %v1306, 0
        %1313 = vmatpush.bf16.xpose.msra.mxu0 0
        %1314 = vmatpush.bf16.xpose.msra.mxu0 0
        %1315 = vmatpush.bf16.xpose.msra.mxu0 0
        %1316 = vmatpush.bf16.xpose.msra.mxu0 0
        %1317 = vmatpush.bf16.xpose.msra.mxu0 0
        %1318 = vmatpush.bf16.xpose.msra.mxu0 0
        %1319 = vmatpush.bf16.xpose.msra.mxu0 0
        %1320 = vmatpush.bf16.xpose.msra.mxu0 %v1311
        %1321 = vmatmul.bf16.gmra.mxu0 %v1308
        %v1322 = vpop.f32.mrf.mxu0
        %v1323 = vadd.f32 0.0, %v1322
        %v1324 = vpop.f32.mrf.mxu0
        %1325 = vdwg.mxu0
        %v1326 = vmul.f32 %v1323, 0.25
        %v1327 = vadd.f32 %v1326, %v545
        %v1328 = vsel %vm665, %v1327, -inf
        %1329 = vmax.xlane.f32.xlu0 %v1328
        %v1330 = vpop.xlane.xlu0 %1329
        %v1331 = vsub.f32 %v1327, %v1330
        %v1332 = vmul.f32 %v1331, 1.442695
        %v1333 = vpow.pop %v1332
        %v1334 = vsel %vm665, %v1333, 0.0
        %1335 = vadd.xlane.f32.xlu0 %v1334
        %v1336 = vpop.xlane.xlu0 %1335
        %v1337 = vrcp.pop %v1336
        %v1338 = vmul.f32 %v1333, %v1337
        %v1339 = vpack.c.bf16 %v1338, %v1338
        %v1341 = vsel %vm665, %v1339, 0
        %v1343 = vsel %vm681, %v1306, 0
        %1345 = vmatpush.bf16.msra.mxu0 0
        %1346 = vmatpush.bf16.msra.mxu0 0
        %1347 = vmatpush.bf16.msra.mxu0 0
        %1348 = vmatpush.bf16.msra.mxu0 0
        %1349 = vmatpush.bf16.msra.mxu0 0
        %1350 = vmatpush.bf16.msra.mxu0 0
        %1351 = vmatpush.bf16.msra.mxu0 0
        %1352 = vmatpush.bf16.msra.mxu0 %v1343
        %1353 = vmatmul.bf16.gmra.mxu0 %v1341
        %v1354 = vpop.f32.mrf.mxu0
        %v1355 = vadd.f32 0.0, %v1354
        %v1356 = vpop.f32.mrf.mxu0
        %1357 = vdwg.mxu0
        %1358 = vrot.lane.b32.xlu0 %v1193, 80
        %v1359 = vpop.permute.xlu0 %1358
        %1360 = vrot.lane.b32.xlu0 %v1193, 16
        %v1361 = vpop.permute.xlu0 %1360
        %v1363 = vsel %vm643, %v1359, 0
        %v1366 = vsel %vm643, %v1361, 0
        %1368 = vmatpush.bf16.xpose.msra.mxu0 0
        %1369 = vmatpush.bf16.xpose.msra.mxu0 0
        %1370 = vmatpush.bf16.xpose.msra.mxu0 0
        %1371 = vmatpush.bf16.xpose.msra.mxu0 0
        %1372 = vmatpush.bf16.xpose.msra.mxu0 0
        %1373 = vmatpush.bf16.xpose.msra.mxu0 0
        %1374 = vmatpush.bf16.xpose.msra.mxu0 0
        %1375 = vmatpush.bf16.xpose.msra.mxu0 %v1366
        %1376 = vmatmul.bf16.gmra.mxu0 %v1363
        %v1377 = vpop.f32.mrf.mxu0
        %v1378 = vadd.f32 0.0, %v1377
        %v1379 = vpop.f32.mrf.mxu0
        %1380 = vdwg.mxu0
        %v1381 = vmul.f32 %v1378, 0.25
        %v1382 = vadd.f32 %v1381, %v545
        %v1383 = vsel %vm665, %v1382, -inf
        %1384 = vmax.xlane.f32.xlu0 %v1383
        %v1385 = vpop.xlane.xlu0 %1384
        %v1386 = vsub.f32 %v1382, %v1385
        %v1387 = vmul.f32 %v1386, 1.442695
        %v1388 = vpow.pop %v1387
        %v1389 = vsel %vm665, %v1388, 0.0
        %1390 = vadd.xlane.f32.xlu0 %v1389
        %v1391 = vpop.xlane.xlu0 %1390
        %v1392 = vrcp.pop %v1391
        %v1393 = vmul.f32 %v1388, %v1392
        %v1394 = vpack.c.bf16 %v1393, %v1393
        %v1396 = vsel %vm665, %v1394, 0
        %v1398 = vsel %vm681, %v1361, 0
        %1400 = vmatpush.bf16.msra.mxu0 0
        %1401 = vmatpush.bf16.msra.mxu0 0
        %1402 = vmatpush.bf16.msra.mxu0 0
        %1403 = vmatpush.bf16.msra.mxu0 0
        %1404 = vmatpush.bf16.msra.mxu0 0
        %1405 = vmatpush.bf16.msra.mxu0 0
        %1406 = vmatpush.bf16.msra.mxu0 0
        %1407 = vmatpush.bf16.msra.mxu0 %v1398
        %1408 = vmatmul.bf16.gmra.mxu0 %v1396
        %v1409 = vpop.f32.mrf.mxu0
        %v1410 = vadd.f32 0.0, %v1409
        %v1411 = vpop.f32.mrf.mxu0
        %1412 = vdwg.mxu0
        %1414 = vrot.lane.b32.xlu0 %v1300, 16
        %v1415 = vpop.permute.xlu0 %1414
        %1418 = vrot.lane.b32.xlu0 %v1355, 32
        %v1419 = vpop.permute.xlu0 %1418
        %1422 = vrot.lane.b32.xlu0 %v1410, 48
        %v1423 = vpop.permute.xlu0 %1422
        %v1425 = vsel %vm643, %v1245, %v1415
        %v1426 = vsel %vm875, %v1425, %v1419
        %v1427 = vsel %vm877, %v1426, %v1423
        %v1428 = vpack.c.bf16 %v1427, %v1427
        %s1429 = scalar_lea.vmem %s7, 32
        %v1430 = vld [vmem:[%s1429] sm:$0xf]
        %v1431 = vld [vmem:[%s1429 + $0x4] sm:$0xf]
        %v1432 = vld [vmem:[%s1429 + $0x8] sm:$0xf]
        %v1433 = vld [vmem:[%s1429 + $0xc] sm:$0xf]
        %v1434 = vld [vmem:[%s1429 + $0x10] sm:$0xf]
        %v1435 = vld [vmem:[%s1429 + $0x14] sm:$0xf]
        %v1436 = vld [vmem:[%s1429 + $0x18] sm:$0xf]
        %v1437 = vld [vmem:[%s1429 + $0x1c] sm:$0xf]
        %v1446 = vunpack.c.l.b16 %v1430
        %v1447 = vunpack.c.l.b16 %v1431
        %v1448 = vunpack.c.l.b16 %v1432
        %v1449 = vunpack.c.l.b16 %v1433
        %v1450 = vunpack.c.l.b16 %v1434
        %v1451 = vunpack.c.l.b16 %v1435
        %v1452 = vunpack.c.l.b16 %v1436
        %v1453 = vunpack.c.l.b16 %v1437
        %v1454 = vpack.c.b16 %v1447, %v1446
        %v1455 = vpack.c.b16 %v1449, %v1448
        %v1456 = vpack.c.b16 %v1451, %v1450
        %v1457 = vpack.c.b16 %v1453, %v1452
        %v1463 = vsel %vm548, %v1428, 0
        %1465 = vmatpush.bf16.msra.mxu0 0
        %1466 = vmatpush.bf16.msra.mxu0 0
        %1467 = vmatpush.bf16.msra.mxu0 0
        %1468 = vmatpush.bf16.msra.mxu0 0
        %1469 = vmatpush.bf16.msra.mxu0 %v1457
        %1470 = vmatpush.bf16.msra.mxu0 %v1456
        %1471 = vmatpush.bf16.msra.mxu0 %v1455
        %1472 = vmatpush.bf16.msra.mxu0 %v1454
        %1473 = vmatmul.bf16.gmra.mxu0 %v1463
        %v1474 = vpop.f32.mrf.mxu0
        %v1475 = vadd.f32 0.0, %v1474
        %v1476 = vpop.f32.mrf.mxu0
        %1477 = vdwg.mxu0
        %v1478 = vadd.f32 %v1103, %v1475
        %s1479 = scalar_lea.vmem %s8, 1
        %v1480 = vld [vmem:[%s1479] sm:$0x1]
        %v1482 = vperm.slane %v1480, 0
        %v1484 = vadd.f32 %v1478, %v1482
        %v1485 = vsel %vm548, %v1484, 0.0
        %1486 = vadd.xlane.f32.xlu0 %v1485
        %v1487 = vpop.xlane.xlu0 %1486
        %v1488 = vmul.f32 %v1487, %v558
        %v1489 = vsub.f32 %v1484, %v1488
        %v1490 = vmul.f32 %v1489, %v1489
        %v1491 = vsel %vm548, %v1490, 0.0
        %1492 = vadd.xlane.f32.xlu0 %v1491
        %v1493 = vpop.xlane.xlu0 %1492
        %v1494 = vmul.f32 %v1493, %v558
        %v1495 = vadd.f32 %v1494, 1e-05
        %v1496 = vrsqrt.pop %v1495
        %v1497 = vmul.f32 %v1496, %v1495
        %v1498 = vmul.f32 %v1497, %v1496
        %v1499 = vmul.f32 0.5, %v1498
        %v1500 = vsub.f32 1.5, %v1499
        %v1501 = vmul.f32 %v1496, %v1500
        %vm1502 = vweird.f32 %v1495
        %vm1503 = vweird.f32 %v1496
        %vm1504 = vmor %vm1502, %vm1503
        %v1505 = vsel %vm1504, %v1496, %v1501
        %v1506 = vmul.f32 %v1489, %v1505
        %v1507 = vmul.f32 %v1506, %v1131
        %v1508 = vadd.f32 %v1507, %v1135
        %v1509 = vpack.c.bf16 %v1508, %v1508
        %s1510 = scalar_lea.vmem %s9, 32
        %v1511 = vld [vmem:[%s1510] sm:$0xf]
        %v1512 = vld [vmem:[%s1510 + $0x4] sm:$0xf]
        %v1513 = vld [vmem:[%s1510 + $0x8] sm:$0xf]
        %v1514 = vld [vmem:[%s1510 + $0xc] sm:$0xf]
        %v1515 = vld [vmem:[%s1510 + $0x10] sm:$0xf]
        %v1516 = vld [vmem:[%s1510 + $0x14] sm:$0xf]
        %v1517 = vld [vmem:[%s1510 + $0x18] sm:$0xf]
        %v1518 = vld [vmem:[%s1510 + $0x1c] sm:$0xf]
        %s1519 = scalar_lea.vmem %s10, 1
        %v1520 = vld [vmem:[%s1519] sm:$0x1]
        %v1522 = vperm.slane %v1520, 0
        %v1532 = vunpack.c.l.b16 %v1511
        %v1533 = vunpack.c.l.b16 %v1512
        %v1534 = vunpack.c.l.b16 %v1513
        %v1535 = vunpack.c.l.b16 %v1514
        %v1536 = vunpack.c.l.b16 %v1515
        %v1537 = vunpack.c.l.b16 %v1516
        %v1538 = vunpack.c.l.b16 %v1517
        %v1539 = vunpack.c.l.b16 %v1518
        %v1540 = vpack.c.b16 %v1533, %v1532
        %v1541 = vpack.c.b16 %v1535, %v1534
        %v1542 = vpack.c.b16 %v1537, %v1536
        %v1543 = vpack.c.b16 %v1539, %v1538
        %v1549 = vsel %vm548, %v1509, 0
        %1551 = vmatpush.bf16.msra.mxu0 0
        %1552 = vmatpush.bf16.msra.mxu0 0
        %1553 = vmatpush.bf16.msra.mxu0 0
        %1554 = vmatpush.bf16.msra.mxu0 0
        %1555 = vmatpush.bf16.msra.mxu0 %v1543
        %1556 = vmatpush.bf16.msra.mxu0 %v1542
        %1557 = vmatpush.bf16.msra.mxu0 %v1541
        %1558 = vmatpush.bf16.msra.mxu0 %v1540
        %1559 = vmatmul.bf16.gmra.mxu0 %v1549
        %v1560 = vpop.f32.mrf.mxu0
        %v1561 = vadd.f32 %v1522, %v1560
        %v1562 = vpop.f32.mrf.mxu0
        %1563 = vdwg.mxu0
        %v1564 = vmul.f32 %v1561, %v1561
        %v1565 = vmul.f32 %v1561, %v1564
        %v1566 = vmul.f32 %v1565, 0.044715
        %v1567 = vadd.f32 %v1561, %v1566
        %v1568 = vmul.f32 %v1567, 0.7978846
        %v1569 = vtanh.pop %v1568
        %v1570 = vadd.f32 %v1569, 1.0
        %v1571 = vmul.f32 %v1570, 0.5
        %v1572 = vmul.f32 %v1561, %v1571
        %v1573 = vpack.c.bf16 %v1572, %v1572
        %s1574 = scalar_lea.vmem %s11, 64
        %v1575 = vld [vmem:[%s1574] sm:$0xf]
        %v1576 = vld [vmem:[%s1574 + $0x4] sm:$0xf]
        %v1577 = vld [vmem:[%s1574 + $0x8] sm:$0xf]
        %v1578 = vld [vmem:[%s1574 + $0xc] sm:$0xf]
        %v1579 = vld [vmem:[%s1574 + $0x10] sm:$0xf]
        %v1580 = vld [vmem:[%s1574 + $0x14] sm:$0xf]
        %v1581 = vld [vmem:[%s1574 + $0x18] sm:$0xf]
        %v1582 = vld [vmem:[%s1574 + $0x1c] sm:$0xf]
        %v1583 = vld [vmem:[%s1574 + $0x20] sm:$0xf]
        %v1584 = vld [vmem:[%s1574 + $0x24] sm:$0xf]
        %v1585 = vld [vmem:[%s1574 + $0x28] sm:$0xf]
        %v1586 = vld [vmem:[%s1574 + $0x2c] sm:$0xf]
        %v1587 = vld [vmem:[%s1574 + $0x30] sm:$0xf]
        %v1588 = vld [vmem:[%s1574 + $0x34] sm:$0xf]
        %v1589 = vld [vmem:[%s1574 + $0x38] sm:$0xf]
        %v1590 = vld [vmem:[%s1574 + $0x3c] sm:$0xf]
        %v1607 = vunpack.c.l.b16 %v1575
        %v1608 = vunpack.c.l.b16 %v1576
        %v1609 = vunpack.c.l.b16 %v1577
        %v1610 = vunpack.c.l.b16 %v1578
        %v1611 = vunpack.c.l.b16 %v1579
        %v1612 = vunpack.c.l.b16 %v1580
        %v1613 = vunpack.c.l.b16 %v1581
        %v1614 = vunpack.c.l.b16 %v1582
        %v1615 = vunpack.c.l.b16 %v1583
        %v1616 = vunpack.c.l.b16 %v1584
        %v1617 = vunpack.c.l.b16 %v1585
        %v1618 = vunpack.c.l.b16 %v1586
        %v1619 = vunpack.c.l.b16 %v1587
        %v1620 = vunpack.c.l.b16 %v1588
        %v1621 = vunpack.c.l.b16 %v1589
        %v1622 = vunpack.c.l.b16 %v1590
        %v1623 = vpack.c.b16 %v1608, %v1607
        %v1624 = vpack.c.b16 %v1610, %v1609
        %v1625 = vpack.c.b16 %v1612, %v1611
        %v1626 = vpack.c.b16 %v1614, %v1613
        %v1627 = vpack.c.b16 %v1616, %v1615
        %v1628 = vpack.c.b16 %v1618, %v1617
        %v1629 = vpack.c.b16 %v1620, %v1619
        %v1630 = vpack.c.b16 %v1622, %v1621
        %1639 = vmatpush.bf16.msra.mxu0 %v1630
        %1640 = vmatpush.bf16.msra.mxu0 %v1629
        %1641 = vmatpush.bf16.msra.mxu0 %v1628
        %1642 = vmatpush.bf16.msra.mxu0 %v1627
        %1643 = vmatpush.bf16.msra.mxu0 %v1626
        %1644 = vmatpush.bf16.msra.mxu0 %v1625
        %1645 = vmatpush.bf16.msra.mxu0 %v1624
        %1646 = vmatpush.bf16.msra.mxu0 %v1623
        %1647 = vmatmul.bf16.gmra.mxu0 %v1573
        %v1648 = vpop.f32.mrf.mxu0
        %v1649 = vadd.f32 0.0, %v1648
        %v1650 = vpop.f32.mrf.mxu0
        %1651 = vdwg.mxu0
        %v1652 = vadd.f32 %v1484, %v1649
        %s1653 = scalar_lea.vmem %s12, 1
        %v1654 = vld [vmem:[%s1653] sm:$0x1]
        %v1656 = vperm.slane %v1654, 0
        %v1658 = vadd.f32 %v1652, %v1656
        %s1659 = scalar_lea.vmem %s3, 2
        %v1660 = vld [vmem:[%s1659] sm:$0x1]
        %s1661 = scalar_lea.vmem %s4, 2
        %v1662 = vld [vmem:[%s1661] sm:$0x1]
        %v1663 = vsel %vm548, %v1658, 0.0
        %1664 = vadd.xlane.f32.xlu0 %v1663
        %v1665 = vpop.xlane.xlu0 %1664
        %v1666 = vmul.f32 %v1665, %v558
        %v1667 = vsub.f32 %v1658, %v1666
        %v1668 = vmul.f32 %v1667, %v1667
        %v1669 = vsel %vm548, %v1668, 0.0
        %1670 = vadd.xlane.f32.xlu0 %v1669
        %v1671 = vpop.xlane.xlu0 %1670
        %v1672 = vmul.f32 %v1671, %v558
        %v1673 = vadd.f32 %v1672, 1e-05
        %v1674 = vrsqrt.pop %v1673
        %v1675 = vmul.f32 %v1674, %v1673
        %v1676 = vmul.f32 %v1675, %v1674
        %v1677 = vmul.f32 0.5, %v1676
        %v1678 = vsub.f32 1.5, %v1677
        %v1679 = vmul.f32 %v1674, %v1678
        %vm1680 = vweird.f32 %v1673
        %vm1681 = vweird.f32 %v1674
        %vm1682 = vmor %vm1680, %vm1681
        %v1683 = vsel %vm1682, %v1674, %v1679
        %v1684 = vmul.f32 %v1667, %v1683
        %v1686 = vperm.slane %v1660, 0
        %v1688 = vmul.f32 %v1684, %v1686
        %v1690 = vperm.slane %v1662, 0
        %v1692 = vadd.f32 %v1688, %v1690
        %v1693 = vpack.c.bf16 %v1692, %v1692
        %s1694 = scalar_lea.vmem %s5, 64
        %v1695 = vld [vmem:[%s1694] sm:$0xf]
        %v1696 = vld [vmem:[%s1694 + $0x4] sm:$0xf]
        %v1697 = vld [vmem:[%s1694 + $0x8] sm:$0xf]
        %v1698 = vld [vmem:[%s1694 + $0xc] sm:$0xf]
        %v1699 = vld [vmem:[%s1694 + $0x10] sm:$0xf]
        %v1700 = vld [vmem:[%s1694 + $0x14] sm:$0xf]
        %v1701 = vld [vmem:[%s1694 + $0x18] sm:$0xf]
        %v1702 = vld [vmem:[%s1694 + $0x1c] sm:$0xf]
        %s1703 = scalar_lea.vmem %s6, 2
        %v1704 = vld [vmem:[%s1703] sm:$0x1]
        %v1706 = vperm.slane %v1704, 0
        %v1716 = vunpack.c.l.b16 %v1695
        %v1717 = vunpack.c.l.b16 %v1696
        %v1718 = vunpack.c.l.b16 %v1697
        %v1719 = vunpack.c.l.b16 %v1698
        %v1720 = vunpack.c.l.b16 %v1699
        %v1721 = vunpack.c.l.b16 %v1700
        %v1722 = vunpack.c.l.b16 %v1701
        %v1723 = vunpack.c.l.b16 %v1702
        %v1724 = vpack.c.b16 %v1717, %v1716
        %v1725 = vpack.c.b16 %v1719, %v1718
        %v1726 = vpack.c.b16 %v1721, %v1720
        %v1727 = vpack.c.b16 %v1723, %v1722
        %v1733 = vsel %vm548, %v1693, 0
        %1735 = vmatpush.bf16.msra.mxu0 0
        %1736 = vmatpush.bf16.msra.mxu0 0
        %1737 = vmatpush.bf16.msra.mxu0 0
        %1738 = vmatpush.bf16.msra.mxu0 0
        %1739 = vmatpush.bf16.msra.mxu0 %v1727
        %1740 = vmatpush.bf16.msra.mxu0 %v1726
        %1741 = vmatpush.bf16.msra.mxu0 %v1725
        %1742 = vmatpush.bf16.msra.mxu0 %v1724
        %1743 = vmatmul.bf16.gmra.mxu0 %v1733
        %v1744 = vpop.f32.mrf.mxu0
        %v1745 = vadd.f32 %v1706, %v1744
        %v1746 = vpop.f32.mrf.mxu0
        %1747 = vdwg.mxu0
        %v1748 = vpack.c.bf16 %v1745, %v1745
        %1750 = vrot.lane.b32.xlu0 %v1748, 64
        %v1751 = vpop.permute.xlu0 %1750
        %v1753 = vsel %vm643, %v1748, 0
        %v1756 = vsel %vm643, %v1751, 0
        %1758 = vmatpush.bf16.xpose.msra.mxu0 0
        %1759 = vmatpush.bf16.xpose.msra.mxu0 0
        %1760 = vmatpush.bf16.xpose.msra.mxu0 0
        %1761 = vmatpush.bf16.xpose.msra.mxu0 0
        %1762 = vmatpush.bf16.xpose.msra.mxu0 0
        %1763 = vmatpush.bf16.xpose.msra.mxu0 0
        %1764 = vmatpush.bf16.xpose.msra.mxu0 0
        %1765 = vmatpush.bf16.xpose.msra.mxu0 %v1756
        %1766 = vmatmul.bf16.gmra.mxu0 %v1753
        %v1767 = vpop.f32.mrf.mxu0
        %v1768 = vadd.f32 0.0, %v1767
        %v1769 = vpop.f32.mrf.mxu0
        %1770 = vdwg.mxu0
        %v1771 = vmul.f32 %v1768, 0.25
        %v1772 = vadd.f32 %v1771, %v545
        %v1773 = vsel %vm665, %v1772, -inf
        %1774 = vmax.xlane.f32.xlu0 %v1773
        %v1775 = vpop.xlane.xlu0 %1774
        %v1776 = vsub.f32 %v1772, %v1775
        %v1777 = vmul.f32 %v1776, 1.442695
        %v1778 = vpow.pop %v1777
        %v1779 = vsel %vm665, %v1778, 0.0
        %1780 = vadd.xlane.f32.xlu0 %v1779
        %v1781 = vpop.xlane.xlu0 %1780
        %v1782 = vrcp.pop %v1781
        %v1783 = vmul.f32 %v1778, %v1782
        %v1784 = vpack.c.bf16 %v1783, %v1783
        %v1786 = vsel %vm665, %v1784, 0
        %v1788 = vsel %vm681, %v1751, 0
        %1790 = vmatpush.bf16.msra.mxu0 0
        %1791 = vmatpush.bf16.msra.mxu0 0
        %1792 = vmatpush.bf16.msra.mxu0 0
        %1793 = vmatpush.bf16.msra.mxu0 0
        %1794 = vmatpush.bf16.msra.mxu0 0
        %1795 = vmatpush.bf16.msra.mxu0 0
        %1796 = vmatpush.bf16.msra.mxu0 0
        %1797 = vmatpush.bf16.msra.mxu0 %v1788
        %1798 = vmatmul.bf16.gmra.mxu0 %v1786
        %v1799 = vpop.f32.mrf.mxu0
        %v1800 = vadd.f32 0.0, %v1799
        %v1801 = vpop.f32.mrf.mxu0
        %1802 = vdwg.mxu0
        %1803 = vrot.lane.b32.xlu0 %v1748, 112
        %v1804 = vpop.permute.xlu0 %1803
        %1805 = vrot.lane.b32.xlu0 %v1748, 48
        %v1806 = vpop.permute.xlu0 %1805
        %v1808 = vsel %vm643, %v1804, 0
        %v1811 = vsel %vm643, %v1806, 0
        %1813 = vmatpush.bf16.xpose.msra.mxu0 0
        %1814 = vmatpush.bf16.xpose.msra.mxu0 0
        %1815 = vmatpush.bf16.xpose.msra.mxu0 0
        %1816 = vmatpush.bf16.xpose.msra.mxu0 0
        %1817 = vmatpush.bf16.xpose.msra.mxu0 0
        %1818 = vmatpush.bf16.xpose.msra.mxu0 0
        %1819 = vmatpush.bf16.xpose.msra.mxu0 0
        %1820 = vmatpush.bf16.xpose.msra.mxu0 %v1811
        %1821 = vmatmul.bf16.gmra.mxu0 %v1808
        %v1822 = vpop.f32.mrf.mxu0
        %v1823 = vadd.f32 0.0, %v1822
        %v1824 = vpop.f32.mrf.mxu0
        %1825 = vdwg.mxu0
        %v1826 = vmul.f32 %v1823, 0.25
        %v1827 = vadd.f32 %v1826, %v545
        %v1828 = vsel %vm665, %v1827, -inf
        %1829 = vmax.xlane.f32.xlu0 %v1828
        %v1830 = vpop.xlane.xlu0 %1829
        %v1831 = vsub.f32 %v1827, %v1830
        %v1832 = vmul.f32 %v1831, 1.442695
        %v1833 = vpow.pop %v1832
        %v1834 = vsel %vm665, %v1833, 0.0
        %1835 = vadd.xlane.f32.xlu0 %v1834
        %v1836 = vpop.xlane.xlu0 %1835
        %v1837 = vrcp.pop %v1836
        %v1838 = vmul.f32 %v1833, %v1837
        %v1839 = vpack.c.bf16 %v1838, %v1838
        %v1841 = vsel %vm665, %v1839, 0
        %v1843 = vsel %vm681, %v1806, 0
        %1845 = vmatpush.bf16.msra.mxu0 0
        %1846 = vmatpush.bf16.msra.mxu0 0
        %1847 = vmatpush.bf16.msra.mxu0 0
        %1848 = vmatpush.bf16.msra.mxu0 0
        %1849 = vmatpush.bf16.msra.mxu0 0
        %1850 = vmatpush.bf16.msra.mxu0 0
        %1851 = vmatpush.bf16.msra.mxu0 0
        %1852 = vmatpush.bf16.msra.mxu0 %v1843
        %1853 = vmatmul.bf16.gmra.mxu0 %v1841
        %v1854 = vpop.f32.mrf.mxu0
        %v1855 = vadd.f32 0.0, %v1854
        %v1856 = vpop.f32.mrf.mxu0
        %1857 = vdwg.mxu0
        %1858 = vrot.lane.b32.xlu0 %v1748, 96
        %v1859 = vpop.permute.xlu0 %1858
        %1860 = vrot.lane.b32.xlu0 %v1748, 32
        %v1861 = vpop.permute.xlu0 %1860
        %v1863 = vsel %vm643, %v1859, 0
        %v1866 = vsel %vm643, %v1861, 0
        %1868 = vmatpush.bf16.xpose.msra.mxu0 0
        %1869 = vmatpush.bf16.xpose.msra.mxu0 0
        %1870 = vmatpush.bf16.xpose.msra.mxu0 0
        %1871 = vmatpush.bf16.xpose.msra.mxu0 0
        %1872 = vmatpush.bf16.xpose.msra.mxu0 0
        %1873 = vmatpush.bf16.xpose.msra.mxu0 0
        %1874 = vmatpush.bf16.xpose.msra.mxu0 0
        %1875 = vmatpush.bf16.xpose.msra.mxu0 %v1866
        %1876 = vmatmul.bf16.gmra.mxu0 %v1863
        %v1877 = vpop.f32.mrf.mxu0
        %v1878 = vadd.f32 0.0, %v1877
        %v1879 = vpop.f32.mrf.mxu0
        %1880 = vdwg.mxu0
        %v1881 = vmul.f32 %v1878, 0.25
        %v1882 = vadd.f32 %v1881, %v545
        %v1883 = vsel %vm665, %v1882, -inf
        %1884 = vmax.xlane.f32.xlu0 %v1883
        %v1885 = vpop.xlane.xlu0 %1884
        %v1886 = vsub.f32 %v1882, %v1885
        %v1887 = vmul.f32 %v1886, 1.442695
        %v1888 = vpow.pop %v1887
        %v1889 = vsel %vm665, %v1888, 0.0
        %1890 = vadd.xlane.f32.xlu0 %v1889
        %v1891 = vpop.xlane.xlu0 %1890
        %v1892 = vrcp.pop %v1891
        %v1893 = vmul.f32 %v1888, %v1892
        %v1894 = vpack.c.bf16 %v1893, %v1893
        %v1896 = vsel %vm665, %v1894, 0
        %v1898 = vsel %vm681, %v1861, 0
        %1900 = vmatpush.bf16.msra.mxu0 0
        %1901 = vmatpush.bf16.msra.mxu0 0
        %1902 = vmatpush.bf16.msra.mxu0 0
        %1903 = vmatpush.bf16.msra.mxu0 0
        %1904 = vmatpush.bf16.msra.mxu0 0
        %1905 = vmatpush.bf16.msra.mxu0 0
        %1906 = vmatpush.bf16.msra.mxu0 0
        %1907 = vmatpush.bf16.msra.mxu0 %v1898
        %1908 = vmatmul.bf16.gmra.mxu0 %v1896
        %v1909 = vpop.f32.mrf.mxu0
        %v1910 = vadd.f32 0.0, %v1909
        %v1911 = vpop.f32.mrf.mxu0
        %1912 = vdwg.mxu0
        %1913 = vrot.lane.b32.xlu0 %v1748, 80
        %v1914 = vpop.permute.xlu0 %1913
        %1915 = vrot.lane.b32.xlu0 %v1748, 16
        %v1916 = vpop.permute.xlu0 %1915
        %v1918 = vsel %vm643, %v1914, 0
        %v1921 = vsel %vm643, %v1916, 0
        %1923 = vmatpush.bf16.xpose.msra.mxu0 0
        %1924 = vmatpush.bf16.xpose.msra.mxu0 0
        %1925 = vmatpush.bf16.xpose.msra.mxu0 0
        %1926 = vmatpush.bf16.xpose.msra.mxu0 0
        %1927 = vmatpush.bf16.xpose.msra.mxu0 0
        %1928 = vmatpush.bf16.xpose.msra.mxu0 0
        %1929 = vmatpush.bf16.xpose.msra.mxu0 0
        %1930 = vmatpush.bf16.xpose.msra.mxu0 %v1921
        %1931 = vmatmul.bf16.gmra.mxu0 %v1918
        %v1932 = vpop.f32.mrf.mxu0
        %v1933 = vadd.f32 0.0, %v1932
        %v1934 = vpop.f32.mrf.mxu0
        %1935 = vdwg.mxu0
        %v1936 = vmul.f32 %v1933, 0.25
        %v1937 = vadd.f32 %v1936, %v545
        %v1938 = vsel %vm665, %v1937, -inf
        %1939 = vmax.xlane.f32.xlu0 %v1938
        %v1940 = vpop.xlane.xlu0 %1939
        %v1941 = vsub.f32 %v1937, %v1940
        %v1942 = vmul.f32 %v1941, 1.442695
        %v1943 = vpow.pop %v1942
        %v1944 = vsel %vm665, %v1943, 0.0
        %1945 = vadd.xlane.f32.xlu0 %v1944
        %v1946 = vpop.xlane.xlu0 %1945
        %v1947 = vrcp.pop %v1946
        %v1948 = vmul.f32 %v1943, %v1947
        %v1949 = vpack.c.bf16 %v1948, %v1948
        %v1951 = vsel %vm665, %v1949, 0
        %v1953 = vsel %vm681, %v1916, 0
        %1955 = vmatpush.bf16.msra.mxu0 0
        %1956 = vmatpush.bf16.msra.mxu0 0
        %1957 = vmatpush.bf16.msra.mxu0 0
        %1958 = vmatpush.bf16.msra.mxu0 0
        %1959 = vmatpush.bf16.msra.mxu0 0
        %1960 = vmatpush.bf16.msra.mxu0 0
        %1961 = vmatpush.bf16.msra.mxu0 0
        %1962 = vmatpush.bf16.msra.mxu0 %v1953
        %1963 = vmatmul.bf16.gmra.mxu0 %v1951
        %v1964 = vpop.f32.mrf.mxu0
        %v1965 = vadd.f32 0.0, %v1964
        %v1966 = vpop.f32.mrf.mxu0
        %1967 = vdwg.mxu0
        %1969 = vrot.lane.b32.xlu0 %v1855, 16
        %v1970 = vpop.permute.xlu0 %1969
        %1973 = vrot.lane.b32.xlu0 %v1910, 32
        %v1974 = vpop.permute.xlu0 %1973
        %1977 = vrot.lane.b32.xlu0 %v1965, 48
        %v1978 = vpop.permute.xlu0 %1977
        %v1980 = vsel %vm643, %v1800, %v1970
        %v1981 = vsel %vm875, %v1980, %v1974
        %v1982 = vsel %vm877, %v1981, %v1978
        %v1983 = vpack.c.bf16 %v1982, %v1982
        %s1984 = scalar_lea.vmem %s7, 64
        %v1985 = vld [vmem:[%s1984] sm:$0xf]
        %v1986 = vld [vmem:[%s1984 + $0x4] sm:$0xf]
        %v1987 = vld [vmem:[%s1984 + $0x8] sm:$0xf]
        %v1988 = vld [vmem:[%s1984 + $0xc] sm:$0xf]
        %v1989 = vld [vmem:[%s1984 + $0x10] sm:$0xf]
        %v1990 = vld [vmem:[%s1984 + $0x14] sm:$0xf]
        %v1991 = vld [vmem:[%s1984 + $0x18] sm:$0xf]
        %v1992 = vld [vmem:[%s1984 + $0x1c] sm:$0xf]
        %v2001 = vunpack.c.l.b16 %v1985
        %v2002 = vunpack.c.l.b16 %v1986
        %v2003 = vunpack.c.l.b16 %v1987
        %v2004 = vunpack.c.l.b16 %v1988
        %v2005 = vunpack.c.l.b16 %v1989
        %v2006 = vunpack.c.l.b16 %v1990
        %v2007 = vunpack.c.l.b16 %v1991
        %v2008 = vunpack.c.l.b16 %v1992
        %v2009 = vpack.c.b16 %v2002, %v2001
        %v2010 = vpack.c.b16 %v2004, %v2003
        %v2011 = vpack.c.b16 %v2006, %v2005
        %v2012 = vpack.c.b16 %v2008, %v2007
        %v2018 = vsel %vm548, %v1983, 0
        %2020 = vmatpush.bf16.msra.mxu0 0
        %2021 = vmatpush.bf16.msra.mxu0 0
        %2022 = vmatpush.bf16.msra.mxu0 0
        %2023 = vmatpush.bf16.msra.mxu0 0
        %2024 = vmatpush.bf16.msra.mxu0 %v2012
        %2025 = vmatpush.bf16.msra.mxu0 %v2011
        %2026 = vmatpush.bf16.msra.mxu0 %v2010
        %2027 = vmatpush.bf16.msra.mxu0 %v2009
        %2028 = vmatmul.bf16.gmra.mxu0 %v2018
        %v2029 = vpop.f32.mrf.mxu0
        %v2030 = vadd.f32 0.0, %v2029
        %v2031 = vpop.f32.mrf.mxu0
        %2032 = vdwg.mxu0
        %v2033 = vadd.f32 %v1658, %v2030
        %s2034 = scalar_lea.vmem %s8, 2
        %v2035 = vld [vmem:[%s2034] sm:$0x1]
        %v2037 = vperm.slane %v2035, 0
        %v2039 = vadd.f32 %v2033, %v2037
        %v2040 = vsel %vm548, %v2039, 0.0
        %2041 = vadd.xlane.f32.xlu0 %v2040
        %v2042 = vpop.xlane.xlu0 %2041
        %v2043 = vmul.f32 %v2042, %v558
        %v2044 = vsub.f32 %v2039, %v2043
        %v2045 = vmul.f32 %v2044, %v2044
        %v2046 = vsel %vm548, %v2045, 0.0
        %2047 = vadd.xlane.f32.xlu0 %v2046
        %v2048 = vpop.xlane.xlu0 %2047
        %v2049 = vmul.f32 %v2048, %v558
        %v2050 = vadd.f32 %v2049, 1e-05
        %v2051 = vrsqrt.pop %v2050
        %v2052 = vmul.f32 %v2051, %v2050
        %v2053 = vmul.f32 %v2052, %v2051
        %v2054 = vmul.f32 0.5, %v2053
        %v2055 = vsub.f32 1.5, %v2054
        %v2056 = vmul.f32 %v2051, %v2055
        %vm2057 = vweird.f32 %v2050
        %vm2058 = vweird.f32 %v2051
        %vm2059 = vmor %vm2057, %vm2058
        %v2060 = vsel %vm2059, %v2051, %v2056
        %v2061 = vmul.f32 %v2044, %v2060
        %v2062 = vmul.f32 %v2061, %v1686
        %v2063 = vadd.f32 %v2062, %v1690
        %v2064 = vpack.c.bf16 %v2063, %v2063
        %s2065 = scalar_lea.vmem %s9, 64
        %v2066 = vld [vmem:[%s2065] sm:$0xf]
        %v2067 = vld [vmem:[%s2065 + $0x4] sm:$0xf]
        %v2068 = vld [vmem:[%s2065 + $0x8] sm:$0xf]
        %v2069 = vld [vmem:[%s2065 + $0xc] sm:$0xf]
        %v2070 = vld [vmem:[%s2065 + $0x10] sm:$0xf]
        %v2071 = vld [vmem:[%s2065 + $0x14] sm:$0xf]
        %v2072 = vld [vmem:[%s2065 + $0x18] sm:$0xf]
        %v2073 = vld [vmem:[%s2065 + $0x1c] sm:$0xf]
        %s2074 = scalar_lea.vmem %s10, 2
        %v2075 = vld [vmem:[%s2074] sm:$0x1]
        %v2077 = vperm.slane %v2075, 0
        %v2087 = vunpack.c.l.b16 %v2066
        %v2088 = vunpack.c.l.b16 %v2067
        %v2089 = vunpack.c.l.b16 %v2068
        %v2090 = vunpack.c.l.b16 %v2069
        %v2091 = vunpack.c.l.b16 %v2070
        %v2092 = vunpack.c.l.b16 %v2071
        %v2093 = vunpack.c.l.b16 %v2072
        %v2094 = vunpack.c.l.b16 %v2073
        %v2095 = vpack.c.b16 %v2088, %v2087
        %v2096 = vpack.c.b16 %v2090, %v2089
        %v2097 = vpack.c.b16 %v2092, %v2091
        %v2098 = vpack.c.b16 %v2094, %v2093
        %v2104 = vsel %vm548, %v2064, 0
        %2106 = vmatpush.bf16.msra.mxu0 0
        %2107 = vmatpush.bf16.msra.mxu0 0
        %2108 = vmatpush.bf16.msra.mxu0 0
        %2109 = vmatpush.bf16.msra.mxu0 0
        %2110 = vmatpush.bf16.msra.mxu0 %v2098
        %2111 = vmatpush.bf16.msra.mxu0 %v2097
        %2112 = vmatpush.bf16.msra.mxu0 %v2096
        %2113 = vmatpush.bf16.msra.mxu0 %v2095
        %2114 = vmatmul.bf16.gmra.mxu0 %v2104
        %v2115 = vpop.f32.mrf.mxu0
        %v2116 = vadd.f32 %v2077, %v2115
        %v2117 = vpop.f32.mrf.mxu0
        %2118 = vdwg.mxu0
        %v2119 = vmul.f32 %v2116, %v2116
        %v2120 = vmul.f32 %v2116, %v2119
        %v2121 = vmul.f32 %v2120, 0.044715
        %v2122 = vadd.f32 %v2116, %v2121
        %v2123 = vmul.f32 %v2122, 0.7978846
        %v2124 = vtanh.pop %v2123
        %v2125 = vadd.f32 %v2124, 1.0
        %v2126 = vmul.f32 %v2125, 0.5
        %v2127 = vmul.f32 %v2116, %v2126
        %v2128 = vpack.c.bf16 %v2127, %v2127
        %s2129 = scalar_lea.vmem %s11, 128
        %v2130 = vld [vmem:[%s2129] sm:$0xf]
        %v2131 = vld [vmem:[%s2129 + $0x4] sm:$0xf]
        %v2132 = vld [vmem:[%s2129 + $0x8] sm:$0xf]
        %v2133 = vld [vmem:[%s2129 + $0xc] sm:$0xf]
        %v2134 = vld [vmem:[%s2129 + $0x10] sm:$0xf]
        %v2135 = vld [vmem:[%s2129 + $0x14] sm:$0xf]
        %v2136 = vld [vmem:[%s2129 + $0x18] sm:$0xf]
        %v2137 = vld [vmem:[%s2129 + $0x1c] sm:$0xf]
        %v2138 = vld [vmem:[%s2129 + $0x20] sm:$0xf]
        %v2139 = vld [vmem:[%s2129 + $0x24] sm:$0xf]
        %v2140 = vld [vmem:[%s2129 + $0x28] sm:$0xf]
        %v2141 = vld [vmem:[%s2129 + $0x2c] sm:$0xf]
        %v2142 = vld [vmem:[%s2129 + $0x30] sm:$0xf]
        %v2143 = vld [vmem:[%s2129 + $0x34] sm:$0xf]
        %v2144 = vld [vmem:[%s2129 + $0x38] sm:$0xf]
        %v2145 = vld [vmem:[%s2129 + $0x3c] sm:$0xf]
        %v2162 = vunpack.c.l.b16 %v2130
        %v2163 = vunpack.c.l.b16 %v2131
        %v2164 = vunpack.c.l.b16 %v2132
        %v2165 = vunpack.c.l.b16 %v2133
        %v2166 = vunpack.c.l.b16 %v2134
        %v2167 = vunpack.c.l.b16 %v2135
        %v2168 = vunpack.c.l.b16 %v2136
        %v2169 = vunpack.c.l.b16 %v2137
        %v2170 = vunpack.c.l.b16 %v2138
        %v2171 = vunpack.c.l.b16 %v2139
        %v2172 = vunpack.c.l.b16 %v2140
        %v2173 = vunpack.c.l.b16 %v2141
        %v2174 = vunpack.c.l.b16 %v2142
        %v2175 = vunpack.c.l.b16 %v2143
        %v2176 = vunpack.c.l.b16 %v2144
        %v2177 = vunpack.c.l.b16 %v2145
        %v2178 = vpack.c.b16 %v2163, %v2162
        %v2179 = vpack.c.b16 %v2165, %v2164
        %v2180 = vpack.c.b16 %v2167, %v2166
        %v2181 = vpack.c.b16 %v2169, %v2168
        %v2182 = vpack.c.b16 %v2171, %v2170
        %v2183 = vpack.c.b16 %v2173, %v2172
        %v2184 = vpack.c.b16 %v2175, %v2174
        %v2185 = vpack.c.b16 %v2177, %v2176
        %2194 = vmatpush.bf16.msra.mxu0 %v2185
        %2195 = vmatpush.bf16.msra.mxu0 %v2184
        %2196 = vmatpush.bf16.msra.mxu0 %v2183
        %2197 = vmatpush.bf16.msra.mxu0 %v2182
        %2198 = vmatpush.bf16.msra.mxu0 %v2181
        %2199 = vmatpush.bf16.msra.mxu0 %v2180
        %2200 = vmatpush.bf16.msra.mxu0 %v2179
        %2201 = vmatpush.bf16.msra.mxu0 %v2178
        %2202 = vmatmul.bf16.gmra.mxu0 %v2128
        %v2203 = vpop.f32.mrf.mxu0
        %v2204 = vadd.f32 0.0, %v2203
        %v2205 = vpop.f32.mrf.mxu0
        %2206 = vdwg.mxu0
        %v2207 = vadd.f32 %v2039, %v2204
        %s2208 = scalar_lea.vmem %s12, 2
        %v2209 = vld [vmem:[%s2208] sm:$0x1]
        %v2211 = vperm.slane %v2209, 0
        %v2213 = vadd.f32 %v2207, %v2211
        %s2214 = scalar_lea.vmem %s3, 3
        %v2215 = vld [vmem:[%s2214] sm:$0x1]
        %s2216 = scalar_lea.vmem %s4, 3
        %v2217 = vld [vmem:[%s2216] sm:$0x1]
        %v2218 = vsel %vm548, %v2213, 0.0
        %2219 = vadd.xlane.f32.xlu0 %v2218
        %v2220 = vpop.xlane.xlu0 %2219
        %v2221 = vmul.f32 %v2220, %v558
        %v2222 = vsub.f32 %v2213, %v2221
        %v2223 = vmul.f32 %v2222, %v2222
        %v2224 = vsel %vm548, %v2223, 0.0
        %2225 = vadd.xlane.f32.xlu0 %v2224
        %v2226 = vpop.xlane.xlu0 %2225
        %v2227 = vmul.f32 %v2226, %v558
        %v2228 = vadd.f32 %v2227, 1e-05
        %v2229 = vrsqrt.pop %v2228
        %v2230 = vmul.f32 %v2229, %v2228
        %v2231 = vmul.f32 %v2230, %v2229
        %v2232 = vmul.f32 0.5, %v2231
        %v2233 = vsub.f32 1.5, %v2232
        %v2234 = vmul.f32 %v2229, %v2233
        %vm2235 = vweird.f32 %v2228
        %vm2236 = vweird.f32 %v2229
        %vm2237 = vmor %vm2235, %vm2236
        %v2238 = vsel %vm2237, %v2229, %v2234
        %v2239 = vmul.f32 %v2222, %v2238
        %v2241 = vperm.slane %v2215, 0
        %v2243 = vmul.f32 %v2239, %v2241
        %v2245 = vperm.slane %v2217, 0
        %v2247 = vadd.f32 %v2243, %v2245
        %v2248 = vpack.c.bf16 %v2247, %v2247
        %s2249 = scalar_lea.vmem %s5, 96
        %v2250 = vld [vmem:[%s2249] sm:$0xf]
        %v2251 = vld [vmem:[%s2249 + $0x4] sm:$0xf]
        %v2252 = vld [vmem:[%s2249 + $0x8] sm:$0xf]
        %v2253 = vld [vmem:[%s2249 + $0xc] sm:$0xf]
        %v2254 = vld [vmem:[%s2249 + $0x10] sm:$0xf]
        %v2255 = vld [vmem:[%s2249 + $0x14] sm:$0xf]
        %v2256 = vld [vmem:[%s2249 + $0x18] sm:$0xf]
        %v2257 = vld [vmem:[%s2249 + $0x1c] sm:$0xf]
        %s2258 = scalar_lea.vmem %s6, 3
        %v2259 = vld [vmem:[%s2258] sm:$0x1]
        %v2261 = vperm.slane %v2259, 0
        %v2271 = vunpack.c.l.b16 %v2250
        %v2272 = vunpack.c.l.b16 %v2251
        %v2273 = vunpack.c.l.b16 %v2252
        %v2274 = vunpack.c.l.b16 %v2253
        %v2275 = vunpack.c.l.b16 %v2254
        %v2276 = vunpack.c.l.b16 %v2255
        %v2277 = vunpack.c.l.b16 %v2256
        %v2278 = vunpack.c.l.b16 %v2257
        %v2279 = vpack.c.b16 %v2272, %v2271
        %v2280 = vpack.c.b16 %v2274, %v2273
        %v2281 = vpack.c.b16 %v2276, %v2275
        %v2282 = vpack.c.b16 %v2278, %v2277
        %v2288 = vsel %vm548, %v2248, 0
        %2290 = vmatpush.bf16.msra.mxu0 0
        %2291 = vmatpush.bf16.msra.mxu0 0
        %2292 = vmatpush.bf16.msra.mxu0 0
        %2293 = vmatpush.bf16.msra.mxu0 0
        %2294 = vmatpush.bf16.msra.mxu0 %v2282
        %2295 = vmatpush.bf16.msra.mxu0 %v2281
        %2296 = vmatpush.bf16.msra.mxu0 %v2280
        %2297 = vmatpush.bf16.msra.mxu0 %v2279
        %2298 = vmatmul.bf16.gmra.mxu0 %v2288
        %v2299 = vpop.f32.mrf.mxu0
        %v2300 = vadd.f32 %v2261, %v2299
        %v2301 = vpop.f32.mrf.mxu0
        %2302 = vdwg.mxu0
        %v2303 = vpack.c.bf16 %v2300, %v2300
        %2305 = vrot.lane.b32.xlu0 %v2303, 64
        %v2306 = vpop.permute.xlu0 %2305
        %v2308 = vsel %vm643, %v2303, 0
        %v2311 = vsel %vm643, %v2306, 0
        %2313 = vmatpush.bf16.xpose.msra.mxu0 0
        %2314 = vmatpush.bf16.xpose.msra.mxu0 0
        %2315 = vmatpush.bf16.xpose.msra.mxu0 0
        %2316 = vmatpush.bf16.xpose.msra.mxu0 0
        %2317 = vmatpush.bf16.xpose.msra.mxu0 0
        %2318 = vmatpush.bf16.xpose.msra.mxu0 0
        %2319 = vmatpush.bf16.xpose.msra.mxu0 0
        %2320 = vmatpush.bf16.xpose.msra.mxu0 %v2311
        %2321 = vmatmul.bf16.gmra.mxu0 %v2308
        %v2322 = vpop.f32.mrf.mxu0
        %v2323 = vadd.f32 0.0, %v2322
        %v2324 = vpop.f32.mrf.mxu0
        %2325 = vdwg.mxu0
        %v2326 = vmul.f32 %v2323, 0.25
        %v2327 = vadd.f32 %v2326, %v545
        %v2328 = vsel %vm665, %v2327, -inf
        %2329 = vmax.xlane.f32.xlu0 %v2328
        %v2330 = vpop.xlane.xlu0 %2329
        %v2331 = vsub.f32 %v2327, %v2330
        %v2332 = vmul.f32 %v2331, 1.442695
        %v2333 = vpow.pop %v2332
        %v2334 = vsel %vm665, %v2333, 0.0
        %2335 = vadd.xlane.f32.xlu0 %v2334
        %v2336 = vpop.xlane.xlu0 %2335
        %v2337 = vrcp.pop %v2336
        %v2338 = vmul.f32 %v2333, %v2337
        %v2339 = vpack.c.bf16 %v2338, %v2338
        %v2341 = vsel %vm665, %v2339, 0
        %v2343 = vsel %vm681, %v2306, 0
        %2345 = vmatpush.bf16.msra.mxu0 0
        %2346 = vmatpush.bf16.msra.mxu0 0
        %2347 = vmatpush.bf16.msra.mxu0 0
        %2348 = vmatpush.bf16.msra.mxu0 0
        %2349 = vmatpush.bf16.msra.mxu0 0
        %2350 = vmatpush.bf16.msra.mxu0 0
        %2351 = vmatpush.bf16.msra.mxu0 0
        %2352 = vmatpush.bf16.msra.mxu0 %v2343
        %2353 = vmatmul.bf16.gmra.mxu0 %v2341
        %v2354 = vpop.f32.mrf.mxu0
        %v2355 = vadd.f32 0.0, %v2354
        %v2356 = vpop.f32.mrf.mxu0
        %2357 = vdwg.mxu0
        %2358 = vrot.lane.b32.xlu0 %v2303, 112
        %v2359 = vpop.permute.xlu0 %2358
        %2360 = vrot.lane.b32.xlu0 %v2303, 48
        %v2361 = vpop.permute.xlu0 %2360
        %v2363 = vsel %vm643, %v2359, 0
        %v2366 = vsel %vm643, %v2361, 0
        %2368 = vmatpush.bf16.xpose.msra.mxu0 0
        %2369 = vmatpush.bf16.xpose.msra.mxu0 0
        %2370 = vmatpush.bf16.xpose.msra.mxu0 0
        %2371 = vmatpush.bf16.xpose.msra.mxu0 0
        %2372 = vmatpush.bf16.xpose.msra.mxu0 0
        %2373 = vmatpush.bf16.xpose.msra.mxu0 0
        %2374 = vmatpush.bf16.xpose.msra.mxu0 0
        %2375 = vmatpush.bf16.xpose.msra.mxu0 %v2366
        %2376 = vmatmul.bf16.gmra.mxu0 %v2363
        %v2377 = vpop.f32.mrf.mxu0
        %v2378 = vadd.f32 0.0, %v2377
        %v2379 = vpop.f32.mrf.mxu0
        %2380 = vdwg.mxu0
        %v2381 = vmul.f32 %v2378, 0.25
        %v2382 = vadd.f32 %v2381, %v545
        %v2383 = vsel %vm665, %v2382, -inf
        %2384 = vmax.xlane.f32.xlu0 %v2383
        %v2385 = vpop.xlane.xlu0 %2384
        %v2386 = vsub.f32 %v2382, %v2385
        %v2387 = vmul.f32 %v2386, 1.442695
        %v2388 = vpow.pop %v2387
        %v2389 = vsel %vm665, %v2388, 0.0
        %2390 = vadd.xlane.f32.xlu0 %v2389
        %v2391 = vpop.xlane.xlu0 %2390
        %v2392 = vrcp.pop %v2391
        %v2393 = vmul.f32 %v2388, %v2392
        %v2394 = vpack.c.bf16 %v2393, %v2393
        %v2396 = vsel %vm665, %v2394, 0
        %v2398 = vsel %vm681, %v2361, 0
        %2400 = vmatpush.bf16.msra.mxu0 0
        %2401 = vmatpush.bf16.msra.mxu0 0
        %2402 = vmatpush.bf16.msra.mxu0 0
        %2403 = vmatpush.bf16.msra.mxu0 0
        %2404 = vmatpush.bf16.msra.mxu0 0
        %2405 = vmatpush.bf16.msra.mxu0 0
        %2406 = vmatpush.bf16.msra.mxu0 0
        %2407 = vmatpush.bf16.msra.mxu0 %v2398
        %2408 = vmatmul.bf16.gmra.mxu0 %v2396
        %v2409 = vpop.f32.mrf.mxu0
        %v2410 = vadd.f32 0.0, %v2409
        %v2411 = vpop.f32.mrf.mxu0
        %2412 = vdwg.mxu0
        %2413 = vrot.lane.b32.xlu0 %v2303, 96
        %v2414 = vpop.permute.xlu0 %2413
        %2415 = vrot.lane.b32.xlu0 %v2303, 32
        %v2416 = vpop.permute.xlu0 %2415
        %v2418 = vsel %vm643, %v2414, 0
        %v2421 = vsel %vm643, %v2416, 0
        %2423 = vmatpush.bf16.xpose.msra.mxu0 0
        %2424 = vmatpush.bf16.xpose.msra.mxu0 0
        %2425 = vmatpush.bf16.xpose.msra.mxu0 0
        %2426 = vmatpush.bf16.xpose.msra.mxu0 0
        %2427 = vmatpush.bf16.xpose.msra.mxu0 0
        %2428 = vmatpush.bf16.xpose.msra.mxu0 0
        %2429 = vmatpush.bf16.xpose.msra.mxu0 0
        %2430 = vmatpush.bf16.xpose.msra.mxu0 %v2421
        %2431 = vmatmul.bf16.gmra.mxu0 %v2418
        %v2432 = vpop.f32.mrf.mxu0
        %v2433 = vadd.f32 0.0, %v2432
        %v2434 = vpop.f32.mrf.mxu0
        %2435 = vdwg.mxu0
        %v2436 = vmul.f32 %v2433, 0.25
        %v2437 = vadd.f32 %v2436, %v545
        %v2438 = vsel %vm665, %v2437, -inf
        %2439 = vmax.xlane.f32.xlu0 %v2438
        %v2440 = vpop.xlane.xlu0 %2439
        %v2441 = vsub.f32 %v2437, %v2440
        %v2442 = vmul.f32 %v2441, 1.442695
        %v2443 = vpow.pop %v2442
        %v2444 = vsel %vm665, %v2443, 0.0
        %2445 = vadd.xlane.f32.xlu0 %v2444
        %v2446 = vpop.xlane.xlu0 %2445
        %v2447 = vrcp.pop %v2446
        %v2448 = vmul.f32 %v2443, %v2447
        %v2449 = vpack.c.bf16 %v2448, %v2448
        %v2451 = vsel %vm665, %v2449, 0
        %v2453 = vsel %vm681, %v2416, 0
        %2455 = vmatpush.bf16.msra.mxu0 0
        %2456 = vmatpush.bf16.msra.mxu0 0
        %2457 = vmatpush.bf16.msra.mxu0 0
        %2458 = vmatpush.bf16.msra.mxu0 0
        %2459 = vmatpush.bf16.msra.mxu0 0
        %2460 = vmatpush.bf16.msra.mxu0 0
        %2461 = vmatpush.bf16.msra.mxu0 0
        %2462 = vmatpush.bf16.msra.mxu0 %v2453
        %2463 = vmatmul.bf16.gmra.mxu0 %v2451
        %v2464 = vpop.f32.mrf.mxu0
        %v2465 = vadd.f32 0.0, %v2464
        %v2466 = vpop.f32.mrf.mxu0
        %2467 = vdwg.mxu0
        %2468 = vrot.lane.b32.xlu0 %v2303, 80
        %v2469 = vpop.permute.xlu0 %2468
        %2470 = vrot.lane.b32.xlu0 %v2303, 16
        %v2471 = vpop.permute.xlu0 %2470
        %v2473 = vsel %vm643, %v2469, 0
        %v2476 = vsel %vm643, %v2471, 0
        %2478 = vmatpush.bf16.xpose.msra.mxu0 0
        %2479 = vmatpush.bf16.xpose.msra.mxu0 0
        %2480 = vmatpush.bf16.xpose.msra.mxu0 0
        %2481 = vmatpush.bf16.xpose.msra.mxu0 0
        %2482 = vmatpush.bf16.xpose.msra.mxu0 0
        %2483 = vmatpush.bf16.xpose.msra.mxu0 0
        %2484 = vmatpush.bf16.xpose.msra.mxu0 0
        %2485 = vmatpush.bf16.xpose.msra.mxu0 %v2476
        %2486 = vmatmul.bf16.gmra.mxu0 %v2473
        %v2487 = vpop.f32.mrf.mxu0
        %v2488 = vadd.f32 0.0, %v2487
        %v2489 = vpop.f32.mrf.mxu0
        %2490 = vdwg.mxu0
        %v2491 = vmul.f32 %v2488, 0.25
        %v2492 = vadd.f32 %v2491, %v545
        %v2493 = vsel %vm665, %v2492, -inf
        %2494 = vmax.xlane.f32.xlu0 %v2493
        %v2495 = vpop.xlane.xlu0 %2494
        %v2496 = vsub.f32 %v2492, %v2495
        %v2497 = vmul.f32 %v2496, 1.442695
        %v2498 = vpow.pop %v2497
        %v2499 = vsel %vm665, %v2498, 0.0
        %2500 = vadd.xlane.f32.xlu0 %v2499
        %v2501 = vpop.xlane.xlu0 %2500
        %v2502 = vrcp.pop %v2501
        %v2503 = vmul.f32 %v2498, %v2502
        %v2504 = vpack.c.bf16 %v2503, %v2503
        %v2506 = vsel %vm665, %v2504, 0
        %v2508 = vsel %vm681, %v2471, 0
        %2510 = vmatpush.bf16.msra.mxu0 0
        %2511 = vmatpush.bf16.msra.mxu0 0
        %2512 = vmatpush.bf16.msra.mxu0 0
        %2513 = vmatpush.bf16.msra.mxu0 0
        %2514 = vmatpush.bf16.msra.mxu0 0
        %2515 = vmatpush.bf16.msra.mxu0 0
        %2516 = vmatpush.bf16.msra.mxu0 0
        %2517 = vmatpush.bf16.msra.mxu0 %v2508
        %2518 = vmatmul.bf16.gmra.mxu0 %v2506
        %v2519 = vpop.f32.mrf.mxu0
        %v2520 = vadd.f32 0.0, %v2519
        %v2521 = vpop.f32.mrf.mxu0
        %2522 = vdwg.mxu0
        %2524 = vrot.lane.b32.xlu0 %v2410, 16
        %v2525 = vpop.permute.xlu0 %2524
        %2528 = vrot.lane.b32.xlu0 %v2465, 32
        %v2529 = vpop.permute.xlu0 %2528
        %2532 = vrot.lane.b32.xlu0 %v2520, 48
        %v2533 = vpop.permute.xlu0 %2532
        %v2535 = vsel %vm643, %v2355, %v2525
        %v2536 = vsel %vm875, %v2535, %v2529
        %v2537 = vsel %vm877, %v2536, %v2533
        %v2538 = vpack.c.bf16 %v2537, %v2537
        %s2539 = scalar_lea.vmem %s7, 96
        %v2540 = vld [vmem:[%s2539] sm:$0xf]
        %v2541 = vld [vmem:[%s2539 + $0x4] sm:$0xf]
        %v2542 = vld [vmem:[%s2539 + $0x8] sm:$0xf]
        %v2543 = vld [vmem:[%s2539 + $0xc] sm:$0xf]
        %v2544 = vld [vmem:[%s2539 + $0x10] sm:$0xf]
        %v2545 = vld [vmem:[%s2539 + $0x14] sm:$0xf]
        %v2546 = vld [vmem:[%s2539 + $0x18] sm:$0xf]
        %v2547 = vld [vmem:[%s2539 + $0x1c] sm:$0xf]
        %v2556 = vunpack.c.l.b16 %v2540
        %v2557 = vunpack.c.l.b16 %v2541
        %v2558 = vunpack.c.l.b16 %v2542
        %v2559 = vunpack.c.l.b16 %v2543
        %v2560 = vunpack.c.l.b16 %v2544
        %v2561 = vunpack.c.l.b16 %v2545
        %v2562 = vunpack.c.l.b16 %v2546
        %v2563 = vunpack.c.l.b16 %v2547
        %v2564 = vpack.c.b16 %v2557, %v2556
        %v2565 = vpack.c.b16 %v2559, %v2558
        %v2566 = vpack.c.b16 %v2561, %v2560
        %v2567 = vpack.c.b16 %v2563, %v2562
        %v2573 = vsel %vm548, %v2538, 0
        %2575 = vmatpush.bf16.msra.mxu0 0
        %2576 = vmatpush.bf16.msra.mxu0 0
        %2577 = vmatpush.bf16.msra.mxu0 0
        %2578 = vmatpush.bf16.msra.mxu0 0
        %2579 = vmatpush.bf16.msra.mxu0 %v2567
        %2580 = vmatpush.bf16.msra.mxu0 %v2566
        %2581 = vmatpush.bf16.msra.mxu0 %v2565
        %2582 = vmatpush.bf16.msra.mxu0 %v2564
        %2583 = vmatmul.bf16.gmra.mxu0 %v2573
        %v2584 = vpop.f32.mrf.mxu0
        %v2585 = vadd.f32 0.0, %v2584
        %v2586 = vpop.f32.mrf.mxu0
        %2587 = vdwg.mxu0
        %v2588 = vadd.f32 %v2213, %v2585
        %s2589 = scalar_lea.vmem %s8, 3
        %v2590 = vld [vmem:[%s2589] sm:$0x1]
        %v2592 = vperm.slane %v2590, 0
        %v2594 = vadd.f32 %v2588, %v2592
        %v2595 = vsel %vm548, %v2594, 0.0
        %2596 = vadd.xlane.f32.xlu0 %v2595
        %v2597 = vpop.xlane.xlu0 %2596
        %v2598 = vmul.f32 %v2597, %v558
        %v2599 = vsub.f32 %v2594, %v2598
        %v2600 = vmul.f32 %v2599, %v2599
        %v2601 = vsel %vm548, %v2600, 0.0
        %2602 = vadd.xlane.f32.xlu0 %v2601
        %v2603 = vpop.xlane.xlu0 %2602
        %v2604 = vmul.f32 %v2603, %v558
        %v2605 = vadd.f32 %v2604, 1e-05
        %v2606 = vrsqrt.pop %v2605
        %v2607 = vmul.f32 %v2606, %v2605
        %v2608 = vmul.f32 %v2607, %v2606
        %v2609 = vmul.f32 0.5, %v2608
        %v2610 = vsub.f32 1.5, %v2609
        %v2611 = vmul.f32 %v2606, %v2610
        %vm2612 = vweird.f32 %v2605
        %vm2613 = vweird.f32 %v2606
        %vm2614 = vmor %vm2612, %vm2613
        %v2615 = vsel %vm2614, %v2606, %v2611
        %v2616 = vmul.f32 %v2599, %v2615
        %v2617 = vmul.f32 %v2616, %v2241
        %v2618 = vadd.f32 %v2617, %v2245
        %v2619 = vpack.c.bf16 %v2618, %v2618
        %s2620 = scalar_lea.vmem %s9, 96
        %v2621 = vld [vmem:[%s2620] sm:$0xf]
        %v2622 = vld [vmem:[%s2620 + $0x4] sm:$0xf]
        %v2623 = vld [vmem:[%s2620 + $0x8] sm:$0xf]
        %v2624 = vld [vmem:[%s2620 + $0xc] sm:$0xf]
        %v2625 = vld [vmem:[%s2620 + $0x10] sm:$0xf]
        %v2626 = vld [vmem:[%s2620 + $0x14] sm:$0xf]
        %v2627 = vld [vmem:[%s2620 + $0x18] sm:$0xf]
        %v2628 = vld [vmem:[%s2620 + $0x1c] sm:$0xf]
        %s2629 = scalar_lea.vmem %s10, 3
        %v2630 = vld [vmem:[%s2629] sm:$0x1]
        %v2632 = vperm.slane %v2630, 0
        %v2642 = vunpack.c.l.b16 %v2621
        %v2643 = vunpack.c.l.b16 %v2622
        %v2644 = vunpack.c.l.b16 %v2623
        %v2645 = vunpack.c.l.b16 %v2624
        %v2646 = vunpack.c.l.b16 %v2625
        %v2647 = vunpack.c.l.b16 %v2626
        %v2648 = vunpack.c.l.b16 %v2627
        %v2649 = vunpack.c.l.b16 %v2628
        %v2650 = vpack.c.b16 %v2643, %v2642
        %v2651 = vpack.c.b16 %v2645, %v2644
        %v2652 = vpack.c.b16 %v2647, %v2646
        %v2653 = vpack.c.b16 %v2649, %v2648
        %v2659 = vsel %vm548, %v2619, 0
        %2661 = vmatpush.bf16.msra.mxu0 0
        %2662 = vmatpush.bf16.msra.mxu0 0
        %2663 = vmatpush.bf16.msra.mxu0 0
        %2664 = vmatpush.bf16.msra.mxu0 0
        %2665 = vmatpush.bf16.msra.mxu0 %v2653
        %2666 = vmatpush.bf16.msra.mxu0 %v2652
        %2667 = vmatpush.bf16.msra.mxu0 %v2651
        %2668 = vmatpush.bf16.msra.mxu0 %v2650
        %2669 = vmatmul.bf16.gmra.mxu0 %v2659
        %v2670 = vpop.f32.mrf.mxu0
        %v2671 = vadd.f32 %v2632, %v2670
        %v2672 = vpop.f32.mrf.mxu0
        %2673 = vdwg.mxu0
        %v2674 = vmul.f32 %v2671, %v2671
        %v2675 = vmul.f32 %v2671, %v2674
        %v2676 = vmul.f32 %v2675, 0.044715
        %v2677 = vadd.f32 %v2671, %v2676
        %v2678 = vmul.f32 %v2677, 0.7978846
        %v2679 = vtanh.pop %v2678
        %v2680 = vadd.f32 %v2679, 1.0
        %v2681 = vmul.f32 %v2680, 0.5
        %v2682 = vmul.f32 %v2671, %v2681
        %v2683 = vpack.c.bf16 %v2682, %v2682
        %s2684 = scalar_lea.vmem %s11, 192
        %v2685 = vld [vmem:[%s2684] sm:$0xf]
        %v2686 = vld [vmem:[%s2684 + $0x4] sm:$0xf]
        %v2687 = vld [vmem:[%s2684 + $0x8] sm:$0xf]
        %v2688 = vld [vmem:[%s2684 + $0xc] sm:$0xf]
        %v2689 = vld [vmem:[%s2684 + $0x10] sm:$0xf]
        %v2690 = vld [vmem:[%s2684 + $0x14] sm:$0xf]
        %v2691 = vld [vmem:[%s2684 + $0x18] sm:$0xf]
        %v2692 = vld [vmem:[%s2684 + $0x1c] sm:$0xf]
        %v2693 = vld [vmem:[%s2684 + $0x20] sm:$0xf]
        %v2694 = vld [vmem:[%s2684 + $0x24] sm:$0xf]
        %v2695 = vld [vmem:[%s2684 + $0x28] sm:$0xf]
        %v2696 = vld [vmem:[%s2684 + $0x2c] sm:$0xf]
        %v2697 = vld [vmem:[%s2684 + $0x30] sm:$0xf]
        %v2698 = vld [vmem:[%s2684 + $0x34] sm:$0xf]
        %v2699 = vld [vmem:[%s2684 + $0x38] sm:$0xf]
        %v2700 = vld [vmem:[%s2684 + $0x3c] sm:$0xf]
        %v2717 = vunpack.c.l.b16 %v2685
        %v2718 = vunpack.c.l.b16 %v2686
        %v2719 = vunpack.c.l.b16 %v2687
        %v2720 = vunpack.c.l.b16 %v2688
        %v2721 = vunpack.c.l.b16 %v2689
        %v2722 = vunpack.c.l.b16 %v2690
        %v2723 = vunpack.c.l.b16 %v2691
        %v2724 = vunpack.c.l.b16 %v2692
        %v2725 = vunpack.c.l.b16 %v2693
        %v2726 = vunpack.c.l.b16 %v2694
        %v2727 = vunpack.c.l.b16 %v2695
        %v2728 = vunpack.c.l.b16 %v2696
        %v2729 = vunpack.c.l.b16 %v2697
        %v2730 = vunpack.c.l.b16 %v2698
        %v2731 = vunpack.c.l.b16 %v2699
        %v2732 = vunpack.c.l.b16 %v2700
        %v2733 = vpack.c.b16 %v2718, %v2717
        %v2734 = vpack.c.b16 %v2720, %v2719
        %v2735 = vpack.c.b16 %v2722, %v2721
        %v2736 = vpack.c.b16 %v2724, %v2723
        %v2737 = vpack.c.b16 %v2726, %v2725
        %v2738 = vpack.c.b16 %v2728, %v2727
        %v2739 = vpack.c.b16 %v2730, %v2729
        %v2740 = vpack.c.b16 %v2732, %v2731
        %2749 = vmatpush.bf16.msra.mxu0 %v2740
        %2750 = vmatpush.bf16.msra.mxu0 %v2739
        %2751 = vmatpush.bf16.msra.mxu0 %v2738
        %2752 = vmatpush.bf16.msra.mxu0 %v2737
        %2753 = vmatpush.bf16.msra.mxu0 %v2736
        %2754 = vmatpush.bf16.msra.mxu0 %v2735
        %2755 = vmatpush.bf16.msra.mxu0 %v2734
        %2756 = vmatpush.bf16.msra.mxu0 %v2733
        %2757 = vmatmul.bf16.gmra.mxu0 %v2683
        %v2758 = vpop.f32.mrf.mxu0
        %v2759 = vadd.f32 0.0, %v2758
        %v2760 = vpop.f32.mrf.mxu0
        %2761 = vdwg.mxu0
        %v2762 = vadd.f32 %v2594, %v2759
        %s2763 = scalar_lea.vmem %s12, 3
        %v2764 = vld [vmem:[%s2763] sm:$0x1]
        %v2766 = vperm.slane %v2764, 0
        %v2768 = vadd.f32 %v2762, %v2766
        %v2769 = vld [vmem:[%s2] sm:$0xff]
        %v2771 = vsel %vm665, %v2769, 0
        %2773 = vmatpush.msra.mxu0 0.0
        %2774 = vmatpush.msra.mxu0 0.0
        %2775 = vmatpush.msra.mxu0 0.0
        %2776 = vmatpush.msra.mxu0 0.0
        %2777 = vmatpush.msra.mxu0 0.0
        %2778 = vmatpush.msra.mxu0 0.0
        %2779 = vmatpush.msra.mxu0 0.0
        %2780 = vmatpush.msra.mxu0 0.0
        %2781 = vmatpush.msra.mxu0 0.0
        %2782 = vmatpush.msra.mxu0 0.0
        %2783 = vmatpush.msra.mxu0 0.0
        %2784 = vmatpush.msra.mxu0 0.0
        %2785 = vmatpush.msra.mxu0 0.0
        %2786 = vmatpush.msra.mxu0 0.0
        %2787 = vmatpush.msra.mxu0 0.0
        %2788 = vmatpush.msra.mxu0 %v2768
        %2789 = vmatmul.f32.gmra.mxu0 %v2771
        %v2790 = vpop.f32.mrf.mxu0
        %v2791 = vadd.f32 0.0, %v2790
        %2792 = vdwg.mxu0
        %v2793 = vpack.c.bf16 %v2791, %v2791
        %v2794 = vld [vmem:[%s13] sm:$0xf]
        %v2795 = vld [vmem:[%s13 + $0x4] sm:$0xf]
        %v2796 = vld [vmem:[%s13 + $0x8] sm:$0xf]
        %v2797 = vld [vmem:[%s13 + $0xc] sm:$0xf]
        %v2798 = vld [vmem:[%s13 + $0x10] sm:$0xf]
        %v2799 = vld [vmem:[%s13 + $0x14] sm:$0xf]
        %v2800 = vld [vmem:[%s13 + $0x18] sm:$0xf]
        %v2801 = vld [vmem:[%s13 + $0x1c] sm:$0xf]
        %v2802 = vld [vmem:[%s14] sm:$0x1]
        %v2804 = vperm.slane %v2802, 0
        %v2814 = vunpack.c.l.b16 %v2794
        %v2815 = vunpack.c.l.b16 %v2795
        %v2816 = vunpack.c.l.b16 %v2796
        %v2817 = vunpack.c.l.b16 %v2797
        %v2818 = vunpack.c.l.b16 %v2798
        %v2819 = vunpack.c.l.b16 %v2799
        %v2820 = vunpack.c.l.b16 %v2800
        %v2821 = vunpack.c.l.b16 %v2801
        %v2822 = vpack.c.b16 %v2815, %v2814
        %v2823 = vpack.c.b16 %v2817, %v2816
        %v2824 = vpack.c.b16 %v2819, %v2818
        %v2825 = vpack.c.b16 %v2821, %v2820
        %v2831 = vsel %vm548, %v2793, 0
        %2833 = vmatpush.bf16.msra.mxu0 0
        %2834 = vmatpush.bf16.msra.mxu0 0
        %2835 = vmatpush.bf16.msra.mxu0 0
        %2836 = vmatpush.bf16.msra.mxu0 0
        %2837 = vmatpush.bf16.msra.mxu0 %v2825
        %2838 = vmatpush.bf16.msra.mxu0 %v2824
        %2839 = vmatpush.bf16.msra.mxu0 %v2823
        %2840 = vmatpush.bf16.msra.mxu0 %v2822
        %2841 = vmatmul.bf16.gmra.mxu0 %v2831
        %v2842 = vpop.f32.mrf.mxu0
        %v2843 = vadd.f32 %v2804, %v2842
        %v2844 = vpop.f32.mrf.mxu0
        %2845 = vdwg.mxu0
        %v2846 = vmul.f32 %v2843, %v2843
        %v2847 = vmul.f32 %v2843, %v2846
        %v2848 = vmul.f32 %v2847, 0.044715
        %v2849 = vadd.f32 %v2843, %v2848
        %v2850 = vmul.f32 %v2849, 0.7978846
        %v2851 = vtanh.pop %v2850
        %v2852 = vadd.f32 %v2851, 1.0
        %v2853 = vmul.f32 %v2852, 0.5
        %v2854 = vmul.f32 %v2843, %v2853
        %v2855 = vpack.c.bf16 %v2854, %v2854
        %v2856 = vld [vmem:[%s15] sm:$0xf]
        %v2857 = vld [vmem:[%s15 + $0x4] sm:$0xf]
        %v2858 = vld [vmem:[%s15 + $0x8] sm:$0xf]
        %v2859 = vld [vmem:[%s15 + $0xc] sm:$0xf]
        %v2860 = vld [vmem:[%s15 + $0x10] sm:$0xf]
        %v2861 = vld [vmem:[%s15 + $0x14] sm:$0xf]
        %v2862 = vld [vmem:[%s15 + $0x18] sm:$0xf]
        %v2863 = vld [vmem:[%s15 + $0x1c] sm:$0xf]
        %v2864 = vld [vmem:[%s15 + $0x20] sm:$0xf]
        %v2865 = vld [vmem:[%s15 + $0x24] sm:$0xf]
        %v2866 = vld [vmem:[%s15 + $0x28] sm:$0xf]
        %v2867 = vld [vmem:[%s15 + $0x2c] sm:$0xf]
        %v2868 = vld [vmem:[%s15 + $0x30] sm:$0xf]
        %v2869 = vld [vmem:[%s15 + $0x34] sm:$0xf]
        %v2870 = vld [vmem:[%s15 + $0x38] sm:$0xf]
        %v2871 = vld [vmem:[%s15 + $0x3c] sm:$0xf]
        %v2872 = vld [vmem:[%s16] sm:$0x1]
        %v2874 = vperm.slane %v2872, 0
        %v2892 = vunpack.c.l.b16 %v2856
        %v2893 = vunpack.c.l.b16 %v2857
        %v2894 = vunpack.c.l.b16 %v2858
        %v2895 = vunpack.c.l.b16 %v2859
        %v2896 = vunpack.c.l.b16 %v2860
        %v2897 = vunpack.c.l.b16 %v2861
        %v2898 = vunpack.c.l.b16 %v2862
        %v2899 = vunpack.c.l.b16 %v2863
        %v2900 = vunpack.c.l.b16 %v2864
        %v2901 = vunpack.c.l.b16 %v2865
        %v2902 = vunpack.c.l.b16 %v2866
        %v2903 = vunpack.c.l.b16 %v2867
        %v2904 = vunpack.c.l.b16 %v2868
        %v2905 = vunpack.c.l.b16 %v2869
        %v2906 = vunpack.c.l.b16 %v2870
        %v2907 = vunpack.c.l.b16 %v2871
        %v2908 = vpack.c.b16 %v2893, %v2892
        %v2909 = vpack.c.b16 %v2895, %v2894
        %v2910 = vpack.c.b16 %v2897, %v2896
        %v2911 = vpack.c.b16 %v2899, %v2898
        %v2912 = vpack.c.b16 %v2901, %v2900
        %v2913 = vpack.c.b16 %v2903, %v2902
        %v2914 = vpack.c.b16 %v2905, %v2904
        %v2915 = vpack.c.b16 %v2907, %v2906
        %2924 = vmatpush.bf16.msra.mxu0 %v2915
        %2925 = vmatpush.bf16.msra.mxu0 %v2914
        %2926 = vmatpush.bf16.msra.mxu0 %v2913
        %2927 = vmatpush.bf16.msra.mxu0 %v2912
        %2928 = vmatpush.bf16.msra.mxu0 %v2911
        %2929 = vmatpush.bf16.msra.mxu0 %v2910
        %2930 = vmatpush.bf16.msra.mxu0 %v2909
        %2931 = vmatpush.bf16.msra.mxu0 %v2908
        %2932 = vmatmul.bf16.gmra.mxu0 %v2855
        %v2933 = vpop.f32.mrf.mxu0
        %v2934 = vadd.f32 %v2874, %v2933
        %v2935 = vpop.f32.mrf.mxu0
        %2936 = vdwg.mxu0
        %vm2937 = vcmask 122880
        %2938 = vst.msk [vmem:[%s538] sm:$0x1] %vm2937, %v2934
        %s2939 = sand.u32 %s401, 1
        %s2940 = scalar_lea.sflag [#allocation3], %s2939
        %s2941 = sand.u32 %s401, 1
        %s2942 = scalar_lea.vmem [#allocation2], %s2941
        // Predicated region
        $region89: #{vit_forward.1} parent=87 // pred_check
          %p2943 = pneg %p411
        $region90: #{vit_forward.1} parent=87 // pred_check_branch
          %2945 = sbr.rel (%p2943) target = $region92
        $region91: #{vit_forward.1} parent=87 // pred_region
          %2947 = vsyncadd %s2940, 0
          %s2948 = scalar_lea.hbm %s17, %s31
          %s2950 = sshll.u32 %s2942, 4
          %s2951 = int_to_ptr.vmem [resolvable:$true] %s2950
          %s2952 = sshll.u32 %s2948, 4
          %s2953 = int_to_ptr.hbm [resolvable:$true] %s2952
          %2955 = dma.vmem_to_hbm [thread:$0]  %s2951, 16, %s2953, %s2940
        $region92: #{vit_forward.1} parent=87 // pred_fallthru
          _
      $region88: #{vit_forward.1} parent=5 // pred_fallthru
        _
      %p2956 = scmp.le.s32.totalorder 2, %s26
      // Predicated region
      $region93: #{vit_forward.1} parent=5 // pred_check
        %p2957 = pneg %p2956
      $region94: #{vit_forward.1} parent=5 // pred_check_branch
        %2959 = sbr.rel (%p2957) target = $region96
      $region95: #{vit_forward.1} parent=5 // pred_region
        %s2960 = ssub.s32 %s26, 2
        // Predicated region
        $region97: #{vit_forward.1} parent=95 // pred_check
          %p2961 = pneg %p417
        $region98: #{vit_forward.1} parent=95 // pred_check_branch
          %2963 = sbr.rel (%p2961) target = $region100
        $region99: #{vit_forward.1} parent=95 // pred_region
          %s2964 = sand.u32 %s402, 1
          %s2965 = scalar_lea.sflag [#allocation3], %s2964
          %s2966 = sand.u32 %s402, 1
          %s2967 = scalar_lea.vmem [#allocation2], %s2966
          %2969 = dma.done %s2965, 16
        $region100: #{vit_forward.1} parent=95 // pred_fallthru
          _
      $region96: #{vit_forward.1} parent=5 // pred_fallthru
        _
    $region6: #{vit_forward.1} parent=1 // loop_footer
      %s30 = sadd.s32 1, %s26
    $region7: #{vit_forward.1} parent=1 // loop_footer_branch
      %25 = sbr.rel target = $region3
    $region8: #{vit_forward.1} parent=1 // loop_exit
      _
    %2970 = vsyncpa [#allocation3], 1
    %s2971 = scalar_lea.sflag [#allocation3], 1
    %2972 = vsyncpa %s2971, 1

</llo_original>
